<compile_context>
chip_gen: v6e
topology: v6e:2x2x1
jax: 0.10.0
libtpu: 0.0.40
codegen_flags: <defaults>
</compile_context>

<pallas_src>
import functools

import jax
import jax.numpy as jnp
from jax.experimental import pallas as pl
from jax.experimental.pallas import tpu as pltpu


def _round_up(x, m):
    return (x + m - 1) // m * m


# ---------------------------------------------------------------------------
# Fused kernel: attention net + streaming (online) softmax + bag pooling.
# Per-core partial stats (m, l, acc) are emitted as outputs; the per-class
# bag classifiers + slide softmax run in a tiny wrapper epilogue.
# ---------------------------------------------------------------------------
def _clam_mb_kernel(n_ref,                                  # SMEM scalar prefetch
                    h_ref, w1_ref, b1_ref, wa_ref, ba_ref, wb_ref, bb_ref,
                    wct_ref, bc_ref,
                    a_raw_ref, m_ref, l_ref, acc_ref,
                    *, tn, tpc):
    c = pl.program_id(0)          # core split ("parallel")
    i = pl.program_id(1)          # patch tile within this core ("arbitrary")

    @pl.when(i == 0)
    def _():
        m_ref[...] = jnp.full(m_ref.shape, -jnp.inf, dtype=m_ref.dtype)
        l_ref[...] = jnp.zeros(l_ref.shape, dtype=l_ref.dtype)
        acc_ref[...] = jnp.zeros(acc_ref.shape, dtype=acc_ref.dtype)

    n_valid = n_ref[0]
    g = c * tpc + i               # UNCLAMPED global tile index (clamped tiles
                                  # re-read real data but are fully masked here)

    # ---- attention network on this patch tile (bf16 MXU, f32 accumulate) ----
    h = h_ref[...].astype(w1_ref.dtype)                              # cast in VMEM
    h1 = jnp.maximum(
        jnp.dot(h, w1_ref[...], preferred_element_type=jnp.float32)
        + b1_ref[...], 0.0)                                          # [tn, H] f32

    # Zero rows past n_valid: guards unspecified padding in partial/clamped
    # blocks (NaN/Inf would otherwise poison acc via 0*NaN) and prevents
    # double-counting of clamped (re-read) tiles.
    row = g * tn + jax.lax.broadcasted_iota(jnp.int32, (tn, 1), 0)
    h1 = jnp.where(row < n_valid, h1, 0.0)

    h1_mm = h1.astype(wa_ref.dtype)                                  # bf16 for MXU
    a = jnp.tanh(
        jnp.dot(h1_mm, wa_ref[...], preferred_element_type=jnp.float32)
        + ba_ref[...])                                               # [tn, D] f32
    b = jax.nn.sigmoid(
        jnp.dot(h1_mm, wb_ref[...], preferred_element_type=jnp.float32)
        + bb_ref[...])                                               # [tn, D] f32

    # Lane-dense scores directly as [C, tn]: Wct [C, D] contracted with
    # (a*b) [tn, D] on D (NT matmul) -- no transpose of the result.
    s = jax.lax.dot_general(
        wct_ref[...], a * b, (((1,), (1,)), ((), ())),
        preferred_element_type=jnp.float32) + bc_ref[...]            # [C, tn]
    a_raw_ref[...] = s                                               # raw attention

    # ---- online softmax over patches (mask columns past n_valid) ------------
    col = g * tn + jax.lax.broadcasted_iota(jnp.int32, s.shape, 1)
    s = jnp.where(col < n_valid, s, -1e30)

    m_prev = m_ref[0]                                                # [C, 1]
    m_new = jnp.maximum(m_prev, jnp.max(s, axis=1, keepdims=True))   # [C, 1]
    alpha = jnp.exp(m_prev - m_new)                                  # [C, 1]
    p = jnp.exp(s - m_new)                                           # [C, tn]
    l_ref[0] = alpha * l_ref[0] + jnp.sum(p, axis=1, keepdims=True)
    acc_ref[0] = alpha * acc_ref[0] + jnp.dot(
        p, h1, preferred_element_type=jnp.float32)                   # [C, H]
    m_ref[0] = m_new


# ---------------------------------------------------------------------------
# Wrapper
# ---------------------------------------------------------------------------
@functools.partial(jax.jit, static_argnames=("tile_n", "num_core_splits"))
def clam_mb_forward(h, params, n_valid=None, tile_n=1024, num_core_splits=2):
    """CLAM_MB forward.  `h` may be f32 or bf16 (bf16 halves the HBM traffic).

    Callers that want to avoid per-bag-size recompiles can pad `h` upstream to
    a bucketed row count and pass the true patch count via `n_valid`; only the
    first `n_valid` rows contribute and only h.shape[0] attention columns are
    returned.
    """
    N, L = h.shape
    C, D = params["wct"].shape
    H = params["w1"].shape[1]

    # ---- tile / core-split selection ---------------------------------------
    if N <= tile_n:
        tn = max(8, _round_up(N, 8))        # single tile: block == full rows
        total_tiles = 1
    else:
        tn = _round_up(tile_n, 128)         # lane-dense A_raw blocks
        total_tiles = -(-N // tn)
    cores = max(1, min(int(num_core_splits), total_tiles))
    tpc = -(-total_tiles // cores)          # tiles per core
    last_tile = total_tiles - 1
    padded_cols = cores * tpc * tn

    n_arr = (jnp.full((1,), N, dtype=jnp.int32) if n_valid is None
             else jnp.asarray(n_valid, dtype=jnp.int32).reshape(1))

    kernel = functools.partial(_clam_mb_kernel, tn=tn, tpc=tpc)

    # NOTE: clamp the *input* tile index so fully-out-of-range tiles (ragged
    # core split) re-read the last valid tile; their contribution is masked
    # via the unclamped global index inside the kernel.
    def h_index(c, i, n, _tpc=tpc, _last=last_tile):
        return (jnp.minimum(c * _tpc + i, _last), 0)

    a_raw_p, m_p, l_p, acc_p = pl.pallas_call(
        kernel,
        out_shape=(
            jax.ShapeDtypeStruct((C, padded_cols), jnp.float32),  # A_raw
            jax.ShapeDtypeStruct((cores, C, 1), jnp.float32),     # per-core max
            jax.ShapeDtypeStruct((cores, C, 1), jnp.float32),     # per-core sum
            jax.ShapeDtypeStruct((cores, C, H), jnp.float32),     # per-core acc
        ),
        grid_spec=pltpu.PrefetchScalarGridSpec(
            num_scalar_prefetch=1,                       # n_valid in SMEM
            grid=(cores, tpc),
            in_specs=[
                pl.BlockSpec((tn, L), h_index),                         # h tile
                pl.BlockSpec((L, H), lambda c, i, n: (0, 0)),           # W1
                pl.BlockSpec((1, H), lambda c, i, n: (0, 0)),           # b1
                pl.BlockSpec((H, D), lambda c, i, n: (0, 0)),           # Wa
                pl.BlockSpec((1, D), lambda c, i, n: (0, 0)),           # ba
                pl.BlockSpec((H, D), lambda c, i, n: (0, 0)),           # Wb
                pl.BlockSpec((1, D), lambda c, i, n: (0, 0)),           # bb
                pl.BlockSpec((C, D), lambda c, i, n: (0, 0)),           # Wc^T
                pl.BlockSpec((C, 1), lambda c, i, n: (0, 0)),           # bc
            ],
            out_specs=[
                pl.BlockSpec((C, tn),
                             lambda c, i, n, _tpc=tpc: (0, c * _tpc + i)),
                pl.BlockSpec((1, C, 1), lambda c, i, n: (c, 0, 0)),
                pl.BlockSpec((1, C, 1), lambda c, i, n: (c, 0, 0)),
                pl.BlockSpec((1, C, H), lambda c, i, n: (c, 0, 0)),
            ],
        ),
        compiler_params=pltpu.CompilerParams(
            # leading axis shards the patch range across the two v7x TCs;
            # trailing axis is the streaming online-softmax reduction.
            dimension_semantics=("parallel", "arbitrary"),
            vmem_limit_bytes=48 * 1024 * 1024,
        ),
    )(n_arr, h, params["w1"], params["b1"], params["wa"], params["ba"],
      params["wb"], params["bb"], params["wct"], params["bc"])

    A_raw = a_raw_p[:, :N]                                # drop padded columns

    # ---- tiny epilogue: merge per-core softmax partials + bag classifiers ---
    m_tot = jnp.max(m_p, axis=0)                          # [C, 1]
    w = jnp.exp(m_p - m_tot[None])                        # [cores, C, 1]
    l_tot = jnp.sum(w * l_p, axis=0)                      # [C, 1]
    acc_tot = jnp.sum(w * acc_p, axis=0)                  # [C, H]
    M = acc_tot / l_tot                                   # [C, H] bag features
    logits = (jnp.sum(M * params["wclf"], axis=1)
              + params["bclf"][:, 0])[None, :]            # [1, C]
    y_prob = jax.nn.softmax(logits, axis=1)
    y_hat = jnp.argmax(logits, axis=1, keepdims=True)     # [1, 1]
    results_dict = {}                                     # default path
    return logits, y_prob, y_hat, A_raw, results_dict


# ---------------------------------------------------------------------------
# Pure-JAX reference (same mixed-precision policy) for correctness checking.
# ---------------------------------------------------------------------------
def clam_mb_reference(h, params):
    f32 = jnp.float32
    h_mm = h.astype(params["w1"].dtype)
    h1 = jnp.maximum(
        jnp.dot(h_mm, params["w1"], preferred_element_type=f32) + params["b1"], 0.0)
    h1_mm = h1.astype(params["wa"].dtype)
    a = jnp.tanh(jnp.dot(h1_mm, params["wa"], preferred_element_type=f32) + params["ba"])
    b = jax.nn.sigmoid(jnp.dot(h1_mm, params["wb"], preferred_element_type=f32) + params["bb"])
    A_raw = (jnp.einsum("nd,cd->cn", a * b, params["wct"],
                        preferred_element_type=f32) + params["bc"])           # [C, N]
    A_soft = jax.nn.softmax(A_raw, axis=1)
    M = jnp.dot(A_soft, h1, preferred_element_type=f32)                       # [C, H]
    logits = (jnp.sum(M * params["wclf"], axis=1) + params["bclf"][:, 0])[None, :]
    y_prob = jax.nn.softmax(logits, axis=1)
    y_hat = jnp.argmax(logits, axis=1, keepdims=True)
    return logits, y_prob, y_hat, A_raw, {}


def init_params(key, L, H, D, C, mxu_dtype=jnp.bfloat16):
    ks = jax.random.split(key, 10)
    scale = 0.02
    nrm = jax.random.normal
    return {
        # bf16 for the large MXU matmuls; everything else f32.
        "w1": (scale * nrm(ks[0], (L, H), jnp.float32)).astype(mxu_dtype),
        "b1": 0.01 * nrm(ks[1], (1, H), jnp.float32),
        "wa": (scale * nrm(ks[2], (H, D), jnp.float32)).astype(mxu_dtype),
        "ba": 0.01 * nrm(ks[3], (1, D), jnp.float32),
        "wb": (scale * nrm(ks[4], (H, D), jnp.float32)).astype(mxu_dtype),
        "bb": 0.01 * nrm(ks[5], (1, D), jnp.float32),
        # attention head Linear(D, C), stored pre-transposed [C, D]
        "wct": scale * nrm(ks[6], (C, D), jnp.float32),
        "bc": 0.01 * nrm(ks[7], (C, 1), jnp.float32),
        # n_classes independent Linear(H, 1) bag classifiers, stacked -> [C, H]
        "wclf": scale * nrm(ks[8], (C, H), jnp.float32),
        "bclf": 0.01 * nrm(ks[9], (C, 1), jnp.float32),
    }


def _check(got, ref, name):
    logits, y_prob, y_hat, A_raw, _ = got
    r_logits, r_prob, r_hat, r_A, _ = ref
    assert jnp.allclose(logits, r_logits, rtol=1e-3, atol=1e-5), f"{name}: logits mismatch"
    assert jnp.allclose(y_prob, r_prob, rtol=1e-3, atol=1e-5), f"{name}: Y_prob mismatch"
    assert jnp.allclose(A_raw, r_A, rtol=1e-3, atol=1e-5), f"{name}: A_raw mismatch"
    assert jnp.array_equal(y_hat, r_hat), f"{name}: Y_hat mismatch"


if __name__ == "__main__":
    # size_arg='small', feature_extract_model_name='resnet50_imagenet_pretrain'
    # -> size = [1024, 512, 256]; n_classes = 2.
    L, H, D, C = 1024, 512, 256, 2

    key = jax.random.PRNGKey(0)
    k_h1, k_h2, k_h3, k_p = jax.random.split(key, 4)
    params = init_params(k_p, L, H, D, C)

    # Case 1: small bag (N=64), default tile -> single tile, grid=(1, 1).
    h_small = jax.random.normal(k_h1, (64, L), jnp.float32)
    out_small = clam_mb_forward(h_small, params)
    jax.block_until_ready(out_small[0])
    _check(out_small, clam_mb_reference(h_small, params), "N=64")

    # Case 2: N=300, tile_n=128 -> 3 tiles, 2-core split (tpc=2, one clamped
    # tile) + partial last block with in-kernel masking of the ragged tail.
    h_mid = jax.random.normal(k_h2, (300, L), jnp.float32)
    out_mid = clam_mb_forward(h_mid, params, tile_n=128)
    jax.block_until_ready(out_mid[0])
    _check(out_mid, clam_mb_reference(h_mid, params), "N=300")

    # Case 3: bf16 bag input (preferred, halves DMA), exact tiling, 2 cores.
    h_big = jax.random.normal(k_h3, (1024, L), jnp.float32).astype(jnp.bfloat16)
    out_big = clam_mb_forward(h_big, params, tile_n=256)
    jax.block_until_ready(out_big[0])
    _check(out_big, clam_mb_reference(h_big, params), "N=1024 bf16")

    print("KERNEL_OK")
</pallas_src>

<mosaic_0001>
module attributes {stable_mosaic.version = 11 : i64} {
  func.func @_clam_mb_kernel(%arg0: i32, %arg1: i32, %arg2: memref<1xi32, #tpu.memory_space<smem>>, %arg3: memref<64x1024xf32, #tpu.memory_space<vmem>>, %arg4: memref<1024x512xbf16, #tpu.memory_space<vmem>>, %arg5: memref<1x512xf32, #tpu.memory_space<vmem>>, %arg6: memref<512x256xbf16, #tpu.memory_space<vmem>>, %arg7: memref<1x256xf32, #tpu.memory_space<vmem>>, %arg8: memref<512x256xbf16, #tpu.memory_space<vmem>>, %arg9: memref<1x256xf32, #tpu.memory_space<vmem>>, %arg10: memref<2x256xf32, #tpu.memory_space<vmem>>, %arg11: memref<2x1xf32, #tpu.memory_space<vmem>>, %arg12: memref<2x64xf32, #tpu.memory_space<vmem>>, %arg13: memref<1x2x1xf32, #tpu.memory_space<vmem>>, %arg14: memref<1x2x1xf32, #tpu.memory_space<vmem>>, %arg15: memref<1x2x512xf32, #tpu.memory_space<vmem>>) attributes {dimension_semantics = [#tpu.dimension_semantics<parallel>, #tpu.dimension_semantics<arbitrary>], iteration_bounds = array<i64: 1, 1>, scalar_prefetch = 1 : i64, scratch_operands = 0 : i64, tpu.core_type = #tpu.core_type<tc>, window_params = [{transform_indices = @transform_0, window_bounds = array<i64: 64, 1024>}, {pipeline_mode = #tpu.pipeline_mode<synchronous>, transform_indices = @transform_1, window_bounds = array<i64: 1024, 512>}, {pipeline_mode = #tpu.pipeline_mode<synchronous>, transform_indices = @transform_2, window_bounds = array<i64: 1, 512>}, {pipeline_mode = #tpu.pipeline_mode<synchronous>, transform_indices = @transform_3, window_bounds = array<i64: 512, 256>}, {pipeline_mode = #tpu.pipeline_mode<synchronous>, transform_indices = @transform_4, window_bounds = array<i64: 1, 256>}, {pipeline_mode = #tpu.pipeline_mode<synchronous>, transform_indices = @transform_5, window_bounds = array<i64: 512, 256>}, {pipeline_mode = #tpu.pipeline_mode<synchronous>, transform_indices = @transform_6, window_bounds = array<i64: 1, 256>}, {pipeline_mode = #tpu.pipeline_mode<synchronous>, transform_indices = @transform_7, window_bounds = array<i64: 2, 256>}, {pipeline_mode = #tpu.pipeline_mode<synchronous>, transform_indices = @transform_8, window_bounds = array<i64: 2, 1>}, {transform_indices = @transform_9, window_bounds = array<i64: 2, 64>}, {transform_indices = @transform_10, window_bounds = array<i64: 1, 2, 1>}, {transform_indices = @transform_11, window_bounds = array<i64: 1, 2, 1>}, {transform_indices = @transform_12, window_bounds = array<i64: 1, 2, 512>}]} {
    %c0_i32 = arith.constant 0 : i32
    %0 = arith.cmpi eq, %arg1, %c0_i32 : i32
    %1 = arith.extui %0 : i1 to i32
    %c0_i32_0 = arith.constant 0 : i32
    %2 = arith.cmpi ne, %1, %c0_i32_0 : i32
    scf.if %2 {
      %cst_50 = arith.constant 0xFF800000 : f32
      %88 = vector.broadcast %cst_50 : f32 to vector<1x2x1xf32>
      %c0_51 = arith.constant 0 : index
      %c0_52 = arith.constant 0 : index
      %c0_53 = arith.constant 0 : index
      %89 = vector.load %arg13[%c0_51, %c0_52, %c0_53] : memref<1x2x1xf32, #tpu.memory_space<vmem>>, vector<1x2x1xf32>
      tpu.vector_store %arg13[%c0_51, %c0_52, %c0_53], %88 {strides = array<i32>} : memref<1x2x1xf32, #tpu.memory_space<vmem>>, vector<1x2x1xf32>,
      %cst_54 = arith.constant 0.000000e+00 : f32
      %90 = vector.broadcast %cst_54 : f32 to vector<1x2x1xf32>
      %c0_55 = arith.constant 0 : index
      %c0_56 = arith.constant 0 : index
      %c0_57 = arith.constant 0 : index
      %91 = vector.load %arg14[%c0_55, %c0_56, %c0_57] : memref<1x2x1xf32, #tpu.memory_space<vmem>>, vector<1x2x1xf32>
      tpu.vector_store %arg14[%c0_55, %c0_56, %c0_57], %90 {strides = array<i32>} : memref<1x2x1xf32, #tpu.memory_space<vmem>>, vector<1x2x1xf32>,
      %cst_58 = arith.constant 0.000000e+00 : f32
      %92 = vector.broadcast %cst_58 : f32 to vector<1x2x512xf32>
      %c0_59 = arith.constant 0 : index
      %c0_60 = arith.constant 0 : index
      %c0_61 = arith.constant 0 : index
      %93 = vector.load %arg15[%c0_59, %c0_60, %c0_61] : memref<1x2x512xf32, #tpu.memory_space<vmem>>, vector<1x2x512xf32>
      tpu.vector_store %arg15[%c0_59, %c0_60, %c0_61], %92 {strides = array<i32>} : memref<1x2x512xf32, #tpu.memory_space<vmem>>, vector<1x2x512xf32>,
    } else {
    }
    %c0 = arith.constant 0 : index
    %3 = memref.load %arg2[%c0] : memref<1xi32, #tpu.memory_space<smem>>
    %c1_i32 = arith.constant 1 : i32
    %4 = arith.muli %arg0, %c1_i32 : i32
    %5 = arith.addi %4, %arg1 : i32
    %c0_1 = arith.constant 0 : index
    %c0_2 = arith.constant 0 : index
    %6 = vector.load %arg3[%c0_1, %c0_2] : memref<64x1024xf32, #tpu.memory_space<vmem>>, vector<64x1024xf32>
    %7 = arith.truncf %6 : vector<64x1024xf32> to vector<64x1024xbf16>
    %c0_3 = arith.constant 0 : index
    %c0_4 = arith.constant 0 : index
    %8 = vector.load %arg4[%c0_3, %c0_4] : memref<1024x512xbf16, #tpu.memory_space<vmem>>, vector<1024x512xbf16>
    %cst = arith.constant dense<0.000000e+00> : vector<64x512xf32>
    %9 = tpu.matmul %7, %8, %cst {dimension_numbers = #tpu.dot_dimension_numbers<[1], [0], [0], [1], [0, 0, 1, 1], [], []>} : vector<64x1024xbf16>, vector<1024x512xbf16>, vector<64x512xf32> -> vector<64x512xf32>
    %c0_5 = arith.constant 0 : index
    %c0_6 = arith.constant 0 : index
    %10 = vector.load %arg5[%c0_5, %c0_6] : memref<1x512xf32, #tpu.memory_space<vmem>>, vector<1x512xf32>
    %11 = vector.broadcast %10 : vector<1x512xf32> to vector<64x512xf32>
    %12 = arith.addf %9, %11 : vector<64x512xf32>
    %cst_7 = arith.constant 0.000000e+00 : f32
    %13 = vector.broadcast %cst_7 : f32 to vector<64x512xf32>
    %14 = arith.maximumf %12, %13 : vector<64x512xf32>
    %c64_i32 = arith.constant 64 : i32
    %15 = arith.muli %5, %c64_i32 : i32
    %16 = tpu.iota {dimensions = array<i32: 0>} : vector<64x1xi32>
    %17 = vector.broadcast %15 : i32 to vector<64x1xi32>
    %18 = arith.addi %17, %16 : vector<64x1xi32>
    %19 = vector.broadcast %3 : i32 to vector<64x1xi32>
    %20 = arith.cmpi slt, %18, %19 : vector<64x1xi32>
    %cst_8 = arith.constant 0.000000e+00 : f32
    %21 = vector.shape_cast %20 : vector<64x1xi1> to vector<64x1xi1>
    %22 = vector.broadcast %21 : vector<64x1xi1> to vector<64x512xi1>
    %23 = vector.broadcast %cst_8 : f32 to vector<64x512xf32>
    %24 = arith.select %22, %14, %23 : vector<64x512xi1>, vector<64x512xf32>
    %25 = arith.truncf %24 : vector<64x512xf32> to vector<64x512xbf16>
    %c0_9 = arith.constant 0 : index
    %c0_10 = arith.constant 0 : index
    %26 = vector.load %arg6[%c0_9, %c0_10] : memref<512x256xbf16, #tpu.memory_space<vmem>>, vector<512x256xbf16>
    %cst_11 = arith.constant dense<0.000000e+00> : vector<64x256xf32>
    %27 = tpu.matmul %25, %26, %cst_11 {dimension_numbers = #tpu.dot_dimension_numbers<[1], [0], [0], [1], [0, 0, 1, 1], [], []>} : vector<64x512xbf16>, vector<512x256xbf16>, vector<64x256xf32> -> vector<64x256xf32>
    %c0_12 = arith.constant 0 : index
    %c0_13 = arith.constant 0 : index
    %28 = vector.load %arg7[%c0_12, %c0_13] : memref<1x256xf32, #tpu.memory_space<vmem>>, vector<1x256xf32>
    %29 = vector.broadcast %28 : vector<1x256xf32> to vector<64x256xf32>
    %30 = arith.addf %27, %29 : vector<64x256xf32>
    %31 = math.tanh %30 : vector<64x256xf32>
    %c0_14 = arith.constant 0 : index
    %c0_15 = arith.constant 0 : index
    %32 = vector.load %arg8[%c0_14, %c0_15] : memref<512x256xbf16, #tpu.memory_space<vmem>>, vector<512x256xbf16>
    %cst_16 = arith.constant dense<0.000000e+00> : vector<64x256xf32>
    %33 = tpu.matmul %25, %32, %cst_16 {dimension_numbers = #tpu.dot_dimension_numbers<[1], [0], [0], [1], [0, 0, 1, 1], [], []>} : vector<64x512xbf16>, vector<512x256xbf16>, vector<64x256xf32> -> vector<64x256xf32>
    %c0_17 = arith.constant 0 : index
    %c0_18 = arith.constant 0 : index
    %34 = vector.load %arg9[%c0_17, %c0_18] : memref<1x256xf32, #tpu.memory_space<vmem>>, vector<1x256xf32>
    %35 = vector.broadcast %34 : vector<1x256xf32> to vector<64x256xf32>
    %36 = arith.addf %33, %35 : vector<64x256xf32>
    %37 = arith.negf %36 : vector<64x256xf32>
    %38 = math.exp %37 : vector<64x256xf32>
    %cst_19 = arith.constant 1.000000e+00 : f32
    %39 = vector.broadcast %cst_19 : f32 to vector<64x256xf32>
    %40 = arith.addf %39, %38 : vector<64x256xf32>
    %41 = arith.divf %39, %40 : vector<64x256xf32>
    %c0_20 = arith.constant 0 : index
    %c0_21 = arith.constant 0 : index
    %42 = vector.load %arg10[%c0_20, %c0_21] : memref<2x256xf32, #tpu.memory_space<vmem>>, vector<2x256xf32>
    %43 = arith.mulf %31, %41 : vector<64x256xf32>
    %cst_22 = arith.constant dense<0.000000e+00> : vector<2x64xf32>
    %44 = tpu.matmul %42, %43, %cst_22 {dimension_numbers = #tpu.dot_dimension_numbers<[1], [1], [0], [0], [0, 0, 1, 0], [], []>} : vector<2x256xf32>, vector<64x256xf32>, vector<2x64xf32> -> vector<2x64xf32>
    %c0_23 = arith.constant 0 : index
    %c0_24 = arith.constant 0 : index
    %45 = vector.load %arg11[%c0_23, %c0_24] : memref<2x1xf32, #tpu.memory_space<vmem>>, vector<2x1xf32>
    %46 = vector.broadcast %45 : vector<2x1xf32> to vector<2x64xf32>
    %47 = arith.addf %44, %46 : vector<2x64xf32>
    %c0_25 = arith.constant 0 : index
    %c0_26 = arith.constant 0 : index
    %48 = vector.load %arg12[%c0_25, %c0_26] : memref<2x64xf32, #tpu.memory_space<vmem>>, vector<2x64xf32>
    tpu.vector_store %arg12[%c0_25, %c0_26], %47 {strides = array<i32>} : memref<2x64xf32, #tpu.memory_space<vmem>>, vector<2x64xf32>,
    %c64_i32_27 = arith.constant 64 : i32
    %49 = arith.muli %5, %c64_i32_27 : i32
    %50 = tpu.iota {dimensions = array<i32: 1>} : vector<2x64xi32>
    %51 = vector.broadcast %49 : i32 to vector<2x64xi32>
    %52 = arith.addi %51, %50 : vector<2x64xi32>
    %53 = vector.broadcast %3 : i32 to vector<2x64xi32>
    %54 = arith.cmpi slt, %52, %53 : vector<2x64xi32>
    %cst_28 = arith.constant -1.000000e+30 : f32
    %55 = vector.broadcast %cst_28 : f32 to vector<2x64xf32>
    %56 = arith.select %54, %47, %55 : vector<2x64xi1>, vector<2x64xf32>
    %c0_29 = arith.constant 0 : index
    %c0_30 = arith.constant 0 : index
    %c0_31 = arith.constant 0 : index
    %57 = vector.load %arg13[%c0_29, %c0_30, %c0_31] : memref<1x2x1xf32, #tpu.memory_space<vmem>>, vector<1x2x1xf32>
    %58 = vector.shape_cast %57 : vector<1x2x1xf32> to vector<2x1xf32>
    %cst_32 = arith.constant dense<0xFF800000> : vector<2xf32>
    %59 = vector.multi_reduction <maximumf>, %56, %cst_32 [1] : vector<2x64xf32> to vector<2xf32>
    %60 = vector.shape_cast %59 : vector<2xf32> to vector<2x1xf32>
    %61 = arith.maximumf %58, %60 : vector<2x1xf32>
    %62 = arith.subf %58, %61 : vector<2x1xf32>
    %63 = math.exp %62 : vector<2x1xf32>
    %64 = vector.broadcast %61 : vector<2x1xf32> to vector<2x64xf32>
    %65 = arith.subf %56, %64 : vector<2x64xf32>
    %66 = math.exp %65 : vector<2x64xf32>
    %c0_33 = arith.constant 0 : index
    %c0_34 = arith.constant 0 : index
    %c0_35 = arith.constant 0 : index
    %67 = vector.load %arg14[%c0_33, %c0_34, %c0_35] : memref<1x2x1xf32, #tpu.memory_space<vmem>>, vector<1x2x1xf32>
    %68 = vector.shape_cast %67 : vector<1x2x1xf32> to vector<2x1xf32>
    %69 = arith.mulf %63, %68 : vector<2x1xf32>
    %cst_36 = arith.constant dense<0.000000e+00> : vector<2xf32>
    %70 = vector.multi_reduction <add>, %66, %cst_36 [1] : vector<2x64xf32> to vector<2xf32>
    %71 = vector.shape_cast %70 : vector<2xf32> to vector<2x1xf32>
    %72 = arith.addf %69, %71 : vector<2x1xf32>
    %c0_37 = arith.constant 0 : index
    %c0_38 = arith.constant 0 : index
    %c0_39 = arith.constant 0 : index
    %73 = vector.load %arg14[%c0_37, %c0_38, %c0_39] : memref<1x2x1xf32, #tpu.memory_space<vmem>>, vector<1x2x1xf32>
    %74 = vector.shape_cast %73 : vector<1x2x1xf32> to vector<2x1xf32>
    %75 = vector.shape_cast %72 : vector<2x1xf32> to vector<1x2x1xf32>
    tpu.vector_store %arg14[%c0_37, %c0_38, %c0_39], %75 {strides = array<i32>} : memref<1x2x1xf32, #tpu.memory_space<vmem>>, vector<1x2x1xf32>,
    %c0_40 = arith.constant 0 : index
    %c0_41 = arith.constant 0 : index
    %c0_42 = arith.constant 0 : index
    %76 = vector.load %arg15[%c0_40, %c0_41, %c0_42] : memref<1x2x512xf32, #tpu.memory_space<vmem>>, vector<1x2x512xf32>
    %77 = vector.shape_cast %76 : vector<1x2x512xf32> to vector<2x512xf32>
    %78 = vector.broadcast %63 : vector<2x1xf32> to vector<2x512xf32>
    %79 = arith.mulf %78, %77 : vector<2x512xf32>
    %cst_43 = arith.constant dense<0.000000e+00> : vector<2x512xf32>
    %80 = tpu.matmul %66, %24, %cst_43 {dimension_numbers = #tpu.dot_dimension_numbers<[1], [0], [0], [1], [0, 0, 1, 1], [], []>} : vector<2x64xf32>, vector<64x512xf32>, vector<2x512xf32> -> vector<2x512xf32>
    %81 = arith.addf %79, %80 : vector<2x512xf32>
    %c0_44 = arith.constant 0 : index
    %c0_45 = arith.constant 0 : index
    %c0_46 = arith.constant 0 : index
    %82 = vector.load %arg15[%c0_44, %c0_45, %c0_46] : memref<1x2x512xf32, #tpu.memory_space<vmem>>, vector<1x2x512xf32>
    %83 = vector.shape_cast %82 : vector<1x2x512xf32> to vector<2x512xf32>
    %84 = vector.shape_cast %81 : vector<2x512xf32> to vector<1x2x512xf32>
    tpu.vector_store %arg15[%c0_44, %c0_45, %c0_46], %84 {strides = array<i32>} : memref<1x2x512xf32, #tpu.memory_space<vmem>>, vector<1x2x512xf32>,
    %c0_47 = arith.constant 0 : index
    %c0_48 = arith.constant 0 : index
    %c0_49 = arith.constant 0 : index
    %85 = vector.load %arg13[%c0_47, %c0_48, %c0_49] : memref<1x2x1xf32, #tpu.memory_space<vmem>>, vector<1x2x1xf32>
    %86 = vector.shape_cast %85 : vector<1x2x1xf32> to vector<2x1xf32>
    %87 = vector.shape_cast %61 : vector<2x1xf32> to vector<1x2x1xf32>
    tpu.vector_store %arg13[%c0_47, %c0_48, %c0_49], %87 {strides = array<i32>} : memref<1x2x1xf32, #tpu.memory_space<vmem>>, vector<1x2x1xf32>,
    return
  }
  func.func @transform_0(%arg0: i32, %arg1: i32, %arg2: memref<1xi32, #tpu.memory_space<smem>>) -> (i32, i32) {
    %c1_i32 = arith.constant 1 : i32
    %0 = arith.muli %arg0, %c1_i32 : i32
    %1 = arith.addi %0, %arg1 : i32
    %c0_i32 = arith.constant 0 : i32
    %2 = arith.minsi %1, %c0_i32 : i32
    %c0_i32_0 = arith.constant 0 : i32
    %c0_i32_1 = arith.constant 0 : i32
    return %2, %c0_i32_0 : i32, i32
  }
  func.func @transform_1(%arg0: i32, %arg1: i32, %arg2: memref<1xi32, #tpu.memory_space<smem>>) -> (i32, i32) {
    %c0_i32 = arith.constant 0 : i32
    %c0_i32_0 = arith.constant 0 : i32
    %c0_i32_1 = arith.constant 0 : i32
    return %c0_i32, %c0_i32_0 : i32, i32
  }
  func.func @transform_2(%arg0: i32, %arg1: i32, %arg2: memref<1xi32, #tpu.memory_space<smem>>) -> (i32, i32) {
    %c0_i32 = arith.constant 0 : i32
    %c0_i32_0 = arith.constant 0 : i32
    %c0_i32_1 = arith.constant 0 : i32
    return %c0_i32, %c0_i32_0 : i32, i32
  }
  func.func @transform_3(%arg0: i32, %arg1: i32, %arg2: memref<1xi32, #tpu.memory_space<smem>>) -> (i32, i32) {
    %c0_i32 = arith.constant 0 : i32
    %c0_i32_0 = arith.constant 0 : i32
    %c0_i32_1 = arith.constant 0 : i32
    return %c0_i32, %c0_i32_0 : i32, i32
  }
  func.func @transform_4(%arg0: i32, %arg1: i32, %arg2: memref<1xi32, #tpu.memory_space<smem>>) -> (i32, i32) {
    %c0_i32 = arith.constant 0 : i32
    %c0_i32_0 = arith.constant 0 : i32
    %c0_i32_1 = arith.constant 0 : i32
    return %c0_i32, %c0_i32_0 : i32, i32
  }
  func.func @transform_5(%arg0: i32, %arg1: i32, %arg2: memref<1xi32, #tpu.memory_space<smem>>) -> (i32, i32) {
    %c0_i32 = arith.constant 0 : i32
    %c0_i32_0 = arith.constant 0 : i32
    %c0_i32_1 = arith.constant 0 : i32
    return %c0_i32, %c0_i32_0 : i32, i32
  }
  func.func @transform_6(%arg0: i32, %arg1: i32, %arg2: memref<1xi32, #tpu.memory_space<smem>>) -> (i32, i32) {
    %c0_i32 = arith.constant 0 : i32
    %c0_i32_0 = arith.constant 0 : i32
    %c0_i32_1 = arith.constant 0 : i32
    return %c0_i32, %c0_i32_0 : i32, i32
  }
  func.func @transform_7(%arg0: i32, %arg1: i32, %arg2: memref<1xi32, #tpu.memory_space<smem>>) -> (i32, i32) {
    %c0_i32 = arith.constant 0 : i32
    %c0_i32_0 = arith.constant 0 : i32
    %c0_i32_1 = arith.constant 0 : i32
    return %c0_i32, %c0_i32_0 : i32, i32
  }
  func.func @transform_8(%arg0: i32, %arg1: i32, %arg2: memref<1xi32, #tpu.memory_space<smem>>) -> (i32, i32) {
    %c0_i32 = arith.constant 0 : i32
    %c0_i32_0 = arith.constant 0 : i32
    %c0_i32_1 = arith.constant 0 : i32
    return %c0_i32, %c0_i32_0 : i32, i32
  }
  func.func @transform_9(%arg0: i32, %arg1: i32, %arg2: memref<1xi32, #tpu.memory_space<smem>>) -> (i32, i32) {
    %c1_i32 = arith.constant 1 : i32
    %0 = arith.muli %arg0, %c1_i32 : i32
    %1 = arith.addi %0, %arg1 : i32
    %c0_i32 = arith.constant 0 : i32
    %c0_i32_0 = arith.constant 0 : i32
    return %c0_i32, %1 : i32, i32
  }
  func.func @transform_10(%arg0: i32, %arg1: i32, %arg2: memref<1xi32, #tpu.memory_space<smem>>) -> (i32, i32, i32) {
    %c0_i32 = arith.constant 0 : i32
    %c0_i32_0 = arith.constant 0 : i32
    %c0_i32_1 = arith.constant 0 : i32
    return %arg0, %c0_i32, %c0_i32_0 : i32, i32, i32
  }
  func.func @transform_11(%arg0: i32, %arg1: i32, %arg2: memref<1xi32, #tpu.memory_space<smem>>) -> (i32, i32, i32) {
    %c0_i32 = arith.constant 0 : i32
    %c0_i32_0 = arith.constant 0 : i32
    %c0_i32_1 = arith.constant 0 : i32
    return %arg0, %c0_i32, %c0_i32_0 : i32, i32, i32
  }
  func.func @transform_12(%arg0: i32, %arg1: i32, %arg2: memref<1xi32, #tpu.memory_space<smem>>) -> (i32, i32, i32) {
    %c0_i32 = arith.constant 0 : i32
    %c0_i32_0 = arith.constant 0 : i32
    %c0_i32_1 = arith.constant 0 : i32
    return %arg0, %c0_i32, %c0_i32_0 : i32, i32, i32
  }
}

</mosaic_0001>

<llo_original>
// kernel: clam_mb_forward.1
$region0: #{clam_mb_forward.1}
  #allocation0 [shape = 'u32[]', space=smem, size = 0x4, offset = 0x4, fixed_abs, tag = 'smem constant byte address 0x4 - core index']
  #allocation1 [shape = 'u32[144,128]{1,0:T(1,128)}', space=vmem, size = 0x12000, scoped, tag = 'internal scratch']
  #allocation2 [shape = 's32[1]{0}', space=sflag, size = 0x4, scoped, tag = 'scoped memory for clam_mb_forward.1']
  #allocation3 [shape = 's32[1]{0:T(128)S(6)}', space=smem, size = 0x200, scoped, tag = 'prefetched SMEM operand 0']
  %s0 = inlined_call_operand.<no memory space> [shape: s32[1], index: 0, kind: input, shape index: {}]
  %s1 = inlined_call_operand.hbm [shape: f32[64,1024], index: 1, kind: input, shape index: {}]
  %s2 = inlined_call_operand.hbm [shape: bf16[1024,512], index: 2, kind: input, shape index: {}]
  %s3 = inlined_call_operand.vmem [shape: f32[1,512], index: 3, kind: input, shape index: {}]
  %s4 = inlined_call_operand.hbm [shape: bf16[512,256], index: 4, kind: input, shape index: {}]
  %s5 = inlined_call_operand.hbm [shape: f32[1,256], index: 5, kind: input, shape index: {}]
  %s6 = inlined_call_operand.hbm [shape: bf16[512,256], index: 6, kind: input, shape index: {}]
  %s7 = inlined_call_operand.hbm [shape: f32[1,256], index: 7, kind: input, shape index: {}]
  %s8 = inlined_call_operand.vmem [shape: f32[2,256], index: 8, kind: input, shape index: {}]
  %s9 = inlined_call_operand.vmem [shape: f32[2,1], index: 9, kind: input, shape index: {}]
  %s10 = inlined_call_operand.hbm [shape: f32[2,64], index: 10, kind: output, shape index: {0}]
  %s11 = inlined_call_operand.vmem [shape: f32[1,2,1], index: 11, kind: output, shape index: {1}]
  %s12 = inlined_call_operand.vmem [shape: f32[1,2,1], index: 12, kind: output, shape index: {2}]
  %s13 = inlined_call_operand.vmem [shape: f32[1,2,512], index: 13, kind: output, shape index: {3}]
  %14 = xla_tuple %s10, %s11, %s12, %s13
  %s15 = sld [smem:[#allocation0]]
  $region98: #{clam_mb_forward.1} parent=0
    _
  %s17 = ssub.s32 1, %s15
  %s18 = scalar_select 0, %s17, %s15
  %19 = sst [smem:[#allocation3]] %s0
  $region1: #{clam_mb_forward.1} parent=0
    #allocation4 [shape = 'u8[262144]{0}', space=vmem, size = 0x40000, scoped, tag = 'input window, operand 1, single buffered']
    #allocation5 [shape = 's32[1]{0}', space=sflag, size = 0x4, scoped, tag = 'scoped memory for clam_mb_forward.1']
    #allocation6 [shape = 's32[1]{0}', space=sflag, size = 0x4, scoped, tag = 'scoped memory for clam_mb_forward.1']
    #allocation7 [shape = 'u8[1048576]{0}', space=vmem, size = 0x100000, scoped, tag = 'input window, operand 2, single buffered']
    #allocation8 [shape = 's32[1]{0}', space=sflag, size = 0x4, scoped, tag = 'scoped memory for clam_mb_forward.1']
    #allocation9 [shape = 'u8[262144]{0}', space=vmem, size = 0x40000, scoped, tag = 'input window, operand 4, single buffered']
    #allocation10 [shape = 'u8[1024]{0}', space=vmem, size = 0x400, scoped, tag = 'input window, operand 5, single buffered']
    #allocation11 [shape = 's32[1]{0}', space=sflag, size = 0x4, scoped, tag = 'scoped memory for clam_mb_forward.1']
    #allocation12 [shape = 'u8[262144]{0}', space=vmem, size = 0x40000, scoped, tag = 'input window, operand 6, single buffered']
    #allocation13 [shape = 'u8[1024]{0}', space=vmem, size = 0x400, scoped, tag = 'input window, operand 7, single buffered']
    #allocation14 [shape = 's32[1]{0}', space=sflag, size = 0x4, scoped, tag = 'scoped memory for clam_mb_forward.1']
    #allocation15 [shape = 'u8[1024]{0}', space=vmem, size = 0x400, scoped, tag = 'output window, operand 0, single buffered']
    %20 = vsyncpa [#allocation5], 0
    %21 = vsyncpa [#allocation8], 0
    %22 = vsyncpa [#allocation11], 0
    %23 = vsyncpa [#allocation14], 0
    %24 = vsyncpa [#allocation6], 0
    // Predicated region
    $region2: #{clam_mb_forward.1} parent=1 // pred_check
      _
    $region3: #{clam_mb_forward.1} parent=1 // pred_check_branch
      %26 = sbr.rel (0) target = $region5
    $region4: #{clam_mb_forward.1} parent=1 // pred_region
      %s27 = sadd.s32 0, 0
      %p28 = scmp.lt.s32.totalorder %s27, 0
      %s29 = scalar_select %p28, %s27, 0
      %s30 = smul.u32 8, %s29
      %s32 = ssub.s32 8192, 8192
      %33 = vsyncadd [#allocation5], %s32
      %s34 = smul.addr %s30, 8
      %s35 = smul.addr %s34, 128
      %s36 = scalar_lea.hbm %s1, %s35
      %s37 = sshll.u32 [#allocation4], 4
      %s38 = int_to_ptr.vmem [resolvable:$true] %s37
      %43 = dma.hbm_to_vmem [thread:$0]  %s36, 8192, %s38, [#allocation5], 1024, 1024, 64
    $region5: #{clam_mb_forward.1} parent=1 // pred_fallthru
      _
    // Predicated region
    $region6: #{clam_mb_forward.1} parent=1 // pred_check
      _
    $region7: #{clam_mb_forward.1} parent=1 // pred_check_branch
      %45 = sbr.rel (0) target = $region9
    $region8: #{clam_mb_forward.1} parent=1 // pred_region
      %s47 = ssub.s32 32768, 32768
      %48 = vsyncadd [#allocation8], %s47
      %s49 = sshll.u32 [#allocation7], 4
      %s50 = int_to_ptr.vmem [resolvable:$true] %s49
      %55 = dma.hbm_to_vmem [thread:$0]  %s2, 32768, %s50, [#allocation8], 256, 256, 16
    $region9: #{clam_mb_forward.1} parent=1 // pred_fallthru
      _
    // Predicated region
    $region10: #{clam_mb_forward.1} parent=1 // pred_check
      _
    $region11: #{clam_mb_forward.1} parent=1 // pred_check_branch
      %57 = sbr.rel (0) target = $region13
    $region12: #{clam_mb_forward.1} parent=1 // pred_region
      _
    $region13: #{clam_mb_forward.1} parent=1 // pred_fallthru
      _
    // Predicated region
    $region14: #{clam_mb_forward.1} parent=1 // pred_check
      _
    $region15: #{clam_mb_forward.1} parent=1 // pred_check_branch
      %59 = sbr.rel (0) target = $region17
    $region16: #{clam_mb_forward.1} parent=1 // pred_region
      %s61 = ssub.s32 8192, 8192
      %62 = vsyncadd [#allocation8], %s61
      %s63 = sshll.u32 [#allocation9], 4
      %s64 = int_to_ptr.vmem [resolvable:$true] %s63
      %69 = dma.hbm_to_vmem [thread:$0]  %s4, 8192, %s64, [#allocation8], 128, 128, 8
    $region17: #{clam_mb_forward.1} parent=1 // pred_fallthru
      _
    // Predicated region
    $region18: #{clam_mb_forward.1} parent=1 // pred_check
      _
    $region19: #{clam_mb_forward.1} parent=1 // pred_check_branch
      %71 = sbr.rel (0) target = $region21
    $region20: #{clam_mb_forward.1} parent=1 // pred_region
      %s73 = ssub.s32 32, 32
      %74 = vsyncadd [#allocation11], %s73
      %s76 = sshll.u32 [#allocation10], 4
      %s77 = int_to_ptr.vmem [resolvable:$true] %s76
      %79 = dma.hbm_to_vmem [thread:$0]  %s5, 32, %s77, [#allocation11]
    $region21: #{clam_mb_forward.1} parent=1 // pred_fallthru
      _
    // Predicated region
    $region22: #{clam_mb_forward.1} parent=1 // pred_check
      _
    $region23: #{clam_mb_forward.1} parent=1 // pred_check_branch
      %81 = sbr.rel (0) target = $region25
    $region24: #{clam_mb_forward.1} parent=1 // pred_region
      %s83 = ssub.s32 8192, 8192
      %84 = vsyncadd [#allocation11], %s83
      %s85 = sshll.u32 [#allocation12], 4
      %s86 = int_to_ptr.vmem [resolvable:$true] %s85
      %91 = dma.hbm_to_vmem [thread:$0]  %s6, 8192, %s86, [#allocation11], 128, 128, 8
    $region25: #{clam_mb_forward.1} parent=1 // pred_fallthru
      _
    // Predicated region
    $region26: #{clam_mb_forward.1} parent=1 // pred_check
      _
    $region27: #{clam_mb_forward.1} parent=1 // pred_check_branch
      %93 = sbr.rel (0) target = $region29
    $region28: #{clam_mb_forward.1} parent=1 // pred_region
      %s95 = ssub.s32 32, 32
      %96 = vsyncadd [#allocation14], %s95
      %s98 = sshll.u32 [#allocation13], 4
      %s99 = int_to_ptr.vmem [resolvable:$true] %s98
      %101 = dma.hbm_to_vmem [thread:$0]  %s7, 32, %s99, [#allocation14]
    $region29: #{clam_mb_forward.1} parent=1 // pred_fallthru
      _
    // Predicated region
    $region30: #{clam_mb_forward.1} parent=1 // pred_check
      _
    $region31: #{clam_mb_forward.1} parent=1 // pred_check_branch
      %103 = sbr.rel (0) target = $region33
    $region32: #{clam_mb_forward.1} parent=1 // pred_region
      _
    $region33: #{clam_mb_forward.1} parent=1 // pred_fallthru
      _
    // Predicated region
    $region34: #{clam_mb_forward.1} parent=1 // pred_check
      _
    $region35: #{clam_mb_forward.1} parent=1 // pred_check_branch
      %105 = sbr.rel (0) target = $region37
    $region36: #{clam_mb_forward.1} parent=1 // pred_region
      _
    $region37: #{clam_mb_forward.1} parent=1 // pred_fallthru
      _
    // Predicated region
    $region38: #{clam_mb_forward.1} parent=1 // pred_check
      _
    $region39: #{clam_mb_forward.1} parent=1 // pred_check_branch
      %107 = sbr.rel (0) target = $region41
    $region40: #{clam_mb_forward.1} parent=1 // pred_region
      %108 = dma.done [#allocation5], 8192
    $region41: #{clam_mb_forward.1} parent=1 // pred_fallthru
      _
    // Predicated region
    $region42: #{clam_mb_forward.1} parent=1 // pred_check
      _
    $region43: #{clam_mb_forward.1} parent=1 // pred_check_branch
      %110 = sbr.rel (0) target = $region45
    $region44: #{clam_mb_forward.1} parent=1 // pred_region
      %111 = dma.done [#allocation8], 32768
    $region45: #{clam_mb_forward.1} parent=1 // pred_fallthru
      _
    // Predicated region
    $region46: #{clam_mb_forward.1} parent=1 // pred_check
      _
    $region47: #{clam_mb_forward.1} parent=1 // pred_check_branch
      %113 = sbr.rel (0) target = $region49
    $region48: #{clam_mb_forward.1} parent=1 // pred_region
      %114 = dma.done [#allocation8], 8192
    $region49: #{clam_mb_forward.1} parent=1 // pred_fallthru
      _
    // Predicated region
    $region50: #{clam_mb_forward.1} parent=1 // pred_check
      _
    $region51: #{clam_mb_forward.1} parent=1 // pred_check_branch
      %116 = sbr.rel (0) target = $region53
    $region52: #{clam_mb_forward.1} parent=1 // pred_region
      %117 = dma.done [#allocation11], 32
    $region53: #{clam_mb_forward.1} parent=1 // pred_fallthru
      _
    // Predicated region
    $region54: #{clam_mb_forward.1} parent=1 // pred_check
      _
    $region55: #{clam_mb_forward.1} parent=1 // pred_check_branch
      %119 = sbr.rel (0) target = $region57
    $region56: #{clam_mb_forward.1} parent=1 // pred_region
      %120 = dma.done [#allocation11], 8192
    $region57: #{clam_mb_forward.1} parent=1 // pred_fallthru
      _
    // Predicated region
    $region58: #{clam_mb_forward.1} parent=1 // pred_check
      _
    $region59: #{clam_mb_forward.1} parent=1 // pred_check_branch
      %122 = sbr.rel (0) target = $region61
    $region60: #{clam_mb_forward.1} parent=1 // pred_region
      %123 = dma.done [#allocation14], 32
    $region61: #{clam_mb_forward.1} parent=1 // pred_fallthru
      _
    %s124 = sadd.s32 0, 0
    %p125 = scmp.lt.s32.totalorder %s124, 0
    %s126 = scalar_select %p125, %s124, 0
    %s127 = smul.u32 8, %s126
    %s128 = sadd.s32 0, 0
    %p129 = scmp.eq.s32.totalorder 0, 0
    // Predicated region
    $region62: #{clam_mb_forward.1} parent=1 // pred_check
      %p130 = pneg %p129
    $region63: #{clam_mb_forward.1} parent=1 // pred_check_branch
      %132 = sbr.rel (%p130) target = $region65
    $region64: #{clam_mb_forward.1} parent=1 // pred_region
      %vm133 = vcmask 1024
      %134 = vst.msk [vmem:[%s11] sm:$0x3] %vm133, -inf
      %135 = vst.msk [vmem:[%s12] sm:$0x3] %vm133, 0.0
      %136 = vst [vmem:[%s13] sm:$0xff] 0.0
    $region65: #{clam_mb_forward.1} parent=1 // pred_fallthru
      _
    %s137 = sld [smem:[#allocation3]]
    %s138 = sadd.s32 0, 0
    %v139 = vld [vmem:[#allocation4] sm:$0xff]
    %v140 = vld [vmem:[#allocation4 + $0x8] sm:$0xff]
    %v141 = vld [vmem:[#allocation4 + $0x10] sm:$0xff]
    %v142 = vld [vmem:[#allocation4 + $0x18] sm:$0xff]
    %v143 = vld [vmem:[#allocation4 + $0x20] sm:$0xff]
    %v144 = vld [vmem:[#allocation4 + $0x28] sm:$0xff]
    %v145 = vld [vmem:[#allocation4 + $0x30] sm:$0xff]
    %v146 = vld [vmem:[#allocation4 + $0x38] sm:$0xff]
    %v147 = vld [vmem:[#allocation4 + $0x40] sm:$0xff]
    %v148 = vld [vmem:[#allocation4 + $0x48] sm:$0xff]
    %v149 = vld [vmem:[#allocation4 + $0x50] sm:$0xff]
    %v150 = vld [vmem:[#allocation4 + $0x58] sm:$0xff]
    %v151 = vld [vmem:[#allocation4 + $0x60] sm:$0xff]
    %v152 = vld [vmem:[#allocation4 + $0x68] sm:$0xff]
    %v153 = vld [vmem:[#allocation4 + $0x70] sm:$0xff]
    %v154 = vld [vmem:[#allocation4 + $0x78] sm:$0xff]
    %v155 = vld [vmem:[#allocation4 + $0x80] sm:$0xff]
    %v156 = vld [vmem:[#allocation4 + $0x88] sm:$0xff]
    %v157 = vld [vmem:[#allocation4 + $0x90] sm:$0xff]
    %v158 = vld [vmem:[#allocation4 + $0x98] sm:$0xff]
    %v159 = vld [vmem:[#allocation4 + $0xa0] sm:$0xff]
    %v160 = vld [vmem:[#allocation4 + $0xa8] sm:$0xff]
    %v161 = vld [vmem:[#allocation4 + $0xb0] sm:$0xff]
    %v162 = vld [vmem:[#allocation4 + $0xb8] sm:$0xff]
    %v163 = vld [vmem:[#allocation4 + $0xc0] sm:$0xff]
    %v164 = vld [vmem:[#allocation4 + $0xc8] sm:$0xff]
    %v165 = vld [vmem:[#allocation4 + $0xd0] sm:$0xff]
    %v166 = vld [vmem:[#allocation4 + $0xd8] sm:$0xff]
    %v167 = vld [vmem:[#allocation4 + $0xe0] sm:$0xff]
    %v168 = vld [vmem:[#allocation4 + $0xe8] sm:$0xff]
    %v169 = vld [vmem:[#allocation4 + $0xf0] sm:$0xff]
    %v170 = vld [vmem:[#allocation4 + $0xf8] sm:$0xff]
    %v171 = vld [vmem:[#allocation4 + $0x100] sm:$0xff]
    %v172 = vld [vmem:[#allocation4 + $0x108] sm:$0xff]
    %v173 = vld [vmem:[#allocation4 + $0x110] sm:$0xff]
    %v174 = vld [vmem:[#allocation4 + $0x118] sm:$0xff]
    %v175 = vld [vmem:[#allocation4 + $0x120] sm:$0xff]
    %v176 = vld [vmem:[#allocation4 + $0x128] sm:$0xff]
    %v177 = vld [vmem:[#allocation4 + $0x130] sm:$0xff]
    %v178 = vld [vmem:[#allocation4 + $0x138] sm:$0xff]
    %v179 = vld [vmem:[#allocation4 + $0x140] sm:$0xff]
    %v180 = vld [vmem:[#allocation4 + $0x148] sm:$0xff]
    %v181 = vld [vmem:[#allocation4 + $0x150] sm:$0xff]
    %v182 = vld [vmem:[#allocation4 + $0x158] sm:$0xff]
    %v183 = vld [vmem:[#allocation4 + $0x160] sm:$0xff]
    %v184 = vld [vmem:[#allocation4 + $0x168] sm:$0xff]
    %v185 = vld [vmem:[#allocation4 + $0x170] sm:$0xff]
    %v186 = vld [vmem:[#allocation4 + $0x178] sm:$0xff]
    %v187 = vld [vmem:[#allocation4 + $0x180] sm:$0xff]
    %v188 = vld [vmem:[#allocation4 + $0x188] sm:$0xff]
    %v189 = vld [vmem:[#allocation4 + $0x190] sm:$0xff]
    %v190 = vld [vmem:[#allocation4 + $0x198] sm:$0xff]
    %v191 = vld [vmem:[#allocation4 + $0x1a0] sm:$0xff]
    %v192 = vld [vmem:[#allocation4 + $0x1a8] sm:$0xff]
    %v193 = vld [vmem:[#allocation4 + $0x1b0] sm:$0xff]
    %v194 = vld [vmem:[#allocation4 + $0x1b8] sm:$0xff]
    %v195 = vld [vmem:[#allocation4 + $0x1c0] sm:$0xff]
    %v196 = vld [vmem:[#allocation4 + $0x1c8] sm:$0xff]
    %v197 = vld [vmem:[#allocation4 + $0x1d0] sm:$0xff]
    %v198 = vld [vmem:[#allocation4 + $0x1d8] sm:$0xff]
    %v199 = vld [vmem:[#allocation4 + $0x1e0] sm:$0xff]
    %v200 = vld [vmem:[#allocation4 + $0x1e8] sm:$0xff]
    %v201 = vld [vmem:[#allocation4 + $0x1f0] sm:$0xff]
    %v202 = vld [vmem:[#allocation4 + $0x1f8] sm:$0xff]
    %v203 = vpack.c.bf16 %v147, %v139
    %v204 = vpack.c.bf16 %v148, %v140
    %v205 = vpack.c.bf16 %v149, %v141
    %v206 = vpack.c.bf16 %v150, %v142
    %v207 = vpack.c.bf16 %v151, %v143
    %v208 = vpack.c.bf16 %v152, %v144
    %v209 = vpack.c.bf16 %v153, %v145
    %v210 = vpack.c.bf16 %v154, %v146
    %v211 = vpack.c.bf16 %v163, %v155
    %v212 = vpack.c.bf16 %v164, %v156
    %v213 = vpack.c.bf16 %v165, %v157
    %v214 = vpack.c.bf16 %v166, %v158
    %v215 = vpack.c.bf16 %v167, %v159
    %v216 = vpack.c.bf16 %v168, %v160
    %v217 = vpack.c.bf16 %v169, %v161
    %v218 = vpack.c.bf16 %v170, %v162
    %v219 = vpack.c.bf16 %v179, %v171
    %v220 = vpack.c.bf16 %v180, %v172
    %v221 = vpack.c.bf16 %v181, %v173
    %v222 = vpack.c.bf16 %v182, %v174
    %v223 = vpack.c.bf16 %v183, %v175
    %v224 = vpack.c.bf16 %v184, %v176
    %v225 = vpack.c.bf16 %v185, %v177
    %v226 = vpack.c.bf16 %v186, %v178
    %v227 = vpack.c.bf16 %v195, %v187
    %v228 = vpack.c.bf16 %v196, %v188
    %v229 = vpack.c.bf16 %v197, %v189
    %v230 = vpack.c.bf16 %v198, %v190
    %v231 = vpack.c.bf16 %v199, %v191
    %v232 = vpack.c.bf16 %v200, %v192
    %v233 = vpack.c.bf16 %v201, %v193
    %v234 = vpack.c.bf16 %v202, %v194
    %v235 = vld [vmem:[#allocation7] sm:$0xff]
    %v236 = vld [vmem:[#allocation7 + $0x8] sm:$0xff]
    %v237 = vld [vmem:[#allocation7 + $0x10] sm:$0xff]
    %v238 = vld [vmem:[#allocation7 + $0x18] sm:$0xff]
    %v239 = vld [vmem:[#allocation7 + $0x20] sm:$0xff]
    %v240 = vld [vmem:[#allocation7 + $0x28] sm:$0xff]
    %v241 = vld [vmem:[#allocation7 + $0x30] sm:$0xff]
    %v242 = vld [vmem:[#allocation7 + $0x38] sm:$0xff]
    %v243 = vld [vmem:[#allocation7 + $0x40] sm:$0xff]
    %v244 = vld [vmem:[#allocation7 + $0x48] sm:$0xff]
    %v245 = vld [vmem:[#allocation7 + $0x50] sm:$0xff]
    %v246 = vld [vmem:[#allocation7 + $0x58] sm:$0xff]
    %v247 = vld [vmem:[#allocation7 + $0x60] sm:$0xff]
    %v248 = vld [vmem:[#allocation7 + $0x68] sm:$0xff]
    %v249 = vld [vmem:[#allocation7 + $0x70] sm:$0xff]
    %v250 = vld [vmem:[#allocation7 + $0x78] sm:$0xff]
    %v251 = vld [vmem:[#allocation7 + $0x80] sm:$0xff]
    %v252 = vld [vmem:[#allocation7 + $0x88] sm:$0xff]
    %v253 = vld [vmem:[#allocation7 + $0x90] sm:$0xff]
    %v254 = vld [vmem:[#allocation7 + $0x98] sm:$0xff]
    %v255 = vld [vmem:[#allocation7 + $0xa0] sm:$0xff]
    %v256 = vld [vmem:[#allocation7 + $0xa8] sm:$0xff]
    %v257 = vld [vmem:[#allocation7 + $0xb0] sm:$0xff]
    %v258 = vld [vmem:[#allocation7 + $0xb8] sm:$0xff]
    %v259 = vld [vmem:[#allocation7 + $0xc0] sm:$0xff]
    %v260 = vld [vmem:[#allocation7 + $0xc8] sm:$0xff]
    %v261 = vld [vmem:[#allocation7 + $0xd0] sm:$0xff]
    %v262 = vld [vmem:[#allocation7 + $0xd8] sm:$0xff]
    %v263 = vld [vmem:[#allocation7 + $0xe0] sm:$0xff]
    %v264 = vld [vmem:[#allocation7 + $0xe8] sm:$0xff]
    %v265 = vld [vmem:[#allocation7 + $0xf0] sm:$0xff]
    %v266 = vld [vmem:[#allocation7 + $0xf8] sm:$0xff]
    %v267 = vld [vmem:[#allocation7 + $0x100] sm:$0xff]
    %v268 = vld [vmem:[#allocation7 + $0x108] sm:$0xff]
    %v269 = vld [vmem:[#allocation7 + $0x110] sm:$0xff]
    %v270 = vld [vmem:[#allocation7 + $0x118] sm:$0xff]
    %v271 = vld [vmem:[#allocation7 + $0x120] sm:$0xff]
    %v272 = vld [vmem:[#allocation7 + $0x128] sm:$0xff]
    %v273 = vld [vmem:[#allocation7 + $0x130] sm:$0xff]
    %v274 = vld [vmem:[#allocation7 + $0x138] sm:$0xff]
    %v275 = vld [vmem:[#allocation7 + $0x140] sm:$0xff]
    %v276 = vld [vmem:[#allocation7 + $0x148] sm:$0xff]
    %v277 = vld [vmem:[#allocation7 + $0x150] sm:$0xff]
    %v278 = vld [vmem:[#allocation7 + $0x158] sm:$0xff]
    %v279 = vld [vmem:[#allocation7 + $0x160] sm:$0xff]
    %v280 = vld [vmem:[#allocation7 + $0x168] sm:$0xff]
    %v281 = vld [vmem:[#allocation7 + $0x170] sm:$0xff]
    %v282 = vld [vmem:[#allocation7 + $0x178] sm:$0xff]
    %v283 = vld [vmem:[#allocation7 + $0x180] sm:$0xff]
    %v284 = vld [vmem:[#allocation7 + $0x188] sm:$0xff]
    %v285 = vld [vmem:[#allocation7 + $0x190] sm:$0xff]
    %v286 = vld [vmem:[#allocation7 + $0x198] sm:$0xff]
    %v287 = vld [vmem:[#allocation7 + $0x1a0] sm:$0xff]
    %v288 = vld [vmem:[#allocation7 + $0x1a8] sm:$0xff]
    %v289 = vld [vmem:[#allocation7 + $0x1b0] sm:$0xff]
    %v290 = vld [vmem:[#allocation7 + $0x1b8] sm:$0xff]
    %v291 = vld [vmem:[#allocation7 + $0x1c0] sm:$0xff]
    %v292 = vld [vmem:[#allocation7 + $0x1c8] sm:$0xff]
    %v293 = vld [vmem:[#allocation7 + $0x1d0] sm:$0xff]
    %v294 = vld [vmem:[#allocation7 + $0x1d8] sm:$0xff]
    %v295 = vld [vmem:[#allocation7 + $0x1e0] sm:$0xff]
    %v296 = vld [vmem:[#allocation7 + $0x1e8] sm:$0xff]
    %v297 = vld [vmem:[#allocation7 + $0x1f0] sm:$0xff]
    %v298 = vld [vmem:[#allocation7 + $0x1f8] sm:$0xff]
    %v299 = vld [vmem:[#allocation7 + $0x200] sm:$0xff]
    %v300 = vld [vmem:[#allocation7 + $0x208] sm:$0xff]
    %v301 = vld [vmem:[#allocation7 + $0x210] sm:$0xff]
    %v302 = vld [vmem:[#allocation7 + $0x218] sm:$0xff]
    %v303 = vld [vmem:[#allocation7 + $0x220] sm:$0xff]
    %v304 = vld [vmem:[#allocation7 + $0x228] sm:$0xff]
    %v305 = vld [vmem:[#allocation7 + $0x230] sm:$0xff]
    %v306 = vld [vmem:[#allocation7 + $0x238] sm:$0xff]
    %v307 = vld [vmem:[#allocation7 + $0x240] sm:$0xff]
    %v308 = vld [vmem:[#allocation7 + $0x248] sm:$0xff]
    %v309 = vld [vmem:[#allocation7 + $0x250] sm:$0xff]
    %v310 = vld [vmem:[#allocation7 + $0x258] sm:$0xff]
    %v311 = vld [vmem:[#allocation7 + $0x260] sm:$0xff]
    %v312 = vld [vmem:[#allocation7 + $0x268] sm:$0xff]
    %v313 = vld [vmem:[#allocation7 + $0x270] sm:$0xff]
    %v314 = vld [vmem:[#allocation7 + $0x278] sm:$0xff]
    %v315 = vld [vmem:[#allocation7 + $0x280] sm:$0xff]
    %v316 = vld [vmem:[#allocation7 + $0x288] sm:$0xff]
    %v317 = vld [vmem:[#allocation7 + $0x290] sm:$0xff]
    %v318 = vld [vmem:[#allocation7 + $0x298] sm:$0xff]
    %v319 = vld [vmem:[#allocation7 + $0x2a0] sm:$0xff]
    %v320 = vld [vmem:[#allocation7 + $0x2a8] sm:$0xff]
    %v321 = vld [vmem:[#allocation7 + $0x2b0] sm:$0xff]
    %v322 = vld [vmem:[#allocation7 + $0x2b8] sm:$0xff]
    %v323 = vld [vmem:[#allocation7 + $0x2c0] sm:$0xff]
    %v324 = vld [vmem:[#allocation7 + $0x2c8] sm:$0xff]
    %v325 = vld [vmem:[#allocation7 + $0x2d0] sm:$0xff]
    %v326 = vld [vmem:[#allocation7 + $0x2d8] sm:$0xff]
    %v327 = vld [vmem:[#allocation7 + $0x2e0] sm:$0xff]
    %v328 = vld [vmem:[#allocation7 + $0x2e8] sm:$0xff]
    %v329 = vld [vmem:[#allocation7 + $0x2f0] sm:$0xff]
    %v330 = vld [vmem:[#allocation7 + $0x2f8] sm:$0xff]
    %v331 = vld [vmem:[#allocation7 + $0x300] sm:$0xff]
    %v332 = vld [vmem:[#allocation7 + $0x308] sm:$0xff]
    %v333 = vld [vmem:[#allocation7 + $0x310] sm:$0xff]
    %v334 = vld [vmem:[#allocation7 + $0x318] sm:$0xff]
    %v335 = vld [vmem:[#allocation7 + $0x320] sm:$0xff]
    %v336 = vld [vmem:[#allocation7 + $0x328] sm:$0xff]
    %v337 = vld [vmem:[#allocation7 + $0x330] sm:$0xff]
    %v338 = vld [vmem:[#allocation7 + $0x338] sm:$0xff]
    %v339 = vld [vmem:[#allocation7 + $0x340] sm:$0xff]
    %v340 = vld [vmem:[#allocation7 + $0x348] sm:$0xff]
    %v341 = vld [vmem:[#allocation7 + $0x350] sm:$0xff]
    %v342 = vld [vmem:[#allocation7 + $0x358] sm:$0xff]
    %v343 = vld [vmem:[#allocation7 + $0x360] sm:$0xff]
    %v344 = vld [vmem:[#allocation7 + $0x368] sm:$0xff]
    %v345 = vld [vmem:[#allocation7 + $0x370] sm:$0xff]
    %v346 = vld [vmem:[#allocation7 + $0x378] sm:$0xff]
    %v347 = vld [vmem:[#allocation7 + $0x380] sm:$0xff]
    %v348 = vld [vmem:[#allocation7 + $0x388] sm:$0xff]
    %v349 = vld [vmem:[#allocation7 + $0x390] sm:$0xff]
    %v350 = vld [vmem:[#allocation7 + $0x398] sm:$0xff]
    %v351 = vld [vmem:[#allocation7 + $0x3a0] sm:$0xff]
    %v352 = vld [vmem:[#allocation7 + $0x3a8] sm:$0xff]
    %v353 = vld [vmem:[#allocation7 + $0x3b0] sm:$0xff]
    %v354 = vld [vmem:[#allocation7 + $0x3b8] sm:$0xff]
    %v355 = vld [vmem:[#allocation7 + $0x3c0] sm:$0xff]
    %v356 = vld [vmem:[#allocation7 + $0x3c8] sm:$0xff]
    %v357 = vld [vmem:[#allocation7 + $0x3d0] sm:$0xff]
    %v358 = vld [vmem:[#allocation7 + $0x3d8] sm:$0xff]
    %v359 = vld [vmem:[#allocation7 + $0x3e0] sm:$0xff]
    %v360 = vld [vmem:[#allocation7 + $0x3e8] sm:$0xff]
    %v361 = vld [vmem:[#allocation7 + $0x3f0] sm:$0xff]
    %v362 = vld [vmem:[#allocation7 + $0x3f8] sm:$0xff]
    %v363 = vld [vmem:[#allocation7 + $0x400] sm:$0xff]
    %v364 = vld [vmem:[#allocation7 + $0x408] sm:$0xff]
    %v365 = vld [vmem:[#allocation7 + $0x410] sm:$0xff]
    %v366 = vld [vmem:[#allocation7 + $0x418] sm:$0xff]
    %v367 = vld [vmem:[#allocation7 + $0x420] sm:$0xff]
    %v368 = vld [vmem:[#allocation7 + $0x428] sm:$0xff]
    %v369 = vld [vmem:[#allocation7 + $0x430] sm:$0xff]
    %v370 = vld [vmem:[#allocation7 + $0x438] sm:$0xff]
    %v371 = vld [vmem:[#allocation7 + $0x440] sm:$0xff]
    %v372 = vld [vmem:[#allocation7 + $0x448] sm:$0xff]
    %v373 = vld [vmem:[#allocation7 + $0x450] sm:$0xff]
    %v374 = vld [vmem:[#allocation7 + $0x458] sm:$0xff]
    %v375 = vld [vmem:[#allocation7 + $0x460] sm:$0xff]
    %v376 = vld [vmem:[#allocation7 + $0x468] sm:$0xff]
    %v377 = vld [vmem:[#allocation7 + $0x470] sm:$0xff]
    %v378 = vld [vmem:[#allocation7 + $0x478] sm:$0xff]
    %v379 = vld [vmem:[#allocation7 + $0x480] sm:$0xff]
    %v380 = vld [vmem:[#allocation7 + $0x488] sm:$0xff]
    %v381 = vld [vmem:[#allocation7 + $0x490] sm:$0xff]
    %v382 = vld [vmem:[#allocation7 + $0x498] sm:$0xff]
    %v383 = vld [vmem:[#allocation7 + $0x4a0] sm:$0xff]
    %v384 = vld [vmem:[#allocation7 + $0x4a8] sm:$0xff]
    %v385 = vld [vmem:[#allocation7 + $0x4b0] sm:$0xff]
    %v386 = vld [vmem:[#allocation7 + $0x4b8] sm:$0xff]
    %v387 = vld [vmem:[#allocation7 + $0x4c0] sm:$0xff]
    %v388 = vld [vmem:[#allocation7 + $0x4c8] sm:$0xff]
    %v389 = vld [vmem:[#allocation7 + $0x4d0] sm:$0xff]
    %v390 = vld [vmem:[#allocation7 + $0x4d8] sm:$0xff]
    %v391 = vld [vmem:[#allocation7 + $0x4e0] sm:$0xff]
    %v392 = vld [vmem:[#allocation7 + $0x4e8] sm:$0xff]
    %v393 = vld [vmem:[#allocation7 + $0x4f0] sm:$0xff]
    %v394 = vld [vmem:[#allocation7 + $0x4f8] sm:$0xff]
    %v395 = vld [vmem:[#allocation7 + $0x500] sm:$0xff]
    %v396 = vld [vmem:[#allocation7 + $0x508] sm:$0xff]
    %v397 = vld [vmem:[#allocation7 + $0x510] sm:$0xff]
    %v398 = vld [vmem:[#allocation7 + $0x518] sm:$0xff]
    %v399 = vld [vmem:[#allocation7 + $0x520] sm:$0xff]
    %v400 = vld [vmem:[#allocation7 + $0x528] sm:$0xff]
    %v401 = vld [vmem:[#allocation7 + $0x530] sm:$0xff]
    %v402 = vld [vmem:[#allocation7 + $0x538] sm:$0xff]
    %v403 = vld [vmem:[#allocation7 + $0x540] sm:$0xff]
    %v404 = vld [vmem:[#allocation7 + $0x548] sm:$0xff]
    %v405 = vld [vmem:[#allocation7 + $0x550] sm:$0xff]
    %v406 = vld [vmem:[#allocation7 + $0x558] sm:$0xff]
    %v407 = vld [vmem:[#allocation7 + $0x560] sm:$0xff]
    %v408 = vld [vmem:[#allocation7 + $0x568] sm:$0xff]
    %v409 = vld [vmem:[#allocation7 + $0x570] sm:$0xff]
    %v410 = vld [vmem:[#allocation7 + $0x578] sm:$0xff]
    %v411 = vld [vmem:[#allocation7 + $0x580] sm:$0xff]
    %v412 = vld [vmem:[#allocation7 + $0x588] sm:$0xff]
    %v413 = vld [vmem:[#allocation7 + $0x590] sm:$0xff]
    %v414 = vld [vmem:[#allocation7 + $0x598] sm:$0xff]
    %v415 = vld [vmem:[#allocation7 + $0x5a0] sm:$0xff]
    %v416 = vld [vmem:[#allocation7 + $0x5a8] sm:$0xff]
    %v417 = vld [vmem:[#allocation7 + $0x5b0] sm:$0xff]
    %v418 = vld [vmem:[#allocation7 + $0x5b8] sm:$0xff]
    %v419 = vld [vmem:[#allocation7 + $0x5c0] sm:$0xff]
    %v420 = vld [vmem:[#allocation7 + $0x5c8] sm:$0xff]
    %v421 = vld [vmem:[#allocation7 + $0x5d0] sm:$0xff]
    %v422 = vld [vmem:[#allocation7 + $0x5d8] sm:$0xff]
    %v423 = vld [vmem:[#allocation7 + $0x5e0] sm:$0xff]
    %v424 = vld [vmem:[#allocation7 + $0x5e8] sm:$0xff]
    %v425 = vld [vmem:[#allocation7 + $0x5f0] sm:$0xff]
    %v426 = vld [vmem:[#allocation7 + $0x5f8] sm:$0xff]
    %v427 = vld [vmem:[#allocation7 + $0x600] sm:$0xff]
    %v428 = vld [vmem:[#allocation7 + $0x608] sm:$0xff]
    %v429 = vld [vmem:[#allocation7 + $0x610] sm:$0xff]
    %v430 = vld [vmem:[#allocation7 + $0x618] sm:$0xff]
    %v431 = vld [vmem:[#allocation7 + $0x620] sm:$0xff]
    %v432 = vld [vmem:[#allocation7 + $0x628] sm:$0xff]
    %v433 = vld [vmem:[#allocation7 + $0x630] sm:$0xff]
    %v434 = vld [vmem:[#allocation7 + $0x638] sm:$0xff]
    %v435 = vld [vmem:[#allocation7 + $0x640] sm:$0xff]
    %v436 = vld [vmem:[#allocation7 + $0x648] sm:$0xff]
    %v437 = vld [vmem:[#allocation7 + $0x650] sm:$0xff]
    %v438 = vld [vmem:[#allocation7 + $0x658] sm:$0xff]
    %v439 = vld [vmem:[#allocation7 + $0x660] sm:$0xff]
    %v440 = vld [vmem:[#allocation7 + $0x668] sm:$0xff]
    %v441 = vld [vmem:[#allocation7 + $0x670] sm:$0xff]
    %v442 = vld [vmem:[#allocation7 + $0x678] sm:$0xff]
    %v443 = vld [vmem:[#allocation7 + $0x680] sm:$0xff]
    %v444 = vld [vmem:[#allocation7 + $0x688] sm:$0xff]
    %v445 = vld [vmem:[#allocation7 + $0x690] sm:$0xff]
    %v446 = vld [vmem:[#allocation7 + $0x698] sm:$0xff]
    %v447 = vld [vmem:[#allocation7 + $0x6a0] sm:$0xff]
    %v448 = vld [vmem:[#allocation7 + $0x6a8] sm:$0xff]
    %v449 = vld [vmem:[#allocation7 + $0x6b0] sm:$0xff]
    %v450 = vld [vmem:[#allocation7 + $0x6b8] sm:$0xff]
    %v451 = vld [vmem:[#allocation7 + $0x6c0] sm:$0xff]
    %v452 = vld [vmem:[#allocation7 + $0x6c8] sm:$0xff]
    %v453 = vld [vmem:[#allocation7 + $0x6d0] sm:$0xff]
    %v454 = vld [vmem:[#allocation7 + $0x6d8] sm:$0xff]
    %v455 = vld [vmem:[#allocation7 + $0x6e0] sm:$0xff]
    %v456 = vld [vmem:[#allocation7 + $0x6e8] sm:$0xff]
    %v457 = vld [vmem:[#allocation7 + $0x6f0] sm:$0xff]
    %v458 = vld [vmem:[#allocation7 + $0x6f8] sm:$0xff]
    %v459 = vld [vmem:[#allocation7 + $0x700] sm:$0xff]
    %v460 = vld [vmem:[#allocation7 + $0x708] sm:$0xff]
    %v461 = vld [vmem:[#allocation7 + $0x710] sm:$0xff]
    %v462 = vld [vmem:[#allocation7 + $0x718] sm:$0xff]
    %v463 = vld [vmem:[#allocation7 + $0x720] sm:$0xff]
    %v464 = vld [vmem:[#allocation7 + $0x728] sm:$0xff]
    %v465 = vld [vmem:[#allocation7 + $0x730] sm:$0xff]
    %v466 = vld [vmem:[#allocation7 + $0x738] sm:$0xff]
    %v467 = vld [vmem:[#allocation7 + $0x740] sm:$0xff]
    %v468 = vld [vmem:[#allocation7 + $0x748] sm:$0xff]
    %v469 = vld [vmem:[#allocation7 + $0x750] sm:$0xff]
    %v470 = vld [vmem:[#allocation7 + $0x758] sm:$0xff]
    %v471 = vld [vmem:[#allocation7 + $0x760] sm:$0xff]
    %v472 = vld [vmem:[#allocation7 + $0x768] sm:$0xff]
    %v473 = vld [vmem:[#allocation7 + $0x770] sm:$0xff]
    %v474 = vld [vmem:[#allocation7 + $0x778] sm:$0xff]
    %v475 = vld [vmem:[#allocation7 + $0x780] sm:$0xff]
    %v476 = vld [vmem:[#allocation7 + $0x788] sm:$0xff]
    %v477 = vld [vmem:[#allocation7 + $0x790] sm:$0xff]
    %v478 = vld [vmem:[#allocation7 + $0x798] sm:$0xff]
    %v479 = vld [vmem:[#allocation7 + $0x7a0] sm:$0xff]
    %v480 = vld [vmem:[#allocation7 + $0x7a8] sm:$0xff]
    %v481 = vld [vmem:[#allocation7 + $0x7b0] sm:$0xff]
    %v482 = vld [vmem:[#allocation7 + $0x7b8] sm:$0xff]
    %v483 = vld [vmem:[#allocation7 + $0x7c0] sm:$0xff]
    %v484 = vld [vmem:[#allocation7 + $0x7c8] sm:$0xff]
    %v485 = vld [vmem:[#allocation7 + $0x7d0] sm:$0xff]
    %v486 = vld [vmem:[#allocation7 + $0x7d8] sm:$0xff]
    %v487 = vld [vmem:[#allocation7 + $0x7e0] sm:$0xff]
    %v488 = vld [vmem:[#allocation7 + $0x7e8] sm:$0xff]
    %v489 = vld [vmem:[#allocation7 + $0x7f0] sm:$0xff]
    %v490 = vld [vmem:[#allocation7 + $0x7f8] sm:$0xff]
    %v491 = vld [vmem:[%s3] sm:$0xf]
    %v493 = vlaneseq
    %v494 = vshrl.u32 %v493, 7
    %v495 = vsub.s32 0, %v494
    %v496 = vrot.slane %v491, %v495
    %v497 = vlaneseq
    %v498 = vshrl.u32 %v497, 7
    %v499 = vsub.s32 1, %v498
    %v500 = vrot.slane %v491, %v499
    %v501 = vlaneseq
    %v502 = vshrl.u32 %v501, 7
    %v503 = vsub.s32 2, %v502
    %v504 = vrot.slane %v491, %v503
    %v505 = vlaneseq
    %v506 = vshrl.u32 %v505, 7
    %v507 = vsub.s32 3, %v506
    %v508 = vrot.slane %v491, %v507
    %v769 = vunpack.c.l.b16 %v235
    %v770 = vunpack.c.h.b16 %v235
    %v771 = vunpack.c.l.b16 %v236
    %v772 = vunpack.c.h.b16 %v236
    %v773 = vunpack.c.l.b16 %v237
    %v774 = vunpack.c.h.b16 %v237
    %v775 = vunpack.c.l.b16 %v238
    %v776 = vunpack.c.h.b16 %v238
    %v777 = vunpack.c.l.b16 %v239
    %v778 = vunpack.c.h.b16 %v239
    %v779 = vunpack.c.l.b16 %v240
    %v780 = vunpack.c.h.b16 %v240
    %v781 = vunpack.c.l.b16 %v241
    %v782 = vunpack.c.h.b16 %v241
    %v783 = vunpack.c.l.b16 %v242
    %v784 = vunpack.c.h.b16 %v242
    %v785 = vunpack.c.l.b16 %v243
    %v786 = vunpack.c.h.b16 %v243
    %v787 = vunpack.c.l.b16 %v244
    %v788 = vunpack.c.h.b16 %v244
    %v789 = vunpack.c.l.b16 %v245
    %v790 = vunpack.c.h.b16 %v245
    %v791 = vunpack.c.l.b16 %v246
    %v792 = vunpack.c.h.b16 %v246
    %v793 = vunpack.c.l.b16 %v247
    %v794 = vunpack.c.h.b16 %v247
    %v795 = vunpack.c.l.b16 %v248
    %v796 = vunpack.c.h.b16 %v248
    %v797 = vunpack.c.l.b16 %v249
    %v798 = vunpack.c.h.b16 %v249
    %v799 = vunpack.c.l.b16 %v250
    %v800 = vunpack.c.h.b16 %v250
    %v801 = vunpack.c.l.b16 %v251
    %v802 = vunpack.c.h.b16 %v251
    %v803 = vunpack.c.l.b16 %v252
    %v804 = vunpack.c.h.b16 %v252
    %v805 = vunpack.c.l.b16 %v253
    %v806 = vunpack.c.h.b16 %v253
    %v807 = vunpack.c.l.b16 %v254
    %v808 = vunpack.c.h.b16 %v254
    %v809 = vunpack.c.l.b16 %v255
    %v810 = vunpack.c.h.b16 %v255
    %v811 = vunpack.c.l.b16 %v256
    %v812 = vunpack.c.h.b16 %v256
    %v813 = vunpack.c.l.b16 %v257
    %v814 = vunpack.c.h.b16 %v257
    %v815 = vunpack.c.l.b16 %v258
    %v816 = vunpack.c.h.b16 %v258
    %v817 = vunpack.c.l.b16 %v259
    %v818 = vunpack.c.h.b16 %v259
    %v819 = vunpack.c.l.b16 %v260
    %v820 = vunpack.c.h.b16 %v260
    %v821 = vunpack.c.l.b16 %v261
    %v822 = vunpack.c.h.b16 %v261
    %v823 = vunpack.c.l.b16 %v262
    %v824 = vunpack.c.h.b16 %v262
    %v825 = vunpack.c.l.b16 %v263
    %v826 = vunpack.c.h.b16 %v263
    %v827 = vunpack.c.l.b16 %v264
    %v828 = vunpack.c.h.b16 %v264
    %v829 = vunpack.c.l.b16 %v265
    %v830 = vunpack.c.h.b16 %v265
    %v831 = vunpack.c.l.b16 %v266
    %v832 = vunpack.c.h.b16 %v266
    %v833 = vunpack.c.l.b16 %v267
    %v834 = vunpack.c.h.b16 %v267
    %v835 = vunpack.c.l.b16 %v268
    %v836 = vunpack.c.h.b16 %v268
    %v837 = vunpack.c.l.b16 %v269
    %v838 = vunpack.c.h.b16 %v269
    %v839 = vunpack.c.l.b16 %v270
    %v840 = vunpack.c.h.b16 %v270
    %v841 = vunpack.c.l.b16 %v271
    %v842 = vunpack.c.h.b16 %v271
    %v843 = vunpack.c.l.b16 %v272
    %v844 = vunpack.c.h.b16 %v272
    %v845 = vunpack.c.l.b16 %v273
    %v846 = vunpack.c.h.b16 %v273
    %v847 = vunpack.c.l.b16 %v274
    %v848 = vunpack.c.h.b16 %v274
    %v849 = vunpack.c.l.b16 %v275
    %v850 = vunpack.c.h.b16 %v275
    %v851 = vunpack.c.l.b16 %v276
    %v852 = vunpack.c.h.b16 %v276
    %v853 = vunpack.c.l.b16 %v277
    %v854 = vunpack.c.h.b16 %v277
    %v855 = vunpack.c.l.b16 %v278
    %v856 = vunpack.c.h.b16 %v278
    %v857 = vunpack.c.l.b16 %v279
    %v858 = vunpack.c.h.b16 %v279
    %v859 = vunpack.c.l.b16 %v280
    %v860 = vunpack.c.h.b16 %v280
    %v861 = vunpack.c.l.b16 %v281
    %v862 = vunpack.c.h.b16 %v281
    %v863 = vunpack.c.l.b16 %v282
    %v864 = vunpack.c.h.b16 %v282
    %v865 = vunpack.c.l.b16 %v283
    %v866 = vunpack.c.h.b16 %v283
    %v867 = vunpack.c.l.b16 %v284
    %v868 = vunpack.c.h.b16 %v284
    %v869 = vunpack.c.l.b16 %v285
    %v870 = vunpack.c.h.b16 %v285
    %v871 = vunpack.c.l.b16 %v286
    %v872 = vunpack.c.h.b16 %v286
    %v873 = vunpack.c.l.b16 %v287
    %v874 = vunpack.c.h.b16 %v287
    %v875 = vunpack.c.l.b16 %v288
    %v876 = vunpack.c.h.b16 %v288
    %v877 = vunpack.c.l.b16 %v289
    %v878 = vunpack.c.h.b16 %v289
    %v879 = vunpack.c.l.b16 %v290
    %v880 = vunpack.c.h.b16 %v290
    %v881 = vunpack.c.l.b16 %v291
    %v882 = vunpack.c.h.b16 %v291
    %v883 = vunpack.c.l.b16 %v292
    %v884 = vunpack.c.h.b16 %v292
    %v885 = vunpack.c.l.b16 %v293
    %v886 = vunpack.c.h.b16 %v293
    %v887 = vunpack.c.l.b16 %v294
    %v888 = vunpack.c.h.b16 %v294
    %v889 = vunpack.c.l.b16 %v295
    %v890 = vunpack.c.h.b16 %v295
    %v891 = vunpack.c.l.b16 %v296
    %v892 = vunpack.c.h.b16 %v296
    %v893 = vunpack.c.l.b16 %v297
    %v894 = vunpack.c.h.b16 %v297
    %v895 = vunpack.c.l.b16 %v298
    %v896 = vunpack.c.h.b16 %v298
    %v897 = vunpack.c.l.b16 %v299
    %v898 = vunpack.c.h.b16 %v299
    %v899 = vunpack.c.l.b16 %v300
    %v900 = vunpack.c.h.b16 %v300
    %v901 = vunpack.c.l.b16 %v301
    %v902 = vunpack.c.h.b16 %v301
    %v903 = vunpack.c.l.b16 %v302
    %v904 = vunpack.c.h.b16 %v302
    %v905 = vunpack.c.l.b16 %v303
    %v906 = vunpack.c.h.b16 %v303
    %v907 = vunpack.c.l.b16 %v304
    %v908 = vunpack.c.h.b16 %v304
    %v909 = vunpack.c.l.b16 %v305
    %v910 = vunpack.c.h.b16 %v305
    %v911 = vunpack.c.l.b16 %v306
    %v912 = vunpack.c.h.b16 %v306
    %v913 = vunpack.c.l.b16 %v307
    %v914 = vunpack.c.h.b16 %v307
    %v915 = vunpack.c.l.b16 %v308
    %v916 = vunpack.c.h.b16 %v308
    %v917 = vunpack.c.l.b16 %v309
    %v918 = vunpack.c.h.b16 %v309
    %v919 = vunpack.c.l.b16 %v310
    %v920 = vunpack.c.h.b16 %v310
    %v921 = vunpack.c.l.b16 %v311
    %v922 = vunpack.c.h.b16 %v311
    %v923 = vunpack.c.l.b16 %v312
    %v924 = vunpack.c.h.b16 %v312
    %v925 = vunpack.c.l.b16 %v313
    %v926 = vunpack.c.h.b16 %v313
    %v927 = vunpack.c.l.b16 %v314
    %v928 = vunpack.c.h.b16 %v314
    %v929 = vunpack.c.l.b16 %v315
    %v930 = vunpack.c.h.b16 %v315
    %v931 = vunpack.c.l.b16 %v316
    %v932 = vunpack.c.h.b16 %v316
    %v933 = vunpack.c.l.b16 %v317
    %v934 = vunpack.c.h.b16 %v317
    %v935 = vunpack.c.l.b16 %v318
    %v936 = vunpack.c.h.b16 %v318
    %v937 = vunpack.c.l.b16 %v319
    %v938 = vunpack.c.h.b16 %v319
    %v939 = vunpack.c.l.b16 %v320
    %v940 = vunpack.c.h.b16 %v320
    %v941 = vunpack.c.l.b16 %v321
    %v942 = vunpack.c.h.b16 %v321
    %v943 = vunpack.c.l.b16 %v322
    %v944 = vunpack.c.h.b16 %v322
    %v945 = vunpack.c.l.b16 %v323
    %v946 = vunpack.c.h.b16 %v323
    %v947 = vunpack.c.l.b16 %v324
    %v948 = vunpack.c.h.b16 %v324
    %v949 = vunpack.c.l.b16 %v325
    %v950 = vunpack.c.h.b16 %v325
    %v951 = vunpack.c.l.b16 %v326
    %v952 = vunpack.c.h.b16 %v326
    %v953 = vunpack.c.l.b16 %v327
    %v954 = vunpack.c.h.b16 %v327
    %v955 = vunpack.c.l.b16 %v328
    %v956 = vunpack.c.h.b16 %v328
    %v957 = vunpack.c.l.b16 %v329
    %v958 = vunpack.c.h.b16 %v329
    %v959 = vunpack.c.l.b16 %v330
    %v960 = vunpack.c.h.b16 %v330
    %v961 = vunpack.c.l.b16 %v331
    %v962 = vunpack.c.h.b16 %v331
    %v963 = vunpack.c.l.b16 %v332
    %v964 = vunpack.c.h.b16 %v332
    %v965 = vunpack.c.l.b16 %v333
    %v966 = vunpack.c.h.b16 %v333
    %v967 = vunpack.c.l.b16 %v334
    %v968 = vunpack.c.h.b16 %v334
    %v969 = vunpack.c.l.b16 %v335
    %v970 = vunpack.c.h.b16 %v335
    %v971 = vunpack.c.l.b16 %v336
    %v972 = vunpack.c.h.b16 %v336
    %v973 = vunpack.c.l.b16 %v337
    %v974 = vunpack.c.h.b16 %v337
    %v975 = vunpack.c.l.b16 %v338
    %v976 = vunpack.c.h.b16 %v338
    %v977 = vunpack.c.l.b16 %v339
    %v978 = vunpack.c.h.b16 %v339
    %v979 = vunpack.c.l.b16 %v340
    %v980 = vunpack.c.h.b16 %v340
    %v981 = vunpack.c.l.b16 %v341
    %v982 = vunpack.c.h.b16 %v341
    %v983 = vunpack.c.l.b16 %v342
    %v984 = vunpack.c.h.b16 %v342
    %v985 = vunpack.c.l.b16 %v343
    %v986 = vunpack.c.h.b16 %v343
    %v987 = vunpack.c.l.b16 %v344
    %v988 = vunpack.c.h.b16 %v344
    %v989 = vunpack.c.l.b16 %v345
    %v990 = vunpack.c.h.b16 %v345
    %v991 = vunpack.c.l.b16 %v346
    %v992 = vunpack.c.h.b16 %v346
    %v993 = vunpack.c.l.b16 %v347
    %v994 = vunpack.c.h.b16 %v347
    %v995 = vunpack.c.l.b16 %v348
    %v996 = vunpack.c.h.b16 %v348
    %v997 = vunpack.c.l.b16 %v349
    %v998 = vunpack.c.h.b16 %v349
    %v999 = vunpack.c.l.b16 %v350
    %v1000 = vunpack.c.h.b16 %v350
    %v1001 = vunpack.c.l.b16 %v351
    %v1002 = vunpack.c.h.b16 %v351
    %v1003 = vunpack.c.l.b16 %v352
    %v1004 = vunpack.c.h.b16 %v352
    %v1005 = vunpack.c.l.b16 %v353
    %v1006 = vunpack.c.h.b16 %v353
    %v1007 = vunpack.c.l.b16 %v354
    %v1008 = vunpack.c.h.b16 %v354
    %v1009 = vunpack.c.l.b16 %v355
    %v1010 = vunpack.c.h.b16 %v355
    %v1011 = vunpack.c.l.b16 %v356
    %v1012 = vunpack.c.h.b16 %v356
    %v1013 = vunpack.c.l.b16 %v357
    %v1014 = vunpack.c.h.b16 %v357
    %v1015 = vunpack.c.l.b16 %v358
    %v1016 = vunpack.c.h.b16 %v358
    %v1017 = vunpack.c.l.b16 %v359
    %v1018 = vunpack.c.h.b16 %v359
    %v1019 = vunpack.c.l.b16 %v360
    %v1020 = vunpack.c.h.b16 %v360
    %v1021 = vunpack.c.l.b16 %v361
    %v1022 = vunpack.c.h.b16 %v361
    %v1023 = vunpack.c.l.b16 %v362
    %v1024 = vunpack.c.h.b16 %v362
    %v1025 = vunpack.c.l.b16 %v363
    %v1026 = vunpack.c.h.b16 %v363
    %v1027 = vunpack.c.l.b16 %v364
    %v1028 = vunpack.c.h.b16 %v364
    %v1029 = vunpack.c.l.b16 %v365
    %v1030 = vunpack.c.h.b16 %v365
    %v1031 = vunpack.c.l.b16 %v366
    %v1032 = vunpack.c.h.b16 %v366
    %v1033 = vunpack.c.l.b16 %v367
    %v1034 = vunpack.c.h.b16 %v367
    %v1035 = vunpack.c.l.b16 %v368
    %v1036 = vunpack.c.h.b16 %v368
    %v1037 = vunpack.c.l.b16 %v369
    %v1038 = vunpack.c.h.b16 %v369
    %v1039 = vunpack.c.l.b16 %v370
    %v1040 = vunpack.c.h.b16 %v370
    %v1041 = vunpack.c.l.b16 %v371
    %v1042 = vunpack.c.h.b16 %v371
    %v1043 = vunpack.c.l.b16 %v372
    %v1044 = vunpack.c.h.b16 %v372
    %v1045 = vunpack.c.l.b16 %v373
    %v1046 = vunpack.c.h.b16 %v373
    %v1047 = vunpack.c.l.b16 %v374
    %v1048 = vunpack.c.h.b16 %v374
    %v1049 = vunpack.c.l.b16 %v375
    %v1050 = vunpack.c.h.b16 %v375
    %v1051 = vunpack.c.l.b16 %v376
    %v1052 = vunpack.c.h.b16 %v376
    %v1053 = vunpack.c.l.b16 %v377
    %v1054 = vunpack.c.h.b16 %v377
    %v1055 = vunpack.c.l.b16 %v378
    %v1056 = vunpack.c.h.b16 %v378
    %v1057 = vunpack.c.l.b16 %v379
    %v1058 = vunpack.c.h.b16 %v379
    %v1059 = vunpack.c.l.b16 %v380
    %v1060 = vunpack.c.h.b16 %v380
    %v1061 = vunpack.c.l.b16 %v381
    %v1062 = vunpack.c.h.b16 %v381
    %v1063 = vunpack.c.l.b16 %v382
    %v1064 = vunpack.c.h.b16 %v382
    %v1065 = vunpack.c.l.b16 %v383
    %v1066 = vunpack.c.h.b16 %v383
    %v1067 = vunpack.c.l.b16 %v384
    %v1068 = vunpack.c.h.b16 %v384
    %v1069 = vunpack.c.l.b16 %v385
    %v1070 = vunpack.c.h.b16 %v385
    %v1071 = vunpack.c.l.b16 %v386
    %v1072 = vunpack.c.h.b16 %v386
    %v1073 = vunpack.c.l.b16 %v387
    %v1074 = vunpack.c.h.b16 %v387
    %v1075 = vunpack.c.l.b16 %v388
    %v1076 = vunpack.c.h.b16 %v388
    %v1077 = vunpack.c.l.b16 %v389
    %v1078 = vunpack.c.h.b16 %v389
    %v1079 = vunpack.c.l.b16 %v390
    %v1080 = vunpack.c.h.b16 %v390
    %v1081 = vunpack.c.l.b16 %v391
    %v1082 = vunpack.c.h.b16 %v391
    %v1083 = vunpack.c.l.b16 %v392
    %v1084 = vunpack.c.h.b16 %v392
    %v1085 = vunpack.c.l.b16 %v393
    %v1086 = vunpack.c.h.b16 %v393
    %v1087 = vunpack.c.l.b16 %v394
    %v1088 = vunpack.c.h.b16 %v394
    %v1089 = vunpack.c.l.b16 %v395
    %v1090 = vunpack.c.h.b16 %v395
    %v1091 = vunpack.c.l.b16 %v396
    %v1092 = vunpack.c.h.b16 %v396
    %v1093 = vunpack.c.l.b16 %v397
    %v1094 = vunpack.c.h.b16 %v397
    %v1095 = vunpack.c.l.b16 %v398
    %v1096 = vunpack.c.h.b16 %v398
    %v1097 = vunpack.c.l.b16 %v399
    %v1098 = vunpack.c.h.b16 %v399
    %v1099 = vunpack.c.l.b16 %v400
    %v1100 = vunpack.c.h.b16 %v400
    %v1101 = vunpack.c.l.b16 %v401
    %v1102 = vunpack.c.h.b16 %v401
    %v1103 = vunpack.c.l.b16 %v402
    %v1104 = vunpack.c.h.b16 %v402
    %v1105 = vunpack.c.l.b16 %v403
    %v1106 = vunpack.c.h.b16 %v403
    %v1107 = vunpack.c.l.b16 %v404
    %v1108 = vunpack.c.h.b16 %v404
    %v1109 = vunpack.c.l.b16 %v405
    %v1110 = vunpack.c.h.b16 %v405
    %v1111 = vunpack.c.l.b16 %v406
    %v1112 = vunpack.c.h.b16 %v406
    %v1113 = vunpack.c.l.b16 %v407
    %v1114 = vunpack.c.h.b16 %v407
    %v1115 = vunpack.c.l.b16 %v408
    %v1116 = vunpack.c.h.b16 %v408
    %v1117 = vunpack.c.l.b16 %v409
    %v1118 = vunpack.c.h.b16 %v409
    %v1119 = vunpack.c.l.b16 %v410
    %v1120 = vunpack.c.h.b16 %v410
    %v1121 = vunpack.c.l.b16 %v411
    %v1122 = vunpack.c.h.b16 %v411
    %v1123 = vunpack.c.l.b16 %v412
    %v1124 = vunpack.c.h.b16 %v412
    %v1125 = vunpack.c.l.b16 %v413
    %v1126 = vunpack.c.h.b16 %v413
    %v1127 = vunpack.c.l.b16 %v414
    %v1128 = vunpack.c.h.b16 %v414
    %v1129 = vunpack.c.l.b16 %v415
    %v1130 = vunpack.c.h.b16 %v415
    %v1131 = vunpack.c.l.b16 %v416
    %v1132 = vunpack.c.h.b16 %v416
    %v1133 = vunpack.c.l.b16 %v417
    %v1134 = vunpack.c.h.b16 %v417
    %v1135 = vunpack.c.l.b16 %v418
    %v1136 = vunpack.c.h.b16 %v418
    %v1137 = vunpack.c.l.b16 %v419
    %v1138 = vunpack.c.h.b16 %v419
    %v1139 = vunpack.c.l.b16 %v420
    %v1140 = vunpack.c.h.b16 %v420
    %v1141 = vunpack.c.l.b16 %v421
    %v1142 = vunpack.c.h.b16 %v421
    %v1143 = vunpack.c.l.b16 %v422
    %v1144 = vunpack.c.h.b16 %v422
    %v1145 = vunpack.c.l.b16 %v423
    %v1146 = vunpack.c.h.b16 %v423
    %v1147 = vunpack.c.l.b16 %v424
    %v1148 = vunpack.c.h.b16 %v424
    %v1149 = vunpack.c.l.b16 %v425
    %v1150 = vunpack.c.h.b16 %v425
    %v1151 = vunpack.c.l.b16 %v426
    %v1152 = vunpack.c.h.b16 %v426
    %v1153 = vunpack.c.l.b16 %v427
    %v1154 = vunpack.c.h.b16 %v427
    %v1155 = vunpack.c.l.b16 %v428
    %v1156 = vunpack.c.h.b16 %v428
    %v1157 = vunpack.c.l.b16 %v429
    %v1158 = vunpack.c.h.b16 %v429
    %v1159 = vunpack.c.l.b16 %v430
    %v1160 = vunpack.c.h.b16 %v430
    %v1161 = vunpack.c.l.b16 %v431
    %v1162 = vunpack.c.h.b16 %v431
    %v1163 = vunpack.c.l.b16 %v432
    %v1164 = vunpack.c.h.b16 %v432
    %v1165 = vunpack.c.l.b16 %v433
    %v1166 = vunpack.c.h.b16 %v433
    %v1167 = vunpack.c.l.b16 %v434
    %v1168 = vunpack.c.h.b16 %v434
    %v1169 = vunpack.c.l.b16 %v435
    %v1170 = vunpack.c.h.b16 %v435
    %v1171 = vunpack.c.l.b16 %v436
    %v1172 = vunpack.c.h.b16 %v436
    %v1173 = vunpack.c.l.b16 %v437
    %v1174 = vunpack.c.h.b16 %v437
    %v1175 = vunpack.c.l.b16 %v438
    %v1176 = vunpack.c.h.b16 %v438
    %v1177 = vunpack.c.l.b16 %v439
    %v1178 = vunpack.c.h.b16 %v439
    %v1179 = vunpack.c.l.b16 %v440
    %v1180 = vunpack.c.h.b16 %v440
    %v1181 = vunpack.c.l.b16 %v441
    %v1182 = vunpack.c.h.b16 %v441
    %v1183 = vunpack.c.l.b16 %v442
    %v1184 = vunpack.c.h.b16 %v442
    %v1185 = vunpack.c.l.b16 %v443
    %v1186 = vunpack.c.h.b16 %v443
    %v1187 = vunpack.c.l.b16 %v444
    %v1188 = vunpack.c.h.b16 %v444
    %v1189 = vunpack.c.l.b16 %v445
    %v1190 = vunpack.c.h.b16 %v445
    %v1191 = vunpack.c.l.b16 %v446
    %v1192 = vunpack.c.h.b16 %v446
    %v1193 = vunpack.c.l.b16 %v447
    %v1194 = vunpack.c.h.b16 %v447
    %v1195 = vunpack.c.l.b16 %v448
    %v1196 = vunpack.c.h.b16 %v448
    %v1197 = vunpack.c.l.b16 %v449
    %v1198 = vunpack.c.h.b16 %v449
    %v1199 = vunpack.c.l.b16 %v450
    %v1200 = vunpack.c.h.b16 %v450
    %v1201 = vunpack.c.l.b16 %v451
    %v1202 = vunpack.c.h.b16 %v451
    %v1203 = vunpack.c.l.b16 %v452
    %v1204 = vunpack.c.h.b16 %v452
    %v1205 = vunpack.c.l.b16 %v453
    %v1206 = vunpack.c.h.b16 %v453
    %v1207 = vunpack.c.l.b16 %v454
    %v1208 = vunpack.c.h.b16 %v454
    %v1209 = vunpack.c.l.b16 %v455
    %v1210 = vunpack.c.h.b16 %v455
    %v1211 = vunpack.c.l.b16 %v456
    %v1212 = vunpack.c.h.b16 %v456
    %v1213 = vunpack.c.l.b16 %v457
    %v1214 = vunpack.c.h.b16 %v457
    %v1215 = vunpack.c.l.b16 %v458
    %v1216 = vunpack.c.h.b16 %v458
    %v1217 = vunpack.c.l.b16 %v459
    %v1218 = vunpack.c.h.b16 %v459
    %v1219 = vunpack.c.l.b16 %v460
    %v1220 = vunpack.c.h.b16 %v460
    %v1221 = vunpack.c.l.b16 %v461
    %v1222 = vunpack.c.h.b16 %v461
    %v1223 = vunpack.c.l.b16 %v462
    %v1224 = vunpack.c.h.b16 %v462
    %v1225 = vunpack.c.l.b16 %v463
    %v1226 = vunpack.c.h.b16 %v463
    %v1227 = vunpack.c.l.b16 %v464
    %v1228 = vunpack.c.h.b16 %v464
    %v1229 = vunpack.c.l.b16 %v465
    %v1230 = vunpack.c.h.b16 %v465
    %v1231 = vunpack.c.l.b16 %v466
    %v1232 = vunpack.c.h.b16 %v466
    %v1233 = vunpack.c.l.b16 %v467
    %v1234 = vunpack.c.h.b16 %v467
    %v1235 = vunpack.c.l.b16 %v468
    %v1236 = vunpack.c.h.b16 %v468
    %v1237 = vunpack.c.l.b16 %v469
    %v1238 = vunpack.c.h.b16 %v469
    %v1239 = vunpack.c.l.b16 %v470
    %v1240 = vunpack.c.h.b16 %v470
    %v1241 = vunpack.c.l.b16 %v471
    %v1242 = vunpack.c.h.b16 %v471
    %v1243 = vunpack.c.l.b16 %v472
    %v1244 = vunpack.c.h.b16 %v472
    %v1245 = vunpack.c.l.b16 %v473
    %v1246 = vunpack.c.h.b16 %v473
    %v1247 = vunpack.c.l.b16 %v474
    %v1248 = vunpack.c.h.b16 %v474
    %v1249 = vunpack.c.l.b16 %v475
    %v1250 = vunpack.c.h.b16 %v475
    %v1251 = vunpack.c.l.b16 %v476
    %v1252 = vunpack.c.h.b16 %v476
    %v1253 = vunpack.c.l.b16 %v477
    %v1254 = vunpack.c.h.b16 %v477
    %v1255 = vunpack.c.l.b16 %v478
    %v1256 = vunpack.c.h.b16 %v478
    %v1257 = vunpack.c.l.b16 %v479
    %v1258 = vunpack.c.h.b16 %v479
    %v1259 = vunpack.c.l.b16 %v480
    %v1260 = vunpack.c.h.b16 %v480
    %v1261 = vunpack.c.l.b16 %v481
    %v1262 = vunpack.c.h.b16 %v481
    %v1263 = vunpack.c.l.b16 %v482
    %v1264 = vunpack.c.h.b16 %v482
    %v1265 = vunpack.c.l.b16 %v483
    %v1266 = vunpack.c.h.b16 %v483
    %v1267 = vunpack.c.l.b16 %v484
    %v1268 = vunpack.c.h.b16 %v484
    %v1269 = vunpack.c.l.b16 %v485
    %v1270 = vunpack.c.h.b16 %v485
    %v1271 = vunpack.c.l.b16 %v486
    %v1272 = vunpack.c.h.b16 %v486
    %v1273 = vunpack.c.l.b16 %v487
    %v1274 = vunpack.c.h.b16 %v487
    %v1275 = vunpack.c.l.b16 %v488
    %v1276 = vunpack.c.h.b16 %v488
    %v1277 = vunpack.c.l.b16 %v489
    %v1278 = vunpack.c.h.b16 %v489
    %v1279 = vunpack.c.l.b16 %v490
    %v1280 = vunpack.c.h.b16 %v490
    %v1281 = vpack.c.b16 %v773, %v769
    %v1282 = vpack.c.b16 %v774, %v770
    %v1283 = vpack.c.b16 %v775, %v771
    %v1284 = vpack.c.b16 %v776, %v772
    %v1285 = vpack.c.b16 %v781, %v777
    %v1286 = vpack.c.b16 %v782, %v778
    %v1287 = vpack.c.b16 %v783, %v779
    %v1288 = vpack.c.b16 %v784, %v780
    %v1289 = vpack.c.b16 %v789, %v785
    %v1290 = vpack.c.b16 %v790, %v786
    %v1291 = vpack.c.b16 %v791, %v787
    %v1292 = vpack.c.b16 %v792, %v788
    %v1293 = vpack.c.b16 %v797, %v793
    %v1294 = vpack.c.b16 %v798, %v794
    %v1295 = vpack.c.b16 %v799, %v795
    %v1296 = vpack.c.b16 %v800, %v796
    %v1297 = vpack.c.b16 %v805, %v801
    %v1298 = vpack.c.b16 %v806, %v802
    %v1299 = vpack.c.b16 %v807, %v803
    %v1300 = vpack.c.b16 %v808, %v804
    %v1301 = vpack.c.b16 %v813, %v809
    %v1302 = vpack.c.b16 %v814, %v810
    %v1303 = vpack.c.b16 %v815, %v811
    %v1304 = vpack.c.b16 %v816, %v812
    %v1305 = vpack.c.b16 %v821, %v817
    %v1306 = vpack.c.b16 %v822, %v818
    %v1307 = vpack.c.b16 %v823, %v819
    %v1308 = vpack.c.b16 %v824, %v820
    %v1309 = vpack.c.b16 %v829, %v825
    %v1310 = vpack.c.b16 %v830, %v826
    %v1311 = vpack.c.b16 %v831, %v827
    %v1312 = vpack.c.b16 %v832, %v828
    %v1313 = vpack.c.b16 %v837, %v833
    %v1314 = vpack.c.b16 %v838, %v834
    %v1315 = vpack.c.b16 %v839, %v835
    %v1316 = vpack.c.b16 %v840, %v836
    %v1317 = vpack.c.b16 %v845, %v841
    %v1318 = vpack.c.b16 %v846, %v842
    %v1319 = vpack.c.b16 %v847, %v843
    %v1320 = vpack.c.b16 %v848, %v844
    %v1321 = vpack.c.b16 %v853, %v849
    %v1322 = vpack.c.b16 %v854, %v850
    %v1323 = vpack.c.b16 %v855, %v851
    %v1324 = vpack.c.b16 %v856, %v852
    %v1325 = vpack.c.b16 %v861, %v857
    %v1326 = vpack.c.b16 %v862, %v858
    %v1327 = vpack.c.b16 %v863, %v859
    %v1328 = vpack.c.b16 %v864, %v860
    %v1329 = vpack.c.b16 %v869, %v865
    %v1330 = vpack.c.b16 %v870, %v866
    %v1331 = vpack.c.b16 %v871, %v867
    %v1332 = vpack.c.b16 %v872, %v868
    %v1333 = vpack.c.b16 %v877, %v873
    %v1334 = vpack.c.b16 %v878, %v874
    %v1335 = vpack.c.b16 %v879, %v875
    %v1336 = vpack.c.b16 %v880, %v876
    %v1337 = vpack.c.b16 %v885, %v881
    %v1338 = vpack.c.b16 %v886, %v882
    %v1339 = vpack.c.b16 %v887, %v883
    %v1340 = vpack.c.b16 %v888, %v884
    %v1341 = vpack.c.b16 %v893, %v889
    %v1342 = vpack.c.b16 %v894, %v890
    %v1343 = vpack.c.b16 %v895, %v891
    %v1344 = vpack.c.b16 %v896, %v892
    %v1345 = vpack.c.b16 %v901, %v897
    %v1346 = vpack.c.b16 %v902, %v898
    %v1347 = vpack.c.b16 %v903, %v899
    %v1348 = vpack.c.b16 %v904, %v900
    %v1349 = vpack.c.b16 %v909, %v905
    %v1350 = vpack.c.b16 %v910, %v906
    %v1351 = vpack.c.b16 %v911, %v907
    %v1352 = vpack.c.b16 %v912, %v908
    %v1353 = vpack.c.b16 %v917, %v913
    %v1354 = vpack.c.b16 %v918, %v914
    %v1355 = vpack.c.b16 %v919, %v915
    %v1356 = vpack.c.b16 %v920, %v916
    %v1357 = vpack.c.b16 %v925, %v921
    %v1358 = vpack.c.b16 %v926, %v922
    %v1359 = vpack.c.b16 %v927, %v923
    %v1360 = vpack.c.b16 %v928, %v924
    %v1361 = vpack.c.b16 %v933, %v929
    %v1362 = vpack.c.b16 %v934, %v930
    %v1363 = vpack.c.b16 %v935, %v931
    %v1364 = vpack.c.b16 %v936, %v932
    %v1365 = vpack.c.b16 %v941, %v937
    %v1366 = vpack.c.b16 %v942, %v938
    %v1367 = vpack.c.b16 %v943, %v939
    %v1368 = vpack.c.b16 %v944, %v940
    %v1369 = vpack.c.b16 %v949, %v945
    %v1370 = vpack.c.b16 %v950, %v946
    %v1371 = vpack.c.b16 %v951, %v947
    %v1372 = vpack.c.b16 %v952, %v948
    %v1373 = vpack.c.b16 %v957, %v953
    %v1374 = vpack.c.b16 %v958, %v954
    %v1375 = vpack.c.b16 %v959, %v955
    %v1376 = vpack.c.b16 %v960, %v956
    %v1377 = vpack.c.b16 %v965, %v961
    %v1378 = vpack.c.b16 %v966, %v962
    %v1379 = vpack.c.b16 %v967, %v963
    %v1380 = vpack.c.b16 %v968, %v964
    %v1381 = vpack.c.b16 %v973, %v969
    %v1382 = vpack.c.b16 %v974, %v970
    %v1383 = vpack.c.b16 %v975, %v971
    %v1384 = vpack.c.b16 %v976, %v972
    %v1385 = vpack.c.b16 %v981, %v977
    %v1386 = vpack.c.b16 %v982, %v978
    %v1387 = vpack.c.b16 %v983, %v979
    %v1388 = vpack.c.b16 %v984, %v980
    %v1389 = vpack.c.b16 %v989, %v985
    %v1390 = vpack.c.b16 %v990, %v986
    %v1391 = vpack.c.b16 %v991, %v987
    %v1392 = vpack.c.b16 %v992, %v988
    %v1393 = vpack.c.b16 %v997, %v993
    %v1394 = vpack.c.b16 %v998, %v994
    %v1395 = vpack.c.b16 %v999, %v995
    %v1396 = vpack.c.b16 %v1000, %v996
    %v1397 = vpack.c.b16 %v1005, %v1001
    %v1398 = vpack.c.b16 %v1006, %v1002
    %v1399 = vpack.c.b16 %v1007, %v1003
    %v1400 = vpack.c.b16 %v1008, %v1004
    %v1401 = vpack.c.b16 %v1013, %v1009
    %v1402 = vpack.c.b16 %v1014, %v1010
    %v1403 = vpack.c.b16 %v1015, %v1011
    %v1404 = vpack.c.b16 %v1016, %v1012
    %v1405 = vpack.c.b16 %v1021, %v1017
    %v1406 = vpack.c.b16 %v1022, %v1018
    %v1407 = vpack.c.b16 %v1023, %v1019
    %v1408 = vpack.c.b16 %v1024, %v1020
    %v1409 = vpack.c.b16 %v1029, %v1025
    %v1410 = vpack.c.b16 %v1030, %v1026
    %v1411 = vpack.c.b16 %v1031, %v1027
    %v1412 = vpack.c.b16 %v1032, %v1028
    %v1413 = vpack.c.b16 %v1037, %v1033
    %v1414 = vpack.c.b16 %v1038, %v1034
    %v1415 = vpack.c.b16 %v1039, %v1035
    %v1416 = vpack.c.b16 %v1040, %v1036
    %v1417 = vpack.c.b16 %v1045, %v1041
    %v1418 = vpack.c.b16 %v1046, %v1042
    %v1419 = vpack.c.b16 %v1047, %v1043
    %v1420 = vpack.c.b16 %v1048, %v1044
    %v1421 = vpack.c.b16 %v1053, %v1049
    %v1422 = vpack.c.b16 %v1054, %v1050
    %v1423 = vpack.c.b16 %v1055, %v1051
    %v1424 = vpack.c.b16 %v1056, %v1052
    %v1425 = vpack.c.b16 %v1061, %v1057
    %v1426 = vpack.c.b16 %v1062, %v1058
    %v1427 = vpack.c.b16 %v1063, %v1059
    %v1428 = vpack.c.b16 %v1064, %v1060
    %v1429 = vpack.c.b16 %v1069, %v1065
    %v1430 = vpack.c.b16 %v1070, %v1066
    %v1431 = vpack.c.b16 %v1071, %v1067
    %v1432 = vpack.c.b16 %v1072, %v1068
    %v1433 = vpack.c.b16 %v1077, %v1073
    %v1434 = vpack.c.b16 %v1078, %v1074
    %v1435 = vpack.c.b16 %v1079, %v1075
    %v1436 = vpack.c.b16 %v1080, %v1076
    %v1437 = vpack.c.b16 %v1085, %v1081
    %v1438 = vpack.c.b16 %v1086, %v1082
    %v1439 = vpack.c.b16 %v1087, %v1083
    %v1440 = vpack.c.b16 %v1088, %v1084
    %v1441 = vpack.c.b16 %v1093, %v1089
    %v1442 = vpack.c.b16 %v1094, %v1090
    %v1443 = vpack.c.b16 %v1095, %v1091
    %v1444 = vpack.c.b16 %v1096, %v1092
    %v1445 = vpack.c.b16 %v1101, %v1097
    %v1446 = vpack.c.b16 %v1102, %v1098
    %v1447 = vpack.c.b16 %v1103, %v1099
    %v1448 = vpack.c.b16 %v1104, %v1100
    %v1449 = vpack.c.b16 %v1109, %v1105
    %v1450 = vpack.c.b16 %v1110, %v1106
    %v1451 = vpack.c.b16 %v1111, %v1107
    %v1452 = vpack.c.b16 %v1112, %v1108
    %v1453 = vpack.c.b16 %v1117, %v1113
    %v1454 = vpack.c.b16 %v1118, %v1114
    %v1455 = vpack.c.b16 %v1119, %v1115
    %v1456 = vpack.c.b16 %v1120, %v1116
    %v1457 = vpack.c.b16 %v1125, %v1121
    %v1458 = vpack.c.b16 %v1126, %v1122
    %v1459 = vpack.c.b16 %v1127, %v1123
    %v1460 = vpack.c.b16 %v1128, %v1124
    %v1461 = vpack.c.b16 %v1133, %v1129
    %v1462 = vpack.c.b16 %v1134, %v1130
    %v1463 = vpack.c.b16 %v1135, %v1131
    %v1464 = vpack.c.b16 %v1136, %v1132
    %v1465 = vpack.c.b16 %v1141, %v1137
    %v1466 = vpack.c.b16 %v1142, %v1138
    %v1467 = vpack.c.b16 %v1143, %v1139
    %v1468 = vpack.c.b16 %v1144, %v1140
    %v1469 = vpack.c.b16 %v1149, %v1145
    %v1470 = vpack.c.b16 %v1150, %v1146
    %v1471 = vpack.c.b16 %v1151, %v1147
    %v1472 = vpack.c.b16 %v1152, %v1148
    %v1473 = vpack.c.b16 %v1157, %v1153
    %v1474 = vpack.c.b16 %v1158, %v1154
    %v1475 = vpack.c.b16 %v1159, %v1155
    %v1476 = vpack.c.b16 %v1160, %v1156
    %v1477 = vpack.c.b16 %v1165, %v1161
    %v1478 = vpack.c.b16 %v1166, %v1162
    %v1479 = vpack.c.b16 %v1167, %v1163
    %v1480 = vpack.c.b16 %v1168, %v1164
    %v1481 = vpack.c.b16 %v1173, %v1169
    %v1482 = vpack.c.b16 %v1174, %v1170
    %v1483 = vpack.c.b16 %v1175, %v1171
    %v1484 = vpack.c.b16 %v1176, %v1172
    %v1485 = vpack.c.b16 %v1181, %v1177
    %v1486 = vpack.c.b16 %v1182, %v1178
    %v1487 = vpack.c.b16 %v1183, %v1179
    %v1488 = vpack.c.b16 %v1184, %v1180
    %v1489 = vpack.c.b16 %v1189, %v1185
    %v1490 = vpack.c.b16 %v1190, %v1186
    %v1491 = vpack.c.b16 %v1191, %v1187
    %v1492 = vpack.c.b16 %v1192, %v1188
    %v1493 = vpack.c.b16 %v1197, %v1193
    %v1494 = vpack.c.b16 %v1198, %v1194
    %v1495 = vpack.c.b16 %v1199, %v1195
    %v1496 = vpack.c.b16 %v1200, %v1196
    %v1497 = vpack.c.b16 %v1205, %v1201
    %v1498 = vpack.c.b16 %v1206, %v1202
    %v1499 = vpack.c.b16 %v1207, %v1203
    %v1500 = vpack.c.b16 %v1208, %v1204
    %v1501 = vpack.c.b16 %v1213, %v1209
    %v1502 = vpack.c.b16 %v1214, %v1210
    %v1503 = vpack.c.b16 %v1215, %v1211
    %v1504 = vpack.c.b16 %v1216, %v1212
    %v1505 = vpack.c.b16 %v1221, %v1217
    %v1506 = vpack.c.b16 %v1222, %v1218
    %v1507 = vpack.c.b16 %v1223, %v1219
    %v1508 = vpack.c.b16 %v1224, %v1220
    %v1509 = vpack.c.b16 %v1229, %v1225
    %v1510 = vpack.c.b16 %v1230, %v1226
    %v1511 = vpack.c.b16 %v1231, %v1227
    %v1512 = vpack.c.b16 %v1232, %v1228
    %v1513 = vpack.c.b16 %v1237, %v1233
    %v1514 = vpack.c.b16 %v1238, %v1234
    %v1515 = vpack.c.b16 %v1239, %v1235
    %v1516 = vpack.c.b16 %v1240, %v1236
    %v1517 = vpack.c.b16 %v1245, %v1241
    %v1518 = vpack.c.b16 %v1246, %v1242
    %v1519 = vpack.c.b16 %v1247, %v1243
    %v1520 = vpack.c.b16 %v1248, %v1244
    %v1521 = vpack.c.b16 %v1253, %v1249
    %v1522 = vpack.c.b16 %v1254, %v1250
    %v1523 = vpack.c.b16 %v1255, %v1251
    %v1524 = vpack.c.b16 %v1256, %v1252
    %v1525 = vpack.c.b16 %v1261, %v1257
    %v1526 = vpack.c.b16 %v1262, %v1258
    %v1527 = vpack.c.b16 %v1263, %v1259
    %v1528 = vpack.c.b16 %v1264, %v1260
    %v1529 = vpack.c.b16 %v1269, %v1265
    %v1530 = vpack.c.b16 %v1270, %v1266
    %v1531 = vpack.c.b16 %v1271, %v1267
    %v1532 = vpack.c.b16 %v1272, %v1268
    %v1533 = vpack.c.b16 %v1277, %v1273
    %v1534 = vpack.c.b16 %v1278, %v1274
    %v1535 = vpack.c.b16 %v1279, %v1275
    %v1536 = vpack.c.b16 %v1280, %v1276
    %1793 = vmatprep.subr.bf16.mxu0 %v1310
    %1794 = vmatpush1.bf16.msra.mxu0 %v1309
    %1795 = vmatprep.subr.bf16.mxu0 %v1306
    %1796 = vmatpush1.bf16.msra.mxu0 %v1305
    %1797 = vmatprep.subr.bf16.mxu0 %v1302
    %1798 = vmatpush1.bf16.msra.mxu0 %v1301
    %1799 = vmatprep.subr.bf16.mxu0 %v1298
    %1800 = vmatpush1.bf16.msra.mxu0 %v1297
    %1801 = vmatprep.subr.bf16.mxu0 %v1294
    %1802 = vmatpush1.bf16.msra.mxu0 %v1293
    %1803 = vmatprep.subr.bf16.mxu0 %v1290
    %1804 = vmatpush1.bf16.msra.mxu0 %v1289
    %1805 = vmatprep.subr.bf16.mxu0 %v1286
    %1806 = vmatpush1.bf16.msra.mxu0 %v1285
    %1807 = vmatprep.subr.bf16.mxu0 %v1282
    %1808 = vmatpush1.bf16.msra.mxu0 %v1281
    %1809 = vmatprep.subr.bf16.mxu0 %v1342
    %1810 = vmatpush2.bf16.msra.mxu0 %v1341
    %1811 = vmatprep.subr.bf16.mxu0 %v1338
    %1812 = vmatpush2.bf16.msra.mxu0 %v1337
    %1813 = vmatprep.subr.bf16.mxu0 %v1334
    %1814 = vmatpush2.bf16.msra.mxu0 %v1333
    %1815 = vmatprep.subr.bf16.mxu0 %v1330
    %1816 = vmatpush2.bf16.msra.mxu0 %v1329
    %1817 = vmatprep.subr.bf16.mxu0 %v1326
    %1818 = vmatpush2.bf16.msra.mxu0 %v1325
    %1819 = vmatprep.subr.bf16.mxu0 %v1322
    %1820 = vmatpush2.bf16.msra.mxu0 %v1321
    %1821 = vmatprep.subr.bf16.mxu0 %v1318
    %1822 = vmatpush2.bf16.msra.mxu0 %v1317
    %1823 = vmatprep.subr.bf16.mxu0 %v1314
    %1824 = vmatpush2.bf16.msra.mxu0 %v1313
    %1825 = vmatprep.mubr.bf16.mxu0 %v204
    %1826 = vmatmul.mubr.bf16.gmra.mxu0 %v203
    %v1827 = vpop.f32.mrf.mxu0
    %v1828 = vadd.f32 %v496, %v1827
    %v1829 = vpop.f32.mrf.mxu0
    %v1830 = vadd.f32 %v500, %v1829
    %v1831 = vpop.f32.mrf.mxu0
    %v1832 = vadd.f32 %v496, %v1831
    %v1833 = vpop.f32.mrf.mxu0
    %v1834 = vadd.f32 %v500, %v1833
    %1835 = vmatprep.mubr.bf16.mxu0 %v212
    %1836 = vmatmul.mubr.bf16.gmra.mxu0 %v211
    %v1837 = vpop.f32.mrf.mxu0
    %v1838 = vadd.f32 %v496, %v1837
    %v1839 = vpop.f32.mrf.mxu0
    %v1840 = vadd.f32 %v500, %v1839
    %v1841 = vpop.f32.mrf.mxu0
    %v1842 = vadd.f32 %v496, %v1841
    %v1843 = vpop.f32.mrf.mxu0
    %v1844 = vadd.f32 %v500, %v1843
    %1845 = vmatprep.mubr.bf16.mxu0 %v220
    %1846 = vmatmul.mubr.bf16.gmra.mxu0 %v219
    %v1847 = vpop.f32.mrf.mxu0
    %v1848 = vadd.f32 %v496, %v1847
    %v1849 = vpop.f32.mrf.mxu0
    %v1850 = vadd.f32 %v500, %v1849
    %v1851 = vpop.f32.mrf.mxu0
    %v1852 = vadd.f32 %v496, %v1851
    %v1853 = vpop.f32.mrf.mxu0
    %v1854 = vadd.f32 %v500, %v1853
    %1855 = vmatprep.mubr.bf16.mxu0 %v228
    %1856 = vmatmul.mubr.bf16.gmra.mxu0 %v227
    %v1857 = vpop.f32.mrf.mxu0
    %v1858 = vadd.f32 %v496, %v1857
    %v1859 = vpop.f32.mrf.mxu0
    %v1860 = vadd.f32 %v500, %v1859
    %v1861 = vpop.f32.mrf.mxu0
    %v1862 = vadd.f32 %v496, %v1861
    %v1863 = vpop.f32.mrf.mxu0
    %v1864 = vadd.f32 %v500, %v1863
    %1865 = vdwg.mxu0
    %1866 = vmatprep.subr.bf16.mxu0 %v1374
    %1867 = vmatpush1.bf16.msra.mxu0 %v1373
    %1868 = vmatprep.subr.bf16.mxu0 %v1370
    %1869 = vmatpush1.bf16.msra.mxu0 %v1369
    %1870 = vmatprep.subr.bf16.mxu0 %v1366
    %1871 = vmatpush1.bf16.msra.mxu0 %v1365
    %1872 = vmatprep.subr.bf16.mxu0 %v1362
    %1873 = vmatpush1.bf16.msra.mxu0 %v1361
    %1874 = vmatprep.subr.bf16.mxu0 %v1358
    %1875 = vmatpush1.bf16.msra.mxu0 %v1357
    %1876 = vmatprep.subr.bf16.mxu0 %v1354
    %1877 = vmatpush1.bf16.msra.mxu0 %v1353
    %1878 = vmatprep.subr.bf16.mxu0 %v1350
    %1879 = vmatpush1.bf16.msra.mxu0 %v1349
    %1880 = vmatprep.subr.bf16.mxu0 %v1346
    %1881 = vmatpush1.bf16.msra.mxu0 %v1345
    %1882 = vmatprep.subr.bf16.mxu0 %v1406
    %1883 = vmatpush2.bf16.msra.mxu0 %v1405
    %1884 = vmatprep.subr.bf16.mxu0 %v1402
    %1885 = vmatpush2.bf16.msra.mxu0 %v1401
    %1886 = vmatprep.subr.bf16.mxu0 %v1398
    %1887 = vmatpush2.bf16.msra.mxu0 %v1397
    %1888 = vmatprep.subr.bf16.mxu0 %v1394
    %1889 = vmatpush2.bf16.msra.mxu0 %v1393
    %1890 = vmatprep.subr.bf16.mxu0 %v1390
    %1891 = vmatpush2.bf16.msra.mxu0 %v1389
    %1892 = vmatprep.subr.bf16.mxu0 %v1386
    %1893 = vmatpush2.bf16.msra.mxu0 %v1385
    %1894 = vmatprep.subr.bf16.mxu0 %v1382
    %1895 = vmatpush2.bf16.msra.mxu0 %v1381
    %1896 = vmatprep.subr.bf16.mxu0 %v1378
    %1897 = vmatpush2.bf16.msra.mxu0 %v1377
    %1898 = vmatprep.mubr.bf16.mxu0 %v206
    %1899 = vmatmul.mubr.bf16.gmra.mxu0 %v205
    %v1900 = vpop.f32.mrf.mxu0
    %v1901 = vadd.f32 %v1828, %v1900
    %v1902 = vpop.f32.mrf.mxu0
    %v1903 = vadd.f32 %v1830, %v1902
    %v1904 = vpop.f32.mrf.mxu0
    %v1905 = vadd.f32 %v1832, %v1904
    %v1906 = vpop.f32.mrf.mxu0
    %v1907 = vadd.f32 %v1834, %v1906
    %1908 = vmatprep.mubr.bf16.mxu0 %v214
    %1909 = vmatmul.mubr.bf16.gmra.mxu0 %v213
    %v1910 = vpop.f32.mrf.mxu0
    %v1911 = vadd.f32 %v1838, %v1910
    %v1912 = vpop.f32.mrf.mxu0
    %v1913 = vadd.f32 %v1840, %v1912
    %v1914 = vpop.f32.mrf.mxu0
    %v1915 = vadd.f32 %v1842, %v1914
    %v1916 = vpop.f32.mrf.mxu0
    %v1917 = vadd.f32 %v1844, %v1916
    %1918 = vmatprep.mubr.bf16.mxu0 %v222
    %1919 = vmatmul.mubr.bf16.gmra.mxu0 %v221
    %v1920 = vpop.f32.mrf.mxu0
    %v1921 = vadd.f32 %v1848, %v1920
    %v1922 = vpop.f32.mrf.mxu0
    %v1923 = vadd.f32 %v1850, %v1922
    %v1924 = vpop.f32.mrf.mxu0
    %v1925 = vadd.f32 %v1852, %v1924
    %v1926 = vpop.f32.mrf.mxu0
    %v1927 = vadd.f32 %v1854, %v1926
    %1928 = vmatprep.mubr.bf16.mxu0 %v230
    %1929 = vmatmul.mubr.bf16.gmra.mxu0 %v229
    %v1930 = vpop.f32.mrf.mxu0
    %v1931 = vadd.f32 %v1858, %v1930
    %v1932 = vpop.f32.mrf.mxu0
    %v1933 = vadd.f32 %v1860, %v1932
    %v1934 = vpop.f32.mrf.mxu0
    %v1935 = vadd.f32 %v1862, %v1934
    %v1936 = vpop.f32.mrf.mxu0
    %v1937 = vadd.f32 %v1864, %v1936
    %1938 = vdwg.mxu0
    %1939 = vmatprep.subr.bf16.mxu0 %v1438
    %1940 = vmatpush1.bf16.msra.mxu0 %v1437
    %1941 = vmatprep.subr.bf16.mxu0 %v1434
    %1942 = vmatpush1.bf16.msra.mxu0 %v1433
    %1943 = vmatprep.subr.bf16.mxu0 %v1430
    %1944 = vmatpush1.bf16.msra.mxu0 %v1429
    %1945 = vmatprep.subr.bf16.mxu0 %v1426
    %1946 = vmatpush1.bf16.msra.mxu0 %v1425
    %1947 = vmatprep.subr.bf16.mxu0 %v1422
    %1948 = vmatpush1.bf16.msra.mxu0 %v1421
    %1949 = vmatprep.subr.bf16.mxu0 %v1418
    %1950 = vmatpush1.bf16.msra.mxu0 %v1417
    %1951 = vmatprep.subr.bf16.mxu0 %v1414
    %1952 = vmatpush1.bf16.msra.mxu0 %v1413
    %1953 = vmatprep.subr.bf16.mxu0 %v1410
    %1954 = vmatpush1.bf16.msra.mxu0 %v1409
    %1955 = vmatprep.subr.bf16.mxu0 %v1470
    %1956 = vmatpush2.bf16.msra.mxu0 %v1469
    %1957 = vmatprep.subr.bf16.mxu0 %v1466
    %1958 = vmatpush2.bf16.msra.mxu0 %v1465
    %1959 = vmatprep.subr.bf16.mxu0 %v1462
    %1960 = vmatpush2.bf16.msra.mxu0 %v1461
    %1961 = vmatprep.subr.bf16.mxu0 %v1458
    %1962 = vmatpush2.bf16.msra.mxu0 %v1457
    %1963 = vmatprep.subr.bf16.mxu0 %v1454
    %1964 = vmatpush2.bf16.msra.mxu0 %v1453
    %1965 = vmatprep.subr.bf16.mxu0 %v1450
    %1966 = vmatpush2.bf16.msra.mxu0 %v1449
    %1967 = vmatprep.subr.bf16.mxu0 %v1446
    %1968 = vmatpush2.bf16.msra.mxu0 %v1445
    %1969 = vmatprep.subr.bf16.mxu0 %v1442
    %1970 = vmatpush2.bf16.msra.mxu0 %v1441
    %1971 = vmatprep.mubr.bf16.mxu0 %v208
    %1972 = vmatmul.mubr.bf16.gmra.mxu0 %v207
    %v1973 = vpop.f32.mrf.mxu0
    %v1974 = vadd.f32 %v1901, %v1973
    %v1975 = vpop.f32.mrf.mxu0
    %v1976 = vadd.f32 %v1903, %v1975
    %v1977 = vpop.f32.mrf.mxu0
    %v1978 = vadd.f32 %v1905, %v1977
    %v1979 = vpop.f32.mrf.mxu0
    %v1980 = vadd.f32 %v1907, %v1979
    %1981 = vmatprep.mubr.bf16.mxu0 %v216
    %1982 = vmatmul.mubr.bf16.gmra.mxu0 %v215
    %v1983 = vpop.f32.mrf.mxu0
    %v1984 = vadd.f32 %v1911, %v1983
    %v1985 = vpop.f32.mrf.mxu0
    %v1986 = vadd.f32 %v1913, %v1985
    %v1987 = vpop.f32.mrf.mxu0
    %v1988 = vadd.f32 %v1915, %v1987
    %v1989 = vpop.f32.mrf.mxu0
    %v1990 = vadd.f32 %v1917, %v1989
    %1991 = vmatprep.mubr.bf16.mxu0 %v224
    %1992 = vmatmul.mubr.bf16.gmra.mxu0 %v223
    %v1993 = vpop.f32.mrf.mxu0
    %v1994 = vadd.f32 %v1921, %v1993
    %v1995 = vpop.f32.mrf.mxu0
    %v1996 = vadd.f32 %v1923, %v1995
    %v1997 = vpop.f32.mrf.mxu0
    %v1998 = vadd.f32 %v1925, %v1997
    %v1999 = vpop.f32.mrf.mxu0
    %v2000 = vadd.f32 %v1927, %v1999
    %2001 = vmatprep.mubr.bf16.mxu0 %v232
    %2002 = vmatmul.mubr.bf16.gmra.mxu0 %v231
    %v2003 = vpop.f32.mrf.mxu0
    %v2004 = vadd.f32 %v1931, %v2003
    %v2005 = vpop.f32.mrf.mxu0
    %v2006 = vadd.f32 %v1933, %v2005
    %v2007 = vpop.f32.mrf.mxu0
    %v2008 = vadd.f32 %v1935, %v2007
    %v2009 = vpop.f32.mrf.mxu0
    %v2010 = vadd.f32 %v1937, %v2009
    %2011 = vdwg.mxu0
    %2012 = vmatprep.subr.bf16.mxu0 %v1502
    %2013 = vmatpush1.bf16.msra.mxu0 %v1501
    %2014 = vmatprep.subr.bf16.mxu0 %v1498
    %2015 = vmatpush1.bf16.msra.mxu0 %v1497
    %2016 = vmatprep.subr.bf16.mxu0 %v1494
    %2017 = vmatpush1.bf16.msra.mxu0 %v1493
    %2018 = vmatprep.subr.bf16.mxu0 %v1490
    %2019 = vmatpush1.bf16.msra.mxu0 %v1489
    %2020 = vmatprep.subr.bf16.mxu0 %v1486
    %2021 = vmatpush1.bf16.msra.mxu0 %v1485
    %2022 = vmatprep.subr.bf16.mxu0 %v1482
    %2023 = vmatpush1.bf16.msra.mxu0 %v1481
    %2024 = vmatprep.subr.bf16.mxu0 %v1478
    %2025 = vmatpush1.bf16.msra.mxu0 %v1477
    %2026 = vmatprep.subr.bf16.mxu0 %v1474
    %2027 = vmatpush1.bf16.msra.mxu0 %v1473
    %2028 = vmatprep.subr.bf16.mxu0 %v1534
    %2029 = vmatpush2.bf16.msra.mxu0 %v1533
    %2030 = vmatprep.subr.bf16.mxu0 %v1530
    %2031 = vmatpush2.bf16.msra.mxu0 %v1529
    %2032 = vmatprep.subr.bf16.mxu0 %v1526
    %2033 = vmatpush2.bf16.msra.mxu0 %v1525
    %2034 = vmatprep.subr.bf16.mxu0 %v1522
    %2035 = vmatpush2.bf16.msra.mxu0 %v1521
    %2036 = vmatprep.subr.bf16.mxu0 %v1518
    %2037 = vmatpush2.bf16.msra.mxu0 %v1517
    %2038 = vmatprep.subr.bf16.mxu0 %v1514
    %2039 = vmatpush2.bf16.msra.mxu0 %v1513
    %2040 = vmatprep.subr.bf16.mxu0 %v1510
    %2041 = vmatpush2.bf16.msra.mxu0 %v1509
    %2042 = vmatprep.subr.bf16.mxu0 %v1506
    %2043 = vmatpush2.bf16.msra.mxu0 %v1505
    %2044 = vmatprep.mubr.bf16.mxu0 %v210
    %2045 = vmatmul.mubr.bf16.gmra.mxu0 %v209
    %v2046 = vpop.f32.mrf.mxu0
    %v2047 = vadd.f32 %v1974, %v2046
    %v2048 = vpop.f32.mrf.mxu0
    %v2049 = vadd.f32 %v1976, %v2048
    %v2050 = vpop.f32.mrf.mxu0
    %v2051 = vadd.f32 %v1978, %v2050
    %v2052 = vpop.f32.mrf.mxu0
    %v2053 = vadd.f32 %v1980, %v2052
    %2054 = vmatprep.mubr.bf16.mxu0 %v218
    %2055 = vmatmul.mubr.bf16.gmra.mxu0 %v217
    %v2056 = vpop.f32.mrf.mxu0
    %v2057 = vadd.f32 %v1984, %v2056
    %v2058 = vpop.f32.mrf.mxu0
    %v2059 = vadd.f32 %v1986, %v2058
    %v2060 = vpop.f32.mrf.mxu0
    %v2061 = vadd.f32 %v1988, %v2060
    %v2062 = vpop.f32.mrf.mxu0
    %v2063 = vadd.f32 %v1990, %v2062
    %2064 = vmatprep.mubr.bf16.mxu0 %v226
    %2065 = vmatmul.mubr.bf16.gmra.mxu0 %v225
    %v2066 = vpop.f32.mrf.mxu0
    %v2067 = vadd.f32 %v1994, %v2066
    %v2068 = vpop.f32.mrf.mxu0
    %v2069 = vadd.f32 %v1996, %v2068
    %v2070 = vpop.f32.mrf.mxu0
    %v2071 = vadd.f32 %v1998, %v2070
    %v2072 = vpop.f32.mrf.mxu0
    %v2073 = vadd.f32 %v2000, %v2072
    %2074 = vmatprep.mubr.bf16.mxu0 %v234
    %2075 = vmatmul.mubr.bf16.gmra.mxu0 %v233
    %v2076 = vpop.f32.mrf.mxu0
    %v2077 = vadd.f32 %v2004, %v2076
    %v2078 = vpop.f32.mrf.mxu0
    %v2079 = vadd.f32 %v2006, %v2078
    %v2080 = vpop.f32.mrf.mxu0
    %v2081 = vadd.f32 %v2008, %v2080
    %v2082 = vpop.f32.mrf.mxu0
    %v2083 = vadd.f32 %v2010, %v2082
    %2084 = vdwg.mxu0
    %2085 = vmatprep.subr.bf16.mxu0 %v1312
    %2086 = vmatpush1.bf16.msra.mxu0 %v1311
    %2087 = vmatprep.subr.bf16.mxu0 %v1308
    %2088 = vmatpush1.bf16.msra.mxu0 %v1307
    %2089 = vmatprep.subr.bf16.mxu0 %v1304
    %2090 = vmatpush1.bf16.msra.mxu0 %v1303
    %2091 = vmatprep.subr.bf16.mxu0 %v1300
    %2092 = vmatpush1.bf16.msra.mxu0 %v1299
    %2093 = vmatprep.subr.bf16.mxu0 %v1296
    %2094 = vmatpush1.bf16.msra.mxu0 %v1295
    %2095 = vmatprep.subr.bf16.mxu0 %v1292
    %2096 = vmatpush1.bf16.msra.mxu0 %v1291
    %2097 = vmatprep.subr.bf16.mxu0 %v1288
    %2098 = vmatpush1.bf16.msra.mxu0 %v1287
    %2099 = vmatprep.subr.bf16.mxu0 %v1284
    %2100 = vmatpush1.bf16.msra.mxu0 %v1283
    %2101 = vmatprep.subr.bf16.mxu0 %v1344
    %2102 = vmatpush2.bf16.msra.mxu0 %v1343
    %2103 = vmatprep.subr.bf16.mxu0 %v1340
    %2104 = vmatpush2.bf16.msra.mxu0 %v1339
    %2105 = vmatprep.subr.bf16.mxu0 %v1336
    %2106 = vmatpush2.bf16.msra.mxu0 %v1335
    %2107 = vmatprep.subr.bf16.mxu0 %v1332
    %2108 = vmatpush2.bf16.msra.mxu0 %v1331
    %2109 = vmatprep.subr.bf16.mxu0 %v1328
    %2110 = vmatpush2.bf16.msra.mxu0 %v1327
    %2111 = vmatprep.subr.bf16.mxu0 %v1324
    %2112 = vmatpush2.bf16.msra.mxu0 %v1323
    %2113 = vmatprep.subr.bf16.mxu0 %v1320
    %2114 = vmatpush2.bf16.msra.mxu0 %v1319
    %2115 = vmatprep.subr.bf16.mxu0 %v1316
    %2116 = vmatpush2.bf16.msra.mxu0 %v1315
    %2117 = vmatprep.mubr.bf16.mxu0 %v204
    %2118 = vmatmul.mubr.bf16.gmra.mxu0 %v203
    %v2119 = vpop.f32.mrf.mxu0
    %v2120 = vadd.f32 %v504, %v2119
    %v2121 = vpop.f32.mrf.mxu0
    %v2122 = vadd.f32 %v508, %v2121
    %v2123 = vpop.f32.mrf.mxu0
    %v2124 = vadd.f32 %v504, %v2123
    %v2125 = vpop.f32.mrf.mxu0
    %v2126 = vadd.f32 %v508, %v2125
    %2127 = vmatprep.mubr.bf16.mxu0 %v212
    %2128 = vmatmul.mubr.bf16.gmra.mxu0 %v211
    %v2129 = vpop.f32.mrf.mxu0
    %v2130 = vadd.f32 %v504, %v2129
    %v2131 = vpop.f32.mrf.mxu0
    %v2132 = vadd.f32 %v508, %v2131
    %v2133 = vpop.f32.mrf.mxu0
    %v2134 = vadd.f32 %v504, %v2133
    %v2135 = vpop.f32.mrf.mxu0
    %v2136 = vadd.f32 %v508, %v2135
    %2137 = vmatprep.mubr.bf16.mxu0 %v220
    %2138 = vmatmul.mubr.bf16.gmra.mxu0 %v219
    %v2139 = vpop.f32.mrf.mxu0
    %v2140 = vadd.f32 %v504, %v2139
    %v2141 = vpop.f32.mrf.mxu0
    %v2142 = vadd.f32 %v508, %v2141
    %v2143 = vpop.f32.mrf.mxu0
    %v2144 = vadd.f32 %v504, %v2143
    %v2145 = vpop.f32.mrf.mxu0
    %v2146 = vadd.f32 %v508, %v2145
    %2147 = vmatprep.mubr.bf16.mxu0 %v228
    %2148 = vmatmul.mubr.bf16.gmra.mxu0 %v227
    %v2149 = vpop.f32.mrf.mxu0
    %v2150 = vadd.f32 %v504, %v2149
    %v2151 = vpop.f32.mrf.mxu0
    %v2152 = vadd.f32 %v508, %v2151
    %v2153 = vpop.f32.mrf.mxu0
    %v2154 = vadd.f32 %v504, %v2153
    %v2155 = vpop.f32.mrf.mxu0
    %v2156 = vadd.f32 %v508, %v2155
    %2157 = vdwg.mxu0
    %2158 = vmatprep.subr.bf16.mxu0 %v1376
    %2159 = vmatpush1.bf16.msra.mxu0 %v1375
    %2160 = vmatprep.subr.bf16.mxu0 %v1372
    %2161 = vmatpush1.bf16.msra.mxu0 %v1371
    %2162 = vmatprep.subr.bf16.mxu0 %v1368
    %2163 = vmatpush1.bf16.msra.mxu0 %v1367
    %2164 = vmatprep.subr.bf16.mxu0 %v1364
    %2165 = vmatpush1.bf16.msra.mxu0 %v1363
    %2166 = vmatprep.subr.bf16.mxu0 %v1360
    %2167 = vmatpush1.bf16.msra.mxu0 %v1359
    %2168 = vmatprep.subr.bf16.mxu0 %v1356
    %2169 = vmatpush1.bf16.msra.mxu0 %v1355
    %2170 = vmatprep.subr.bf16.mxu0 %v1352
    %2171 = vmatpush1.bf16.msra.mxu0 %v1351
    %2172 = vmatprep.subr.bf16.mxu0 %v1348
    %2173 = vmatpush1.bf16.msra.mxu0 %v1347
    %2174 = vmatprep.subr.bf16.mxu0 %v1408
    %2175 = vmatpush2.bf16.msra.mxu0 %v1407
    %2176 = vmatprep.subr.bf16.mxu0 %v1404
    %2177 = vmatpush2.bf16.msra.mxu0 %v1403
    %2178 = vmatprep.subr.bf16.mxu0 %v1400
    %2179 = vmatpush2.bf16.msra.mxu0 %v1399
    %2180 = vmatprep.subr.bf16.mxu0 %v1396
    %2181 = vmatpush2.bf16.msra.mxu0 %v1395
    %2182 = vmatprep.subr.bf16.mxu0 %v1392
    %2183 = vmatpush2.bf16.msra.mxu0 %v1391
    %2184 = vmatprep.subr.bf16.mxu0 %v1388
    %2185 = vmatpush2.bf16.msra.mxu0 %v1387
    %2186 = vmatprep.subr.bf16.mxu0 %v1384
    %2187 = vmatpush2.bf16.msra.mxu0 %v1383
    %2188 = vmatprep.subr.bf16.mxu0 %v1380
    %2189 = vmatpush2.bf16.msra.mxu0 %v1379
    %2190 = vmatprep.mubr.bf16.mxu0 %v206
    %2191 = vmatmul.mubr.bf16.gmra.mxu0 %v205
    %v2192 = vpop.f32.mrf.mxu0
    %v2193 = vadd.f32 %v2120, %v2192
    %v2194 = vpop.f32.mrf.mxu0
    %v2195 = vadd.f32 %v2122, %v2194
    %v2196 = vpop.f32.mrf.mxu0
    %v2197 = vadd.f32 %v2124, %v2196
    %v2198 = vpop.f32.mrf.mxu0
    %v2199 = vadd.f32 %v2126, %v2198
    %2200 = vmatprep.mubr.bf16.mxu0 %v214
    %2201 = vmatmul.mubr.bf16.gmra.mxu0 %v213
    %v2202 = vpop.f32.mrf.mxu0
    %v2203 = vadd.f32 %v2130, %v2202
    %v2204 = vpop.f32.mrf.mxu0
    %v2205 = vadd.f32 %v2132, %v2204
    %v2206 = vpop.f32.mrf.mxu0
    %v2207 = vadd.f32 %v2134, %v2206
    %v2208 = vpop.f32.mrf.mxu0
    %v2209 = vadd.f32 %v2136, %v2208
    %2210 = vmatprep.mubr.bf16.mxu0 %v222
    %2211 = vmatmul.mubr.bf16.gmra.mxu0 %v221
    %v2212 = vpop.f32.mrf.mxu0
    %v2213 = vadd.f32 %v2140, %v2212
    %v2214 = vpop.f32.mrf.mxu0
    %v2215 = vadd.f32 %v2142, %v2214
    %v2216 = vpop.f32.mrf.mxu0
    %v2217 = vadd.f32 %v2144, %v2216
    %v2218 = vpop.f32.mrf.mxu0
    %v2219 = vadd.f32 %v2146, %v2218
    %2220 = vmatprep.mubr.bf16.mxu0 %v230
    %2221 = vmatmul.mubr.bf16.gmra.mxu0 %v229
    %v2222 = vpop.f32.mrf.mxu0
    %v2223 = vadd.f32 %v2150, %v2222
    %v2224 = vpop.f32.mrf.mxu0
    %v2225 = vadd.f32 %v2152, %v2224
    %v2226 = vpop.f32.mrf.mxu0
    %v2227 = vadd.f32 %v2154, %v2226
    %v2228 = vpop.f32.mrf.mxu0
    %v2229 = vadd.f32 %v2156, %v2228
    %2230 = vdwg.mxu0
    %2231 = vmatprep.subr.bf16.mxu0 %v1440
    %2232 = vmatpush1.bf16.msra.mxu0 %v1439
    %2233 = vmatprep.subr.bf16.mxu0 %v1436
    %2234 = vmatpush1.bf16.msra.mxu0 %v1435
    %2235 = vmatprep.subr.bf16.mxu0 %v1432
    %2236 = vmatpush1.bf16.msra.mxu0 %v1431
    %2237 = vmatprep.subr.bf16.mxu0 %v1428
    %2238 = vmatpush1.bf16.msra.mxu0 %v1427
    %2239 = vmatprep.subr.bf16.mxu0 %v1424
    %2240 = vmatpush1.bf16.msra.mxu0 %v1423
    %2241 = vmatprep.subr.bf16.mxu0 %v1420
    %2242 = vmatpush1.bf16.msra.mxu0 %v1419
    %2243 = vmatprep.subr.bf16.mxu0 %v1416
    %2244 = vmatpush1.bf16.msra.mxu0 %v1415
    %2245 = vmatprep.subr.bf16.mxu0 %v1412
    %2246 = vmatpush1.bf16.msra.mxu0 %v1411
    %2247 = vmatprep.subr.bf16.mxu0 %v1472
    %2248 = vmatpush2.bf16.msra.mxu0 %v1471
    %2249 = vmatprep.subr.bf16.mxu0 %v1468
    %2250 = vmatpush2.bf16.msra.mxu0 %v1467
    %2251 = vmatprep.subr.bf16.mxu0 %v1464
    %2252 = vmatpush2.bf16.msra.mxu0 %v1463
    %2253 = vmatprep.subr.bf16.mxu0 %v1460
    %2254 = vmatpush2.bf16.msra.mxu0 %v1459
    %2255 = vmatprep.subr.bf16.mxu0 %v1456
    %2256 = vmatpush2.bf16.msra.mxu0 %v1455
    %2257 = vmatprep.subr.bf16.mxu0 %v1452
    %2258 = vmatpush2.bf16.msra.mxu0 %v1451
    %2259 = vmatprep.subr.bf16.mxu0 %v1448
    %2260 = vmatpush2.bf16.msra.mxu0 %v1447
    %2261 = vmatprep.subr.bf16.mxu0 %v1444
    %2262 = vmatpush2.bf16.msra.mxu0 %v1443
    %2263 = vmatprep.mubr.bf16.mxu0 %v208
    %2264 = vmatmul.mubr.bf16.gmra.mxu0 %v207
    %v2265 = vpop.f32.mrf.mxu0
    %v2266 = vadd.f32 %v2193, %v2265
    %v2267 = vpop.f32.mrf.mxu0
    %v2268 = vadd.f32 %v2195, %v2267
    %v2269 = vpop.f32.mrf.mxu0
    %v2270 = vadd.f32 %v2197, %v2269
    %v2271 = vpop.f32.mrf.mxu0
    %v2272 = vadd.f32 %v2199, %v2271
    %2273 = vmatprep.mubr.bf16.mxu0 %v216
    %2274 = vmatmul.mubr.bf16.gmra.mxu0 %v215
    %v2275 = vpop.f32.mrf.mxu0
    %v2276 = vadd.f32 %v2203, %v2275
    %v2277 = vpop.f32.mrf.mxu0
    %v2278 = vadd.f32 %v2205, %v2277
    %v2279 = vpop.f32.mrf.mxu0
    %v2280 = vadd.f32 %v2207, %v2279
    %v2281 = vpop.f32.mrf.mxu0
    %v2282 = vadd.f32 %v2209, %v2281
    %2283 = vmatprep.mubr.bf16.mxu0 %v224
    %2284 = vmatmul.mubr.bf16.gmra.mxu0 %v223
    %v2285 = vpop.f32.mrf.mxu0
    %v2286 = vadd.f32 %v2213, %v2285
    %v2287 = vpop.f32.mrf.mxu0
    %v2288 = vadd.f32 %v2215, %v2287
    %v2289 = vpop.f32.mrf.mxu0
    %v2290 = vadd.f32 %v2217, %v2289
    %v2291 = vpop.f32.mrf.mxu0
    %v2292 = vadd.f32 %v2219, %v2291
    %2293 = vmatprep.mubr.bf16.mxu0 %v232
    %2294 = vmatmul.mubr.bf16.gmra.mxu0 %v231
    %v2295 = vpop.f32.mrf.mxu0
    %v2296 = vadd.f32 %v2223, %v2295
    %v2297 = vpop.f32.mrf.mxu0
    %v2298 = vadd.f32 %v2225, %v2297
    %v2299 = vpop.f32.mrf.mxu0
    %v2300 = vadd.f32 %v2227, %v2299
    %v2301 = vpop.f32.mrf.mxu0
    %v2302 = vadd.f32 %v2229, %v2301
    %2303 = vdwg.mxu0
    %2304 = vmatprep.subr.bf16.mxu0 %v1504
    %2305 = vmatpush1.bf16.msra.mxu0 %v1503
    %2306 = vmatprep.subr.bf16.mxu0 %v1500
    %2307 = vmatpush1.bf16.msra.mxu0 %v1499
    %2308 = vmatprep.subr.bf16.mxu0 %v1496
    %2309 = vmatpush1.bf16.msra.mxu0 %v1495
    %2310 = vmatprep.subr.bf16.mxu0 %v1492
    %2311 = vmatpush1.bf16.msra.mxu0 %v1491
    %2312 = vmatprep.subr.bf16.mxu0 %v1488
    %2313 = vmatpush1.bf16.msra.mxu0 %v1487
    %2314 = vmatprep.subr.bf16.mxu0 %v1484
    %2315 = vmatpush1.bf16.msra.mxu0 %v1483
    %2316 = vmatprep.subr.bf16.mxu0 %v1480
    %2317 = vmatpush1.bf16.msra.mxu0 %v1479
    %2318 = vmatprep.subr.bf16.mxu0 %v1476
    %2319 = vmatpush1.bf16.msra.mxu0 %v1475
    %2320 = vmatprep.subr.bf16.mxu0 %v1536
    %2321 = vmatpush2.bf16.msra.mxu0 %v1535
    %2322 = vmatprep.subr.bf16.mxu0 %v1532
    %2323 = vmatpush2.bf16.msra.mxu0 %v1531
    %2324 = vmatprep.subr.bf16.mxu0 %v1528
    %2325 = vmatpush2.bf16.msra.mxu0 %v1527
    %2326 = vmatprep.subr.bf16.mxu0 %v1524
    %2327 = vmatpush2.bf16.msra.mxu0 %v1523
    %2328 = vmatprep.subr.bf16.mxu0 %v1520
    %2329 = vmatpush2.bf16.msra.mxu0 %v1519
    %2330 = vmatprep.subr.bf16.mxu0 %v1516
    %2331 = vmatpush2.bf16.msra.mxu0 %v1515
    %2332 = vmatprep.subr.bf16.mxu0 %v1512
    %2333 = vmatpush2.bf16.msra.mxu0 %v1511
    %2334 = vmatprep.subr.bf16.mxu0 %v1508
    %2335 = vmatpush2.bf16.msra.mxu0 %v1507
    %2336 = vmatprep.mubr.bf16.mxu0 %v210
    %2337 = vmatmul.mubr.bf16.gmra.mxu0 %v209
    %v2338 = vpop.f32.mrf.mxu0
    %v2339 = vadd.f32 %v2266, %v2338
    %v2340 = vpop.f32.mrf.mxu0
    %v2341 = vadd.f32 %v2268, %v2340
    %v2342 = vpop.f32.mrf.mxu0
    %v2343 = vadd.f32 %v2270, %v2342
    %v2344 = vpop.f32.mrf.mxu0
    %v2345 = vadd.f32 %v2272, %v2344
    %2346 = vmatprep.mubr.bf16.mxu0 %v218
    %2347 = vmatmul.mubr.bf16.gmra.mxu0 %v217
    %v2348 = vpop.f32.mrf.mxu0
    %v2349 = vadd.f32 %v2276, %v2348
    %v2350 = vpop.f32.mrf.mxu0
    %v2351 = vadd.f32 %v2278, %v2350
    %v2352 = vpop.f32.mrf.mxu0
    %v2353 = vadd.f32 %v2280, %v2352
    %v2354 = vpop.f32.mrf.mxu0
    %v2355 = vadd.f32 %v2282, %v2354
    %2356 = vmatprep.mubr.bf16.mxu0 %v226
    %2357 = vmatmul.mubr.bf16.gmra.mxu0 %v225
    %v2358 = vpop.f32.mrf.mxu0
    %v2359 = vadd.f32 %v2286, %v2358
    %v2360 = vpop.f32.mrf.mxu0
    %v2361 = vadd.f32 %v2288, %v2360
    %v2362 = vpop.f32.mrf.mxu0
    %v2363 = vadd.f32 %v2290, %v2362
    %v2364 = vpop.f32.mrf.mxu0
    %v2365 = vadd.f32 %v2292, %v2364
    %2366 = vmatprep.mubr.bf16.mxu0 %v234
    %2367 = vmatmul.mubr.bf16.gmra.mxu0 %v233
    %v2368 = vpop.f32.mrf.mxu0
    %v2369 = vadd.f32 %v2296, %v2368
    %v2370 = vpop.f32.mrf.mxu0
    %v2371 = vadd.f32 %v2298, %v2370
    %v2372 = vpop.f32.mrf.mxu0
    %v2373 = vadd.f32 %v2300, %v2372
    %v2374 = vpop.f32.mrf.mxu0
    %v2375 = vadd.f32 %v2302, %v2374
    %2376 = vdwg.mxu0
    %v2377 = vmax.f32 %v2047, 0.0
    %v2378 = vmax.f32 %v2049, 0.0
    %v2379 = vmax.f32 %v2339, 0.0
    %v2380 = vmax.f32 %v2341, 0.0
    %v2381 = vmax.f32 %v2051, 0.0
    %v2382 = vmax.f32 %v2053, 0.0
    %v2383 = vmax.f32 %v2343, 0.0
    %v2384 = vmax.f32 %v2345, 0.0
    %v2385 = vmax.f32 %v2057, 0.0
    %v2386 = vmax.f32 %v2059, 0.0
    %v2387 = vmax.f32 %v2349, 0.0
    %v2388 = vmax.f32 %v2351, 0.0
    %v2389 = vmax.f32 %v2061, 0.0
    %v2390 = vmax.f32 %v2063, 0.0
    %v2391 = vmax.f32 %v2353, 0.0
    %v2392 = vmax.f32 %v2355, 0.0
    %v2393 = vmax.f32 %v2067, 0.0
    %v2394 = vmax.f32 %v2069, 0.0
    %v2395 = vmax.f32 %v2359, 0.0
    %v2396 = vmax.f32 %v2361, 0.0
    %v2397 = vmax.f32 %v2071, 0.0
    %v2398 = vmax.f32 %v2073, 0.0
    %v2399 = vmax.f32 %v2363, 0.0
    %v2400 = vmax.f32 %v2365, 0.0
    %v2401 = vmax.f32 %v2077, 0.0
    %v2402 = vmax.f32 %v2079, 0.0
    %v2403 = vmax.f32 %v2369, 0.0
    %v2404 = vmax.f32 %v2371, 0.0
    %v2405 = vmax.f32 %v2081, 0.0
    %v2406 = vmax.f32 %v2083, 0.0
    %v2407 = vmax.f32 %v2373, 0.0
    %v2408 = vmax.f32 %v2375, 0.0
    %s2409 = smul.u32 %s138, 64
    %v2410 = vlaneseq
    %v2411 = vshrl.u32 %v2410, 7
    %v2412 = vadd.s32 %v2411, 8
    %v2413 = vadd.s32 %v2411, 16
    %v2414 = vadd.s32 %v2411, 24
    %v2415 = vadd.s32 %v2411, 32
    %v2416 = vadd.s32 %v2411, 40
    %v2417 = vadd.s32 %v2411, 48
    %v2418 = vadd.s32 %v2411, 56
    %v2419 = vstv %s2409
    %v2420 = vadd.s32 %v2419, %v2411
    %v2421 = vadd.s32 %v2419, %v2412
    %v2422 = vadd.s32 %v2419, %v2413
    %v2423 = vadd.s32 %v2419, %v2414
    %v2424 = vadd.s32 %v2419, %v2415
    %v2425 = vadd.s32 %v2419, %v2416
    %v2426 = vadd.s32 %v2419, %v2417
    %v2427 = vadd.s32 %v2419, %v2418
    %v2428 = vstv %s137
    %vm2429 = vcmp.lt.s32.totalorder %v2420, %v2428
    %vm2430 = vcmp.lt.s32.totalorder %v2421, %v2428
    %vm2431 = vcmp.lt.s32.totalorder %v2422, %v2428
    %vm2432 = vcmp.lt.s32.totalorder %v2423, %v2428
    %vm2433 = vcmp.lt.s32.totalorder %v2424, %v2428
    %vm2434 = vcmp.lt.s32.totalorder %v2425, %v2428
    %vm2435 = vcmp.lt.s32.totalorder %v2426, %v2428
    %vm2436 = vcmp.lt.s32.totalorder %v2427, %v2428
    %v2437 = vsel %vm2429, 1, 0
    %v2438 = vsel %vm2430, 1, 0
    %v2439 = vsel %vm2431, 1, 0
    %v2440 = vsel %vm2432, 1, 0
    %v2441 = vsel %vm2433, 1, 0
    %v2442 = vsel %vm2434, 1, 0
    %v2443 = vsel %vm2435, 1, 0
    %v2444 = vsel %vm2436, 1, 0
    %vm2445 = vcmp.eq.s32.totalorder %v2437, 1
    %vm2446 = vcmp.eq.s32.totalorder %v2438, 1
    %vm2447 = vcmp.eq.s32.totalorder %v2439, 1
    %vm2448 = vcmp.eq.s32.totalorder %v2440, 1
    %vm2449 = vcmp.eq.s32.totalorder %v2441, 1
    %vm2450 = vcmp.eq.s32.totalorder %v2442, 1
    %vm2451 = vcmp.eq.s32.totalorder %v2443, 1
    %vm2452 = vcmp.eq.s32.totalorder %v2444, 1
    %v2453 = vsel %vm2445, %v2377, 0.0
    %v2454 = vsel %vm2445, %v2378, 0.0
    %v2455 = vsel %vm2445, %v2379, 0.0
    %v2456 = vsel %vm2445, %v2380, 0.0
    %v2457 = vsel %vm2446, %v2381, 0.0
    %v2458 = vsel %vm2446, %v2382, 0.0
    %v2459 = vsel %vm2446, %v2383, 0.0
    %v2460 = vsel %vm2446, %v2384, 0.0
    %v2461 = vsel %vm2447, %v2385, 0.0
    %v2462 = vsel %vm2447, %v2386, 0.0
    %v2463 = vsel %vm2447, %v2387, 0.0
    %v2464 = vsel %vm2447, %v2388, 0.0
    %v2465 = vsel %vm2448, %v2389, 0.0
    %v2466 = vsel %vm2448, %v2390, 0.0
    %v2467 = vsel %vm2448, %v2391, 0.0
    %v2468 = vsel %vm2448, %v2392, 0.0
    %v2469 = vsel %vm2449, %v2393, 0.0
    %v2470 = vsel %vm2449, %v2394, 0.0
    %v2471 = vsel %vm2449, %v2395, 0.0
    %v2472 = vsel %vm2449, %v2396, 0.0
    %v2473 = vsel %vm2450, %v2397, 0.0
    %v2474 = vsel %vm2450, %v2398, 0.0
    %v2475 = vsel %vm2450, %v2399, 0.0
    %v2476 = vsel %vm2450, %v2400, 0.0
    %v2477 = vsel %vm2451, %v2401, 0.0
    %v2478 = vsel %vm2451, %v2402, 0.0
    %v2479 = vsel %vm2451, %v2403, 0.0
    %v2480 = vsel %vm2451, %v2404, 0.0
    %v2481 = vsel %vm2452, %v2405, 0.0
    %v2482 = vsel %vm2452, %v2406, 0.0
    %v2483 = vsel %vm2452, %v2407, 0.0
    %v2484 = vsel %vm2452, %v2408, 0.0
    %v2485 = vpack.c.bf16 %v2457, %v2453
    %v2486 = vpack.c.bf16 %v2458, %v2454
    %v2487 = vpack.c.bf16 %v2459, %v2455
    %v2488 = vpack.c.bf16 %v2460, %v2456
    %v2489 = vpack.c.bf16 %v2465, %v2461
    %v2490 = vpack.c.bf16 %v2466, %v2462
    %v2491 = vpack.c.bf16 %v2467, %v2463
    %v2492 = vpack.c.bf16 %v2468, %v2464
    %v2493 = vpack.c.bf16 %v2473, %v2469
    %v2494 = vpack.c.bf16 %v2474, %v2470
    %v2495 = vpack.c.bf16 %v2475, %v2471
    %v2496 = vpack.c.bf16 %v2476, %v2472
    %v2497 = vpack.c.bf16 %v2481, %v2477
    %v2498 = vpack.c.bf16 %v2482, %v2478
    %v2499 = vpack.c.bf16 %v2483, %v2479
    %v2500 = vpack.c.bf16 %v2484, %v2480
    %v2501 = vld [vmem:[#allocation9] sm:$0xff]
    %v2502 = vld [vmem:[#allocation9 + $0x8] sm:$0xff]
    %v2503 = vld [vmem:[#allocation9 + $0x10] sm:$0xff]
    %v2504 = vld [vmem:[#allocation9 + $0x18] sm:$0xff]
    %v2505 = vld [vmem:[#allocation9 + $0x20] sm:$0xff]
    %v2506 = vld [vmem:[#allocation9 + $0x28] sm:$0xff]
    %v2507 = vld [vmem:[#allocation9 + $0x30] sm:$0xff]
    %v2508 = vld [vmem:[#allocation9 + $0x38] sm:$0xff]
    %v2509 = vld [vmem:[#allocation9 + $0x40] sm:$0xff]
    %v2510 = vld [vmem:[#allocation9 + $0x48] sm:$0xff]
    %v2511 = vld [vmem:[#allocation9 + $0x50] sm:$0xff]
    %v2512 = vld [vmem:[#allocation9 + $0x58] sm:$0xff]
    %v2513 = vld [vmem:[#allocation9 + $0x60] sm:$0xff]
    %v2514 = vld [vmem:[#allocation9 + $0x68] sm:$0xff]
    %v2515 = vld [vmem:[#allocation9 + $0x70] sm:$0xff]
    %v2516 = vld [vmem:[#allocation9 + $0x78] sm:$0xff]
    %v2517 = vld [vmem:[#allocation9 + $0x80] sm:$0xff]
    %v2518 = vld [vmem:[#allocation9 + $0x88] sm:$0xff]
    %v2519 = vld [vmem:[#allocation9 + $0x90] sm:$0xff]
    %v2520 = vld [vmem:[#allocation9 + $0x98] sm:$0xff]
    %v2521 = vld [vmem:[#allocation9 + $0xa0] sm:$0xff]
    %v2522 = vld [vmem:[#allocation9 + $0xa8] sm:$0xff]
    %v2523 = vld [vmem:[#allocation9 + $0xb0] sm:$0xff]
    %v2524 = vld [vmem:[#allocation9 + $0xb8] sm:$0xff]
    %v2525 = vld [vmem:[#allocation9 + $0xc0] sm:$0xff]
    %v2526 = vld [vmem:[#allocation9 + $0xc8] sm:$0xff]
    %v2527 = vld [vmem:[#allocation9 + $0xd0] sm:$0xff]
    %v2528 = vld [vmem:[#allocation9 + $0xd8] sm:$0xff]
    %v2529 = vld [vmem:[#allocation9 + $0xe0] sm:$0xff]
    %v2530 = vld [vmem:[#allocation9 + $0xe8] sm:$0xff]
    %v2531 = vld [vmem:[#allocation9 + $0xf0] sm:$0xff]
    %v2532 = vld [vmem:[#allocation9 + $0xf8] sm:$0xff]
    %v2533 = vld [vmem:[#allocation9 + $0x100] sm:$0xff]
    %v2534 = vld [vmem:[#allocation9 + $0x108] sm:$0xff]
    %v2535 = vld [vmem:[#allocation9 + $0x110] sm:$0xff]
    %v2536 = vld [vmem:[#allocation9 + $0x118] sm:$0xff]
    %v2537 = vld [vmem:[#allocation9 + $0x120] sm:$0xff]
    %v2538 = vld [vmem:[#allocation9 + $0x128] sm:$0xff]
    %v2539 = vld [vmem:[#allocation9 + $0x130] sm:$0xff]
    %v2540 = vld [vmem:[#allocation9 + $0x138] sm:$0xff]
    %v2541 = vld [vmem:[#allocation9 + $0x140] sm:$0xff]
    %v2542 = vld [vmem:[#allocation9 + $0x148] sm:$0xff]
    %v2543 = vld [vmem:[#allocation9 + $0x150] sm:$0xff]
    %v2544 = vld [vmem:[#allocation9 + $0x158] sm:$0xff]
    %v2545 = vld [vmem:[#allocation9 + $0x160] sm:$0xff]
    %v2546 = vld [vmem:[#allocation9 + $0x168] sm:$0xff]
    %v2547 = vld [vmem:[#allocation9 + $0x170] sm:$0xff]
    %v2548 = vld [vmem:[#allocation9 + $0x178] sm:$0xff]
    %v2549 = vld [vmem:[#allocation9 + $0x180] sm:$0xff]
    %v2550 = vld [vmem:[#allocation9 + $0x188] sm:$0xff]
    %v2551 = vld [vmem:[#allocation9 + $0x190] sm:$0xff]
    %v2552 = vld [vmem:[#allocation9 + $0x198] sm:$0xff]
    %v2553 = vld [vmem:[#allocation9 + $0x1a0] sm:$0xff]
    %v2554 = vld [vmem:[#allocation9 + $0x1a8] sm:$0xff]
    %v2555 = vld [vmem:[#allocation9 + $0x1b0] sm:$0xff]
    %v2556 = vld [vmem:[#allocation9 + $0x1b8] sm:$0xff]
    %v2557 = vld [vmem:[#allocation9 + $0x1c0] sm:$0xff]
    %v2558 = vld [vmem:[#allocation9 + $0x1c8] sm:$0xff]
    %v2559 = vld [vmem:[#allocation9 + $0x1d0] sm:$0xff]
    %v2560 = vld [vmem:[#allocation9 + $0x1d8] sm:$0xff]
    %v2561 = vld [vmem:[#allocation9 + $0x1e0] sm:$0xff]
    %v2562 = vld [vmem:[#allocation9 + $0x1e8] sm:$0xff]
    %v2563 = vld [vmem:[#allocation9 + $0x1f0] sm:$0xff]
    %v2564 = vld [vmem:[#allocation9 + $0x1f8] sm:$0xff]
    %v2565 = vld [vmem:[#allocation10] sm:$0x3]
    %v2567 = vlaneseq
    %v2568 = vshrl.u32 %v2567, 7
    %v2569 = vsub.s32 0, %v2568
    %v2570 = vrot.slane %v2565, %v2569
    %v2571 = vlaneseq
    %v2572 = vshrl.u32 %v2571, 7
    %v2573 = vsub.s32 1, %v2572
    %v2574 = vrot.slane %v2565, %v2573
    %v2641 = vunpack.c.l.b16 %v2501
    %v2642 = vunpack.c.h.b16 %v2501
    %v2643 = vunpack.c.l.b16 %v2502
    %v2644 = vunpack.c.h.b16 %v2502
    %v2645 = vunpack.c.l.b16 %v2503
    %v2646 = vunpack.c.h.b16 %v2503
    %v2647 = vunpack.c.l.b16 %v2504
    %v2648 = vunpack.c.h.b16 %v2504
    %v2649 = vunpack.c.l.b16 %v2505
    %v2650 = vunpack.c.h.b16 %v2505
    %v2651 = vunpack.c.l.b16 %v2506
    %v2652 = vunpack.c.h.b16 %v2506
    %v2653 = vunpack.c.l.b16 %v2507
    %v2654 = vunpack.c.h.b16 %v2507
    %v2655 = vunpack.c.l.b16 %v2508
    %v2656 = vunpack.c.h.b16 %v2508
    %v2657 = vunpack.c.l.b16 %v2509
    %v2658 = vunpack.c.h.b16 %v2509
    %v2659 = vunpack.c.l.b16 %v2510
    %v2660 = vunpack.c.h.b16 %v2510
    %v2661 = vunpack.c.l.b16 %v2511
    %v2662 = vunpack.c.h.b16 %v2511
    %v2663 = vunpack.c.l.b16 %v2512
    %v2664 = vunpack.c.h.b16 %v2512
    %v2665 = vunpack.c.l.b16 %v2513
    %v2666 = vunpack.c.h.b16 %v2513
    %v2667 = vunpack.c.l.b16 %v2514
    %v2668 = vunpack.c.h.b16 %v2514
    %v2669 = vunpack.c.l.b16 %v2515
    %v2670 = vunpack.c.h.b16 %v2515
    %v2671 = vunpack.c.l.b16 %v2516
    %v2672 = vunpack.c.h.b16 %v2516
    %v2673 = vunpack.c.l.b16 %v2517
    %v2674 = vunpack.c.h.b16 %v2517
    %v2675 = vunpack.c.l.b16 %v2518
    %v2676 = vunpack.c.h.b16 %v2518
    %v2677 = vunpack.c.l.b16 %v2519
    %v2678 = vunpack.c.h.b16 %v2519
    %v2679 = vunpack.c.l.b16 %v2520
    %v2680 = vunpack.c.h.b16 %v2520
    %v2681 = vunpack.c.l.b16 %v2521
    %v2682 = vunpack.c.h.b16 %v2521
    %v2683 = vunpack.c.l.b16 %v2522
    %v2684 = vunpack.c.h.b16 %v2522
    %v2685 = vunpack.c.l.b16 %v2523
    %v2686 = vunpack.c.h.b16 %v2523
    %v2687 = vunpack.c.l.b16 %v2524
    %v2688 = vunpack.c.h.b16 %v2524
    %v2689 = vunpack.c.l.b16 %v2525
    %v2690 = vunpack.c.h.b16 %v2525
    %v2691 = vunpack.c.l.b16 %v2526
    %v2692 = vunpack.c.h.b16 %v2526
    %v2693 = vunpack.c.l.b16 %v2527
    %v2694 = vunpack.c.h.b16 %v2527
    %v2695 = vunpack.c.l.b16 %v2528
    %v2696 = vunpack.c.h.b16 %v2528
    %v2697 = vunpack.c.l.b16 %v2529
    %v2698 = vunpack.c.h.b16 %v2529
    %v2699 = vunpack.c.l.b16 %v2530
    %v2700 = vunpack.c.h.b16 %v2530
    %v2701 = vunpack.c.l.b16 %v2531
    %v2702 = vunpack.c.h.b16 %v2531
    %v2703 = vunpack.c.l.b16 %v2532
    %v2704 = vunpack.c.h.b16 %v2532
    %v2705 = vunpack.c.l.b16 %v2533
    %v2706 = vunpack.c.h.b16 %v2533
    %v2707 = vunpack.c.l.b16 %v2534
    %v2708 = vunpack.c.h.b16 %v2534
    %v2709 = vunpack.c.l.b16 %v2535
    %v2710 = vunpack.c.h.b16 %v2535
    %v2711 = vunpack.c.l.b16 %v2536
    %v2712 = vunpack.c.h.b16 %v2536
    %v2713 = vunpack.c.l.b16 %v2537
    %v2714 = vunpack.c.h.b16 %v2537
    %v2715 = vunpack.c.l.b16 %v2538
    %v2716 = vunpack.c.h.b16 %v2538
    %v2717 = vunpack.c.l.b16 %v2539
    %v2718 = vunpack.c.h.b16 %v2539
    %v2719 = vunpack.c.l.b16 %v2540
    %v2720 = vunpack.c.h.b16 %v2540
    %v2721 = vunpack.c.l.b16 %v2541
    %v2722 = vunpack.c.h.b16 %v2541
    %v2723 = vunpack.c.l.b16 %v2542
    %v2724 = vunpack.c.h.b16 %v2542
    %v2725 = vunpack.c.l.b16 %v2543
    %v2726 = vunpack.c.h.b16 %v2543
    %v2727 = vunpack.c.l.b16 %v2544
    %v2728 = vunpack.c.h.b16 %v2544
    %v2729 = vunpack.c.l.b16 %v2545
    %v2730 = vunpack.c.h.b16 %v2545
    %v2731 = vunpack.c.l.b16 %v2546
    %v2732 = vunpack.c.h.b16 %v2546
    %v2733 = vunpack.c.l.b16 %v2547
    %v2734 = vunpack.c.h.b16 %v2547
    %v2735 = vunpack.c.l.b16 %v2548
    %v2736 = vunpack.c.h.b16 %v2548
    %v2737 = vunpack.c.l.b16 %v2549
    %v2738 = vunpack.c.h.b16 %v2549
    %v2739 = vunpack.c.l.b16 %v2550
    %v2740 = vunpack.c.h.b16 %v2550
    %v2741 = vunpack.c.l.b16 %v2551
    %v2742 = vunpack.c.h.b16 %v2551
    %v2743 = vunpack.c.l.b16 %v2552
    %v2744 = vunpack.c.h.b16 %v2552
    %v2745 = vunpack.c.l.b16 %v2553
    %v2746 = vunpack.c.h.b16 %v2553
    %v2747 = vunpack.c.l.b16 %v2554
    %v2748 = vunpack.c.h.b16 %v2554
    %v2749 = vunpack.c.l.b16 %v2555
    %v2750 = vunpack.c.h.b16 %v2555
    %v2751 = vunpack.c.l.b16 %v2556
    %v2752 = vunpack.c.h.b16 %v2556
    %v2753 = vunpack.c.l.b16 %v2557
    %v2754 = vunpack.c.h.b16 %v2557
    %v2755 = vunpack.c.l.b16 %v2558
    %v2756 = vunpack.c.h.b16 %v2558
    %v2757 = vunpack.c.l.b16 %v2559
    %v2758 = vunpack.c.h.b16 %v2559
    %v2759 = vunpack.c.l.b16 %v2560
    %v2760 = vunpack.c.h.b16 %v2560
    %v2761 = vunpack.c.l.b16 %v2561
    %v2762 = vunpack.c.h.b16 %v2561
    %v2763 = vunpack.c.l.b16 %v2562
    %v2764 = vunpack.c.h.b16 %v2562
    %v2765 = vunpack.c.l.b16 %v2563
    %v2766 = vunpack.c.h.b16 %v2563
    %v2767 = vunpack.c.l.b16 %v2564
    %v2768 = vunpack.c.h.b16 %v2564
    %v2769 = vpack.c.b16 %v2643, %v2641
    %v2770 = vpack.c.b16 %v2644, %v2642
    %v2771 = vpack.c.b16 %v2647, %v2645
    %v2772 = vpack.c.b16 %v2648, %v2646
    %v2773 = vpack.c.b16 %v2651, %v2649
    %v2774 = vpack.c.b16 %v2652, %v2650
    %v2775 = vpack.c.b16 %v2655, %v2653
    %v2776 = vpack.c.b16 %v2656, %v2654
    %v2777 = vpack.c.b16 %v2659, %v2657
    %v2778 = vpack.c.b16 %v2660, %v2658
    %v2779 = vpack.c.b16 %v2663, %v2661
    %v2780 = vpack.c.b16 %v2664, %v2662
    %v2781 = vpack.c.b16 %v2667, %v2665
    %v2782 = vpack.c.b16 %v2668, %v2666
    %v2783 = vpack.c.b16 %v2671, %v2669
    %v2784 = vpack.c.b16 %v2672, %v2670
    %v2785 = vpack.c.b16 %v2675, %v2673
    %v2786 = vpack.c.b16 %v2676, %v2674
    %v2787 = vpack.c.b16 %v2679, %v2677
    %v2788 = vpack.c.b16 %v2680, %v2678
    %v2789 = vpack.c.b16 %v2683, %v2681
    %v2790 = vpack.c.b16 %v2684, %v2682
    %v2791 = vpack.c.b16 %v2687, %v2685
    %v2792 = vpack.c.b16 %v2688, %v2686
    %v2793 = vpack.c.b16 %v2691, %v2689
    %v2794 = vpack.c.b16 %v2692, %v2690
    %v2795 = vpack.c.b16 %v2695, %v2693
    %v2796 = vpack.c.b16 %v2696, %v2694
    %v2797 = vpack.c.b16 %v2699, %v2697
    %v2798 = vpack.c.b16 %v2700, %v2698
    %v2799 = vpack.c.b16 %v2703, %v2701
    %v2800 = vpack.c.b16 %v2704, %v2702
    %v2801 = vpack.c.b16 %v2707, %v2705
    %v2802 = vpack.c.b16 %v2708, %v2706
    %v2803 = vpack.c.b16 %v2711, %v2709
    %v2804 = vpack.c.b16 %v2712, %v2710
    %v2805 = vpack.c.b16 %v2715, %v2713
    %v2806 = vpack.c.b16 %v2716, %v2714
    %v2807 = vpack.c.b16 %v2719, %v2717
    %v2808 = vpack.c.b16 %v2720, %v2718
    %v2809 = vpack.c.b16 %v2723, %v2721
    %v2810 = vpack.c.b16 %v2724, %v2722
    %v2811 = vpack.c.b16 %v2727, %v2725
    %v2812 = vpack.c.b16 %v2728, %v2726
    %v2813 = vpack.c.b16 %v2731, %v2729
    %v2814 = vpack.c.b16 %v2732, %v2730
    %v2815 = vpack.c.b16 %v2735, %v2733
    %v2816 = vpack.c.b16 %v2736, %v2734
    %v2817 = vpack.c.b16 %v2739, %v2737
    %v2818 = vpack.c.b16 %v2740, %v2738
    %v2819 = vpack.c.b16 %v2743, %v2741
    %v2820 = vpack.c.b16 %v2744, %v2742
    %v2821 = vpack.c.b16 %v2747, %v2745
    %v2822 = vpack.c.b16 %v2748, %v2746
    %v2823 = vpack.c.b16 %v2751, %v2749
    %v2824 = vpack.c.b16 %v2752, %v2750
    %v2825 = vpack.c.b16 %v2755, %v2753
    %v2826 = vpack.c.b16 %v2756, %v2754
    %v2827 = vpack.c.b16 %v2759, %v2757
    %v2828 = vpack.c.b16 %v2760, %v2758
    %v2829 = vpack.c.b16 %v2763, %v2761
    %v2830 = vpack.c.b16 %v2764, %v2762
    %v2831 = vpack.c.b16 %v2767, %v2765
    %v2832 = vpack.c.b16 %v2768, %v2766
    %2897 = vmatprep.subr.bf16.mxu0 %v2784
    %2898 = vmatpush1.bf16.msra.mxu0 %v2783
    %2899 = vmatprep.subr.bf16.mxu0 %v2782
    %2900 = vmatpush1.bf16.msra.mxu0 %v2781
    %2901 = vmatprep.subr.bf16.mxu0 %v2780
    %2902 = vmatpush1.bf16.msra.mxu0 %v2779
    %2903 = vmatprep.subr.bf16.mxu0 %v2778
    %2904 = vmatpush1.bf16.msra.mxu0 %v2777
    %2905 = vmatprep.subr.bf16.mxu0 %v2776
    %2906 = vmatpush1.bf16.msra.mxu0 %v2775
    %2907 = vmatprep.subr.bf16.mxu0 %v2774
    %2908 = vmatpush1.bf16.msra.mxu0 %v2773
    %2909 = vmatprep.subr.bf16.mxu0 %v2772
    %2910 = vmatpush1.bf16.msra.mxu0 %v2771
    %2911 = vmatprep.subr.bf16.mxu0 %v2770
    %2912 = vmatpush1.bf16.msra.mxu0 %v2769
    %2913 = vmatprep.subr.bf16.mxu0 %v2800
    %2914 = vmatpush2.bf16.msra.mxu0 %v2799
    %2915 = vmatprep.subr.bf16.mxu0 %v2798
    %2916 = vmatpush2.bf16.msra.mxu0 %v2797
    %2917 = vmatprep.subr.bf16.mxu0 %v2796
    %2918 = vmatpush2.bf16.msra.mxu0 %v2795
    %2919 = vmatprep.subr.bf16.mxu0 %v2794
    %2920 = vmatpush2.bf16.msra.mxu0 %v2793
    %2921 = vmatprep.subr.bf16.mxu0 %v2792
    %2922 = vmatpush2.bf16.msra.mxu0 %v2791
    %2923 = vmatprep.subr.bf16.mxu0 %v2790
    %2924 = vmatpush2.bf16.msra.mxu0 %v2789
    %2925 = vmatprep.subr.bf16.mxu0 %v2788
    %2926 = vmatpush2.bf16.msra.mxu0 %v2787
    %2927 = vmatprep.subr.bf16.mxu0 %v2786
    %2928 = vmatpush2.bf16.msra.mxu0 %v2785
    %2929 = vmatprep.mubr.bf16.mxu0 %v2486
    %2930 = vmatmul.mubr.bf16.gmra.mxu0 %v2485
    %v2931 = vpop.f32.mrf.mxu0
    %v2932 = vadd.f32 %v2570, %v2931
    %v2933 = vpop.f32.mrf.mxu0
    %v2934 = vadd.f32 %v2574, %v2933
    %v2935 = vpop.f32.mrf.mxu0
    %v2936 = vadd.f32 %v2570, %v2935
    %v2937 = vpop.f32.mrf.mxu0
    %v2938 = vadd.f32 %v2574, %v2937
    %2939 = vmatprep.mubr.bf16.mxu0 %v2490
    %2940 = vmatmul.mubr.bf16.gmra.mxu0 %v2489
    %v2941 = vpop.f32.mrf.mxu0
    %v2942 = vadd.f32 %v2570, %v2941
    %v2943 = vpop.f32.mrf.mxu0
    %v2944 = vadd.f32 %v2574, %v2943
    %v2945 = vpop.f32.mrf.mxu0
    %v2946 = vadd.f32 %v2570, %v2945
    %v2947 = vpop.f32.mrf.mxu0
    %v2948 = vadd.f32 %v2574, %v2947
    %2949 = vmatprep.mubr.bf16.mxu0 %v2494
    %2950 = vmatmul.mubr.bf16.gmra.mxu0 %v2493
    %v2951 = vpop.f32.mrf.mxu0
    %v2952 = vadd.f32 %v2570, %v2951
    %v2953 = vpop.f32.mrf.mxu0
    %v2954 = vadd.f32 %v2574, %v2953
    %v2955 = vpop.f32.mrf.mxu0
    %v2956 = vadd.f32 %v2570, %v2955
    %v2957 = vpop.f32.mrf.mxu0
    %v2958 = vadd.f32 %v2574, %v2957
    %2959 = vmatprep.mubr.bf16.mxu0 %v2498
    %2960 = vmatmul.mubr.bf16.gmra.mxu0 %v2497
    %v2961 = vpop.f32.mrf.mxu0
    %v2962 = vadd.f32 %v2570, %v2961
    %v2963 = vpop.f32.mrf.mxu0
    %v2964 = vadd.f32 %v2574, %v2963
    %v2965 = vpop.f32.mrf.mxu0
    %v2966 = vadd.f32 %v2570, %v2965
    %v2967 = vpop.f32.mrf.mxu0
    %v2968 = vadd.f32 %v2574, %v2967
    %2969 = vdwg.mxu0
    %2970 = vmatprep.subr.bf16.mxu0 %v2816
    %2971 = vmatpush1.bf16.msra.mxu0 %v2815
    %2972 = vmatprep.subr.bf16.mxu0 %v2814
    %2973 = vmatpush1.bf16.msra.mxu0 %v2813
    %2974 = vmatprep.subr.bf16.mxu0 %v2812
    %2975 = vmatpush1.bf16.msra.mxu0 %v2811
    %2976 = vmatprep.subr.bf16.mxu0 %v2810
    %2977 = vmatpush1.bf16.msra.mxu0 %v2809
    %2978 = vmatprep.subr.bf16.mxu0 %v2808
    %2979 = vmatpush1.bf16.msra.mxu0 %v2807
    %2980 = vmatprep.subr.bf16.mxu0 %v2806
    %2981 = vmatpush1.bf16.msra.mxu0 %v2805
    %2982 = vmatprep.subr.bf16.mxu0 %v2804
    %2983 = vmatpush1.bf16.msra.mxu0 %v2803
    %2984 = vmatprep.subr.bf16.mxu0 %v2802
    %2985 = vmatpush1.bf16.msra.mxu0 %v2801
    %2986 = vmatprep.subr.bf16.mxu0 %v2832
    %2987 = vmatpush2.bf16.msra.mxu0 %v2831
    %2988 = vmatprep.subr.bf16.mxu0 %v2830
    %2989 = vmatpush2.bf16.msra.mxu0 %v2829
    %2990 = vmatprep.subr.bf16.mxu0 %v2828
    %2991 = vmatpush2.bf16.msra.mxu0 %v2827
    %2992 = vmatprep.subr.bf16.mxu0 %v2826
    %2993 = vmatpush2.bf16.msra.mxu0 %v2825
    %2994 = vmatprep.subr.bf16.mxu0 %v2824
    %2995 = vmatpush2.bf16.msra.mxu0 %v2823
    %2996 = vmatprep.subr.bf16.mxu0 %v2822
    %2997 = vmatpush2.bf16.msra.mxu0 %v2821
    %2998 = vmatprep.subr.bf16.mxu0 %v2820
    %2999 = vmatpush2.bf16.msra.mxu0 %v2819
    %3000 = vmatprep.subr.bf16.mxu0 %v2818
    %3001 = vmatpush2.bf16.msra.mxu0 %v2817
    %3002 = vmatprep.mubr.bf16.mxu0 %v2488
    %3003 = vmatmul.mubr.bf16.gmra.mxu0 %v2487
    %v3004 = vpop.f32.mrf.mxu0
    %v3005 = vadd.f32 %v2932, %v3004
    %v3006 = vpop.f32.mrf.mxu0
    %v3007 = vadd.f32 %v2934, %v3006
    %v3008 = vpop.f32.mrf.mxu0
    %v3009 = vadd.f32 %v2936, %v3008
    %v3010 = vpop.f32.mrf.mxu0
    %v3011 = vadd.f32 %v2938, %v3010
    %3012 = vmatprep.mubr.bf16.mxu0 %v2492
    %3013 = vmatmul.mubr.bf16.gmra.mxu0 %v2491
    %v3014 = vpop.f32.mrf.mxu0
    %v3015 = vadd.f32 %v2942, %v3014
    %v3016 = vpop.f32.mrf.mxu0
    %v3017 = vadd.f32 %v2944, %v3016
    %v3018 = vpop.f32.mrf.mxu0
    %v3019 = vadd.f32 %v2946, %v3018
    %v3020 = vpop.f32.mrf.mxu0
    %v3021 = vadd.f32 %v2948, %v3020
    %3022 = vmatprep.mubr.bf16.mxu0 %v2496
    %3023 = vmatmul.mubr.bf16.gmra.mxu0 %v2495
    %v3024 = vpop.f32.mrf.mxu0
    %v3025 = vadd.f32 %v2952, %v3024
    %v3026 = vpop.f32.mrf.mxu0
    %v3027 = vadd.f32 %v2954, %v3026
    %v3028 = vpop.f32.mrf.mxu0
    %v3029 = vadd.f32 %v2956, %v3028
    %v3030 = vpop.f32.mrf.mxu0
    %v3031 = vadd.f32 %v2958, %v3030
    %3032 = vmatprep.mubr.bf16.mxu0 %v2500
    %3033 = vmatmul.mubr.bf16.gmra.mxu0 %v2499
    %v3034 = vpop.f32.mrf.mxu0
    %v3035 = vadd.f32 %v2962, %v3034
    %v3036 = vpop.f32.mrf.mxu0
    %v3037 = vadd.f32 %v2964, %v3036
    %v3038 = vpop.f32.mrf.mxu0
    %v3039 = vadd.f32 %v2966, %v3038
    %v3040 = vpop.f32.mrf.mxu0
    %v3041 = vadd.f32 %v2968, %v3040
    %3042 = vdwg.mxu0
    %v3043 = vtanh.pop %v3005
    %v3044 = vtanh.pop %v3007
    %v3045 = vtanh.pop %v3009
    %v3046 = vtanh.pop %v3011
    %v3047 = vtanh.pop %v3015
    %v3048 = vtanh.pop %v3017
    %v3049 = vtanh.pop %v3019
    %v3050 = vtanh.pop %v3021
    %v3051 = vtanh.pop %v3025
    %v3052 = vtanh.pop %v3027
    %v3053 = vtanh.pop %v3029
    %v3054 = vtanh.pop %v3031
    %v3055 = vtanh.pop %v3035
    %v3056 = vtanh.pop %v3037
    %v3057 = vtanh.pop %v3039
    %v3058 = vtanh.pop %v3041
    %v3059 = vld [vmem:[#allocation12] sm:$0xff]
    %v3060 = vld [vmem:[#allocation12 + $0x8] sm:$0xff]
    %v3061 = vld [vmem:[#allocation12 + $0x10] sm:$0xff]
    %v3062 = vld [vmem:[#allocation12 + $0x18] sm:$0xff]
    %v3063 = vld [vmem:[#allocation12 + $0x20] sm:$0xff]
    %v3064 = vld [vmem:[#allocation12 + $0x28] sm:$0xff]
    %v3065 = vld [vmem:[#allocation12 + $0x30] sm:$0xff]
    %v3066 = vld [vmem:[#allocation12 + $0x38] sm:$0xff]
    %v3067 = vld [vmem:[#allocation12 + $0x40] sm:$0xff]
    %v3068 = vld [vmem:[#allocation12 + $0x48] sm:$0xff]
    %v3069 = vld [vmem:[#allocation12 + $0x50] sm:$0xff]
    %v3070 = vld [vmem:[#allocation12 + $0x58] sm:$0xff]
    %v3071 = vld [vmem:[#allocation12 + $0x60] sm:$0xff]
    %v3072 = vld [vmem:[#allocation12 + $0x68] sm:$0xff]
    %v3073 = vld [vmem:[#allocation12 + $0x70] sm:$0xff]
    %v3074 = vld [vmem:[#allocation12 + $0x78] sm:$0xff]
    %v3075 = vld [vmem:[#allocation12 + $0x80] sm:$0xff]
    %v3076 = vld [vmem:[#allocation12 + $0x88] sm:$0xff]
    %v3077 = vld [vmem:[#allocation12 + $0x90] sm:$0xff]
    %v3078 = vld [vmem:[#allocation12 + $0x98] sm:$0xff]
    %v3079 = vld [vmem:[#allocation12 + $0xa0] sm:$0xff]
    %v3080 = vld [vmem:[#allocation12 + $0xa8] sm:$0xff]
    %v3081 = vld [vmem:[#allocation12 + $0xb0] sm:$0xff]
    %v3082 = vld [vmem:[#allocation12 + $0xb8] sm:$0xff]
    %v3083 = vld [vmem:[#allocation12 + $0xc0] sm:$0xff]
    %v3084 = vld [vmem:[#allocation12 + $0xc8] sm:$0xff]
    %v3085 = vld [vmem:[#allocation12 + $0xd0] sm:$0xff]
    %v3086 = vld [vmem:[#allocation12 + $0xd8] sm:$0xff]
    %v3087 = vld [vmem:[#allocation12 + $0xe0] sm:$0xff]
    %v3088 = vld [vmem:[#allocation12 + $0xe8] sm:$0xff]
    %v3089 = vld [vmem:[#allocation12 + $0xf0] sm:$0xff]
    %v3090 = vld [vmem:[#allocation12 + $0xf8] sm:$0xff]
    %v3091 = vld [vmem:[#allocation12 + $0x100] sm:$0xff]
    %v3092 = vld [vmem:[#allocation12 + $0x108] sm:$0xff]
    %v3093 = vld [vmem:[#allocation12 + $0x110] sm:$0xff]
    %v3094 = vld [vmem:[#allocation12 + $0x118] sm:$0xff]
    %v3095 = vld [vmem:[#allocation12 + $0x120] sm:$0xff]
    %v3096 = vld [vmem:[#allocation12 + $0x128] sm:$0xff]
    %v3097 = vld [vmem:[#allocation12 + $0x130] sm:$0xff]
    %v3098 = vld [vmem:[#allocation12 + $0x138] sm:$0xff]
    %v3099 = vld [vmem:[#allocation12 + $0x140] sm:$0xff]
    %v3100 = vld [vmem:[#allocation12 + $0x148] sm:$0xff]
    %v3101 = vld [vmem:[#allocation12 + $0x150] sm:$0xff]
    %v3102 = vld [vmem:[#allocation12 + $0x158] sm:$0xff]
    %v3103 = vld [vmem:[#allocation12 + $0x160] sm:$0xff]
    %v3104 = vld [vmem:[#allocation12 + $0x168] sm:$0xff]
    %v3105 = vld [vmem:[#allocation12 + $0x170] sm:$0xff]
    %v3106 = vld [vmem:[#allocation12 + $0x178] sm:$0xff]
    %v3107 = vld [vmem:[#allocation12 + $0x180] sm:$0xff]
    %v3108 = vld [vmem:[#allocation12 + $0x188] sm:$0xff]
    %v3109 = vld [vmem:[#allocation12 + $0x190] sm:$0xff]
    %v3110 = vld [vmem:[#allocation12 + $0x198] sm:$0xff]
    %v3111 = vld [vmem:[#allocation12 + $0x1a0] sm:$0xff]
    %v3112 = vld [vmem:[#allocation12 + $0x1a8] sm:$0xff]
    %v3113 = vld [vmem:[#allocation12 + $0x1b0] sm:$0xff]
    %v3114 = vld [vmem:[#allocation12 + $0x1b8] sm:$0xff]
    %v3115 = vld [vmem:[#allocation12 + $0x1c0] sm:$0xff]
    %v3116 = vld [vmem:[#allocation12 + $0x1c8] sm:$0xff]
    %v3117 = vld [vmem:[#allocation12 + $0x1d0] sm:$0xff]
    %v3118 = vld [vmem:[#allocation12 + $0x1d8] sm:$0xff]
    %v3119 = vld [vmem:[#allocation12 + $0x1e0] sm:$0xff]
    %v3120 = vld [vmem:[#allocation12 + $0x1e8] sm:$0xff]
    %v3121 = vld [vmem:[#allocation12 + $0x1f0] sm:$0xff]
    %v3122 = vld [vmem:[#allocation12 + $0x1f8] sm:$0xff]
    %v3123 = vld [vmem:[#allocation13] sm:$0x3]
    %v3125 = vlaneseq
    %v3126 = vshrl.u32 %v3125, 7
    %v3127 = vsub.s32 0, %v3126
    %v3128 = vrot.slane %v3123, %v3127
    %v3129 = vlaneseq
    %v3130 = vshrl.u32 %v3129, 7
    %v3131 = vsub.s32 1, %v3130
    %v3132 = vrot.slane %v3123, %v3131
    %v3199 = vunpack.c.l.b16 %v3059
    %v3200 = vunpack.c.h.b16 %v3059
    %v3201 = vunpack.c.l.b16 %v3060
    %v3202 = vunpack.c.h.b16 %v3060
    %v3203 = vunpack.c.l.b16 %v3061
    %v3204 = vunpack.c.h.b16 %v3061
    %v3205 = vunpack.c.l.b16 %v3062
    %v3206 = vunpack.c.h.b16 %v3062
    %v3207 = vunpack.c.l.b16 %v3063
    %v3208 = vunpack.c.h.b16 %v3063
    %v3209 = vunpack.c.l.b16 %v3064
    %v3210 = vunpack.c.h.b16 %v3064
    %v3211 = vunpack.c.l.b16 %v3065
    %v3212 = vunpack.c.h.b16 %v3065
    %v3213 = vunpack.c.l.b16 %v3066
    %v3214 = vunpack.c.h.b16 %v3066
    %v3215 = vunpack.c.l.b16 %v3067
    %v3216 = vunpack.c.h.b16 %v3067
    %v3217 = vunpack.c.l.b16 %v3068
    %v3218 = vunpack.c.h.b16 %v3068
    %v3219 = vunpack.c.l.b16 %v3069
    %v3220 = vunpack.c.h.b16 %v3069
    %v3221 = vunpack.c.l.b16 %v3070
    %v3222 = vunpack.c.h.b16 %v3070
    %v3223 = vunpack.c.l.b16 %v3071
    %v3224 = vunpack.c.h.b16 %v3071
    %v3225 = vunpack.c.l.b16 %v3072
    %v3226 = vunpack.c.h.b16 %v3072
    %v3227 = vunpack.c.l.b16 %v3073
    %v3228 = vunpack.c.h.b16 %v3073
    %v3229 = vunpack.c.l.b16 %v3074
    %v3230 = vunpack.c.h.b16 %v3074
    %v3231 = vunpack.c.l.b16 %v3075
    %v3232 = vunpack.c.h.b16 %v3075
    %v3233 = vunpack.c.l.b16 %v3076
    %v3234 = vunpack.c.h.b16 %v3076
    %v3235 = vunpack.c.l.b16 %v3077
    %v3236 = vunpack.c.h.b16 %v3077
    %v3237 = vunpack.c.l.b16 %v3078
    %v3238 = vunpack.c.h.b16 %v3078
    %v3239 = vunpack.c.l.b16 %v3079
    %v3240 = vunpack.c.h.b16 %v3079
    %v3241 = vunpack.c.l.b16 %v3080
    %v3242 = vunpack.c.h.b16 %v3080
    %v3243 = vunpack.c.l.b16 %v3081
    %v3244 = vunpack.c.h.b16 %v3081
    %v3245 = vunpack.c.l.b16 %v3082
    %v3246 = vunpack.c.h.b16 %v3082
    %v3247 = vunpack.c.l.b16 %v3083
    %v3248 = vunpack.c.h.b16 %v3083
    %v3249 = vunpack.c.l.b16 %v3084
    %v3250 = vunpack.c.h.b16 %v3084
    %v3251 = vunpack.c.l.b16 %v3085
    %v3252 = vunpack.c.h.b16 %v3085
    %v3253 = vunpack.c.l.b16 %v3086
    %v3254 = vunpack.c.h.b16 %v3086
    %v3255 = vunpack.c.l.b16 %v3087
    %v3256 = vunpack.c.h.b16 %v3087
    %v3257 = vunpack.c.l.b16 %v3088
    %v3258 = vunpack.c.h.b16 %v3088
    %v3259 = vunpack.c.l.b16 %v3089
    %v3260 = vunpack.c.h.b16 %v3089
    %v3261 = vunpack.c.l.b16 %v3090
    %v3262 = vunpack.c.h.b16 %v3090
    %v3263 = vunpack.c.l.b16 %v3091
    %v3264 = vunpack.c.h.b16 %v3091
    %v3265 = vunpack.c.l.b16 %v3092
    %v3266 = vunpack.c.h.b16 %v3092
    %v3267 = vunpack.c.l.b16 %v3093
    %v3268 = vunpack.c.h.b16 %v3093
    %v3269 = vunpack.c.l.b16 %v3094
    %v3270 = vunpack.c.h.b16 %v3094
    %v3271 = vunpack.c.l.b16 %v3095
    %v3272 = vunpack.c.h.b16 %v3095
    %v3273 = vunpack.c.l.b16 %v3096
    %v3274 = vunpack.c.h.b16 %v3096
    %v3275 = vunpack.c.l.b16 %v3097
    %v3276 = vunpack.c.h.b16 %v3097
    %v3277 = vunpack.c.l.b16 %v3098
    %v3278 = vunpack.c.h.b16 %v3098
    %v3279 = vunpack.c.l.b16 %v3099
    %v3280 = vunpack.c.h.b16 %v3099
    %v3281 = vunpack.c.l.b16 %v3100
    %v3282 = vunpack.c.h.b16 %v3100
    %v3283 = vunpack.c.l.b16 %v3101
    %v3284 = vunpack.c.h.b16 %v3101
    %v3285 = vunpack.c.l.b16 %v3102
    %v3286 = vunpack.c.h.b16 %v3102
    %v3287 = vunpack.c.l.b16 %v3103
    %v3288 = vunpack.c.h.b16 %v3103
    %v3289 = vunpack.c.l.b16 %v3104
    %v3290 = vunpack.c.h.b16 %v3104
    %v3291 = vunpack.c.l.b16 %v3105
    %v3292 = vunpack.c.h.b16 %v3105
    %v3293 = vunpack.c.l.b16 %v3106
    %v3294 = vunpack.c.h.b16 %v3106
    %v3295 = vunpack.c.l.b16 %v3107
    %v3296 = vunpack.c.h.b16 %v3107
    %v3297 = vunpack.c.l.b16 %v3108
    %v3298 = vunpack.c.h.b16 %v3108
    %v3299 = vunpack.c.l.b16 %v3109
    %v3300 = vunpack.c.h.b16 %v3109
    %v3301 = vunpack.c.l.b16 %v3110
    %v3302 = vunpack.c.h.b16 %v3110
    %v3303 = vunpack.c.l.b16 %v3111
    %v3304 = vunpack.c.h.b16 %v3111
    %v3305 = vunpack.c.l.b16 %v3112
    %v3306 = vunpack.c.h.b16 %v3112
    %v3307 = vunpack.c.l.b16 %v3113
    %v3308 = vunpack.c.h.b16 %v3113
    %v3309 = vunpack.c.l.b16 %v3114
    %v3310 = vunpack.c.h.b16 %v3114
    %v3311 = vunpack.c.l.b16 %v3115
    %v3312 = vunpack.c.h.b16 %v3115
    %v3313 = vunpack.c.l.b16 %v3116
    %v3314 = vunpack.c.h.b16 %v3116
    %v3315 = vunpack.c.l.b16 %v3117
    %v3316 = vunpack.c.h.b16 %v3117
    %v3317 = vunpack.c.l.b16 %v3118
    %v3318 = vunpack.c.h.b16 %v3118
    %v3319 = vunpack.c.l.b16 %v3119
    %v3320 = vunpack.c.h.b16 %v3119
    %v3321 = vunpack.c.l.b16 %v3120
    %v3322 = vunpack.c.h.b16 %v3120
    %v3323 = vunpack.c.l.b16 %v3121
    %v3324 = vunpack.c.h.b16 %v3121
    %v3325 = vunpack.c.l.b16 %v3122
    %v3326 = vunpack.c.h.b16 %v3122
    %v3327 = vpack.c.b16 %v3201, %v3199
    %v3328 = vpack.c.b16 %v3202, %v3200
    %v3329 = vpack.c.b16 %v3205, %v3203
    %v3330 = vpack.c.b16 %v3206, %v3204
    %v3331 = vpack.c.b16 %v3209, %v3207
    %v3332 = vpack.c.b16 %v3210, %v3208
    %v3333 = vpack.c.b16 %v3213, %v3211
    %v3334 = vpack.c.b16 %v3214, %v3212
    %v3335 = vpack.c.b16 %v3217, %v3215
    %v3336 = vpack.c.b16 %v3218, %v3216
    %v3337 = vpack.c.b16 %v3221, %v3219
    %v3338 = vpack.c.b16 %v3222, %v3220
    %v3339 = vpack.c.b16 %v3225, %v3223
    %v3340 = vpack.c.b16 %v3226, %v3224
    %v3341 = vpack.c.b16 %v3229, %v3227
    %v3342 = vpack.c.b16 %v3230, %v3228
    %v3343 = vpack.c.b16 %v3233, %v3231
    %v3344 = vpack.c.b16 %v3234, %v3232
    %v3345 = vpack.c.b16 %v3237, %v3235
    %v3346 = vpack.c.b16 %v3238, %v3236
    %v3347 = vpack.c.b16 %v3241, %v3239
    %v3348 = vpack.c.b16 %v3242, %v3240
    %v3349 = vpack.c.b16 %v3245, %v3243
    %v3350 = vpack.c.b16 %v3246, %v3244
    %v3351 = vpack.c.b16 %v3249, %v3247
    %v3352 = vpack.c.b16 %v3250, %v3248
    %v3353 = vpack.c.b16 %v3253, %v3251
    %v3354 = vpack.c.b16 %v3254, %v3252
    %v3355 = vpack.c.b16 %v3257, %v3255
    %v3356 = vpack.c.b16 %v3258, %v3256
    %v3357 = vpack.c.b16 %v3261, %v3259
    %v3358 = vpack.c.b16 %v3262, %v3260
    %v3359 = vpack.c.b16 %v3265, %v3263
    %v3360 = vpack.c.b16 %v3266, %v3264
    %v3361 = vpack.c.b16 %v3269, %v3267
    %v3362 = vpack.c.b16 %v3270, %v3268
    %v3363 = vpack.c.b16 %v3273, %v3271
    %v3364 = vpack.c.b16 %v3274, %v3272
    %v3365 = vpack.c.b16 %v3277, %v3275
    %v3366 = vpack.c.b16 %v3278, %v3276
    %v3367 = vpack.c.b16 %v3281, %v3279
    %v3368 = vpack.c.b16 %v3282, %v3280
    %v3369 = vpack.c.b16 %v3285, %v3283
    %v3370 = vpack.c.b16 %v3286, %v3284
    %v3371 = vpack.c.b16 %v3289, %v3287
    %v3372 = vpack.c.b16 %v3290, %v3288
    %v3373 = vpack.c.b16 %v3293, %v3291
    %v3374 = vpack.c.b16 %v3294, %v3292
    %v3375 = vpack.c.b16 %v3297, %v3295
    %v3376 = vpack.c.b16 %v3298, %v3296
    %v3377 = vpack.c.b16 %v3301, %v3299
    %v3378 = vpack.c.b16 %v3302, %v3300
    %v3379 = vpack.c.b16 %v3305, %v3303
    %v3380 = vpack.c.b16 %v3306, %v3304
    %v3381 = vpack.c.b16 %v3309, %v3307
    %v3382 = vpack.c.b16 %v3310, %v3308
    %v3383 = vpack.c.b16 %v3313, %v3311
    %v3384 = vpack.c.b16 %v3314, %v3312
    %v3385 = vpack.c.b16 %v3317, %v3315
    %v3386 = vpack.c.b16 %v3318, %v3316
    %v3387 = vpack.c.b16 %v3321, %v3319
    %v3388 = vpack.c.b16 %v3322, %v3320
    %v3389 = vpack.c.b16 %v3325, %v3323
    %v3390 = vpack.c.b16 %v3326, %v3324
    %3455 = vmatprep.subr.bf16.mxu0 %v3342
    %3456 = vmatpush1.bf16.msra.mxu0 %v3341
    %3457 = vmatprep.subr.bf16.mxu0 %v3340
    %3458 = vmatpush1.bf16.msra.mxu0 %v3339
    %3459 = vmatprep.subr.bf16.mxu0 %v3338
    %3460 = vmatpush1.bf16.msra.mxu0 %v3337
    %3461 = vmatprep.subr.bf16.mxu0 %v3336
    %3462 = vmatpush1.bf16.msra.mxu0 %v3335
    %3463 = vmatprep.subr.bf16.mxu0 %v3334
    %3464 = vmatpush1.bf16.msra.mxu0 %v3333
    %3465 = vmatprep.subr.bf16.mxu0 %v3332
    %3466 = vmatpush1.bf16.msra.mxu0 %v3331
    %3467 = vmatprep.subr.bf16.mxu0 %v3330
    %3468 = vmatpush1.bf16.msra.mxu0 %v3329
    %3469 = vmatprep.subr.bf16.mxu0 %v3328
    %3470 = vmatpush1.bf16.msra.mxu0 %v3327
    %3471 = vmatprep.subr.bf16.mxu0 %v3358
    %3472 = vmatpush2.bf16.msra.mxu0 %v3357
    %3473 = vmatprep.subr.bf16.mxu0 %v3356
    %3474 = vmatpush2.bf16.msra.mxu0 %v3355
    %3475 = vmatprep.subr.bf16.mxu0 %v3354
    %3476 = vmatpush2.bf16.msra.mxu0 %v3353
    %3477 = vmatprep.subr.bf16.mxu0 %v3352
    %3478 = vmatpush2.bf16.msra.mxu0 %v3351
    %3479 = vmatprep.subr.bf16.mxu0 %v3350
    %3480 = vmatpush2.bf16.msra.mxu0 %v3349
    %3481 = vmatprep.subr.bf16.mxu0 %v3348
    %3482 = vmatpush2.bf16.msra.mxu0 %v3347
    %3483 = vmatprep.subr.bf16.mxu0 %v3346
    %3484 = vmatpush2.bf16.msra.mxu0 %v3345
    %3485 = vmatprep.subr.bf16.mxu0 %v3344
    %3486 = vmatpush2.bf16.msra.mxu0 %v3343
    %3487 = vmatprep.mubr.bf16.mxu0 %v2486
    %3488 = vmatmul.mubr.bf16.gmra.mxu0 %v2485
    %v3489 = vpop.f32.mrf.mxu0
    %v3490 = vadd.f32 %v3128, %v3489
    %v3491 = vpop.f32.mrf.mxu0
    %v3492 = vadd.f32 %v3132, %v3491
    %v3493 = vpop.f32.mrf.mxu0
    %v3494 = vadd.f32 %v3128, %v3493
    %v3495 = vpop.f32.mrf.mxu0
    %v3496 = vadd.f32 %v3132, %v3495
    %3497 = vmatprep.mubr.bf16.mxu0 %v2490
    %3498 = vmatmul.mubr.bf16.gmra.mxu0 %v2489
    %v3499 = vpop.f32.mrf.mxu0
    %v3500 = vadd.f32 %v3128, %v3499
    %v3501 = vpop.f32.mrf.mxu0
    %v3502 = vadd.f32 %v3132, %v3501
    %v3503 = vpop.f32.mrf.mxu0
    %v3504 = vadd.f32 %v3128, %v3503
    %v3505 = vpop.f32.mrf.mxu0
    %v3506 = vadd.f32 %v3132, %v3505
    %3507 = vmatprep.mubr.bf16.mxu0 %v2494
    %3508 = vmatmul.mubr.bf16.gmra.mxu0 %v2493
    %v3509 = vpop.f32.mrf.mxu0
    %v3510 = vadd.f32 %v3128, %v3509
    %v3511 = vpop.f32.mrf.mxu0
    %v3512 = vadd.f32 %v3132, %v3511
    %v3513 = vpop.f32.mrf.mxu0
    %v3514 = vadd.f32 %v3128, %v3513
    %v3515 = vpop.f32.mrf.mxu0
    %v3516 = vadd.f32 %v3132, %v3515
    %3517 = vmatprep.mubr.bf16.mxu0 %v2498
    %3518 = vmatmul.mubr.bf16.gmra.mxu0 %v2497
    %v3519 = vpop.f32.mrf.mxu0
    %v3520 = vadd.f32 %v3128, %v3519
    %v3521 = vpop.f32.mrf.mxu0
    %v3522 = vadd.f32 %v3132, %v3521
    %v3523 = vpop.f32.mrf.mxu0
    %v3524 = vadd.f32 %v3128, %v3523
    %v3525 = vpop.f32.mrf.mxu0
    %v3526 = vadd.f32 %v3132, %v3525
    %3527 = vdwg.mxu0
    %3528 = vmatprep.subr.bf16.mxu0 %v3374
    %3529 = vmatpush1.bf16.msra.mxu0 %v3373
    %3530 = vmatprep.subr.bf16.mxu0 %v3372
    %3531 = vmatpush1.bf16.msra.mxu0 %v3371
    %3532 = vmatprep.subr.bf16.mxu0 %v3370
    %3533 = vmatpush1.bf16.msra.mxu0 %v3369
    %3534 = vmatprep.subr.bf16.mxu0 %v3368
    %3535 = vmatpush1.bf16.msra.mxu0 %v3367
    %3536 = vmatprep.subr.bf16.mxu0 %v3366
    %3537 = vmatpush1.bf16.msra.mxu0 %v3365
    %3538 = vmatprep.subr.bf16.mxu0 %v3364
    %3539 = vmatpush1.bf16.msra.mxu0 %v3363
    %3540 = vmatprep.subr.bf16.mxu0 %v3362
    %3541 = vmatpush1.bf16.msra.mxu0 %v3361
    %3542 = vmatprep.subr.bf16.mxu0 %v3360
    %3543 = vmatpush1.bf16.msra.mxu0 %v3359
    %3544 = vmatprep.subr.bf16.mxu0 %v3390
    %3545 = vmatpush2.bf16.msra.mxu0 %v3389
    %3546 = vmatprep.subr.bf16.mxu0 %v3388
    %3547 = vmatpush2.bf16.msra.mxu0 %v3387
    %3548 = vmatprep.subr.bf16.mxu0 %v3386
    %3549 = vmatpush2.bf16.msra.mxu0 %v3385
    %3550 = vmatprep.subr.bf16.mxu0 %v3384
    %3551 = vmatpush2.bf16.msra.mxu0 %v3383
    %3552 = vmatprep.subr.bf16.mxu0 %v3382
    %3553 = vmatpush2.bf16.msra.mxu0 %v3381
    %3554 = vmatprep.subr.bf16.mxu0 %v3380
    %3555 = vmatpush2.bf16.msra.mxu0 %v3379
    %3556 = vmatprep.subr.bf16.mxu0 %v3378
    %3557 = vmatpush2.bf16.msra.mxu0 %v3377
    %3558 = vmatprep.subr.bf16.mxu0 %v3376
    %3559 = vmatpush2.bf16.msra.mxu0 %v3375
    %3560 = vmatprep.mubr.bf16.mxu0 %v2488
    %3561 = vmatmul.mubr.bf16.gmra.mxu0 %v2487
    %v3562 = vpop.f32.mrf.mxu0
    %v3563 = vadd.f32 %v3490, %v3562
    %v3564 = vpop.f32.mrf.mxu0
    %v3565 = vadd.f32 %v3492, %v3564
    %v3566 = vpop.f32.mrf.mxu0
    %v3567 = vadd.f32 %v3494, %v3566
    %v3568 = vpop.f32.mrf.mxu0
    %v3569 = vadd.f32 %v3496, %v3568
    %3570 = vmatprep.mubr.bf16.mxu0 %v2492
    %3571 = vmatmul.mubr.bf16.gmra.mxu0 %v2491
    %v3572 = vpop.f32.mrf.mxu0
    %v3573 = vadd.f32 %v3500, %v3572
    %v3574 = vpop.f32.mrf.mxu0
    %v3575 = vadd.f32 %v3502, %v3574
    %v3576 = vpop.f32.mrf.mxu0
    %v3577 = vadd.f32 %v3504, %v3576
    %v3578 = vpop.f32.mrf.mxu0
    %v3579 = vadd.f32 %v3506, %v3578
    %3580 = vmatprep.mubr.bf16.mxu0 %v2496
    %3581 = vmatmul.mubr.bf16.gmra.mxu0 %v2495
    %v3582 = vpop.f32.mrf.mxu0
    %v3583 = vadd.f32 %v3510, %v3582
    %v3584 = vpop.f32.mrf.mxu0
    %v3585 = vadd.f32 %v3512, %v3584
    %v3586 = vpop.f32.mrf.mxu0
    %v3587 = vadd.f32 %v3514, %v3586
    %v3588 = vpop.f32.mrf.mxu0
    %v3589 = vadd.f32 %v3516, %v3588
    %3590 = vmatprep.mubr.bf16.mxu0 %v2500
    %3591 = vmatmul.mubr.bf16.gmra.mxu0 %v2499
    %v3592 = vpop.f32.mrf.mxu0
    %v3593 = vadd.f32 %v3520, %v3592
    %v3594 = vpop.f32.mrf.mxu0
    %v3595 = vadd.f32 %v3522, %v3594
    %v3596 = vpop.f32.mrf.mxu0
    %v3597 = vadd.f32 %v3524, %v3596
    %v3598 = vpop.f32.mrf.mxu0
    %v3599 = vadd.f32 %v3526, %v3598
    %3600 = vdwg.mxu0
    %v3601 = vxor.u32 %v3563, 2147483648
    %v3602 = vxor.u32 %v3565, 2147483648
    %v3603 = vxor.u32 %v3567, 2147483648
    %v3604 = vxor.u32 %v3569, 2147483648
    %v3605 = vxor.u32 %v3573, 2147483648
    %v3606 = vxor.u32 %v3575, 2147483648
    %v3607 = vxor.u32 %v3577, 2147483648
    %v3608 = vxor.u32 %v3579, 2147483648
    %v3609 = vxor.u32 %v3583, 2147483648
    %v3610 = vxor.u32 %v3585, 2147483648
    %v3611 = vxor.u32 %v3587, 2147483648
    %v3612 = vxor.u32 %v3589, 2147483648
    %v3613 = vxor.u32 %v3593, 2147483648
    %v3614 = vxor.u32 %v3595, 2147483648
    %v3615 = vxor.u32 %v3597, 2147483648
    %v3616 = vxor.u32 %v3599, 2147483648
    %v3617 = vmul.f32 %v3601, 1.442695
    %v3618 = vpow.pop %v3617
    %v3619 = vmul.f32 %v3602, 1.442695
    %v3620 = vpow.pop %v3619
    %v3621 = vmul.f32 %v3603, 1.442695
    %v3622 = vpow.pop %v3621
    %v3623 = vmul.f32 %v3604, 1.442695
    %v3624 = vpow.pop %v3623
    %v3625 = vmul.f32 %v3605, 1.442695
    %v3626 = vpow.pop %v3625
    %v3627 = vmul.f32 %v3606, 1.442695
    %v3628 = vpow.pop %v3627
    %v3629 = vmul.f32 %v3607, 1.442695
    %v3630 = vpow.pop %v3629
    %v3631 = vmul.f32 %v3608, 1.442695
    %v3632 = vpow.pop %v3631
    %v3633 = vmul.f32 %v3609, 1.442695
    %v3634 = vpow.pop %v3633
    %v3635 = vmul.f32 %v3610, 1.442695
    %v3636 = vpow.pop %v3635
    %v3637 = vmul.f32 %v3611, 1.442695
    %v3638 = vpow.pop %v3637
    %v3639 = vmul.f32 %v3612, 1.442695
    %v3640 = vpow.pop %v3639
    %v3641 = vmul.f32 %v3613, 1.442695
    %v3642 = vpow.pop %v3641
    %v3643 = vmul.f32 %v3614, 1.442695
    %v3644 = vpow.pop %v3643
    %v3645 = vmul.f32 %v3615, 1.442695
    %v3646 = vpow.pop %v3645
    %v3647 = vmul.f32 %v3616, 1.442695
    %v3648 = vpow.pop %v3647
    %v3649 = vadd.f32 %v3618, 1.0
    %v3650 = vadd.f32 %v3620, 1.0
    %v3651 = vadd.f32 %v3622, 1.0
    %v3652 = vadd.f32 %v3624, 1.0
    %v3653 = vadd.f32 %v3626, 1.0
    %v3654 = vadd.f32 %v3628, 1.0
    %v3655 = vadd.f32 %v3630, 1.0
    %v3656 = vadd.f32 %v3632, 1.0
    %v3657 = vadd.f32 %v3634, 1.0
    %v3658 = vadd.f32 %v3636, 1.0
    %v3659 = vadd.f32 %v3638, 1.0
    %v3660 = vadd.f32 %v3640, 1.0
    %v3661 = vadd.f32 %v3642, 1.0
    %v3662 = vadd.f32 %v3644, 1.0
    %v3663 = vadd.f32 %v3646, 1.0
    %v3664 = vadd.f32 %v3648, 1.0
    %v3665 = vrcp.pop %v3649
    %v3666 = vmul.f32 1.0, %v3665
    %v3667 = vrcp.pop %v3650
    %v3668 = vmul.f32 1.0, %v3667
    %v3669 = vrcp.pop %v3651
    %v3670 = vmul.f32 1.0, %v3669
    %v3671 = vrcp.pop %v3652
    %v3672 = vmul.f32 1.0, %v3671
    %v3673 = vrcp.pop %v3653
    %v3674 = vmul.f32 1.0, %v3673
    %v3675 = vrcp.pop %v3654
    %v3676 = vmul.f32 1.0, %v3675
    %v3677 = vrcp.pop %v3655
    %v3678 = vmul.f32 1.0, %v3677
    %v3679 = vrcp.pop %v3656
    %v3680 = vmul.f32 1.0, %v3679
    %v3681 = vrcp.pop %v3657
    %v3682 = vmul.f32 1.0, %v3681
    %v3683 = vrcp.pop %v3658
    %v3684 = vmul.f32 1.0, %v3683
    %v3685 = vrcp.pop %v3659
    %v3686 = vmul.f32 1.0, %v3685
    %v3687 = vrcp.pop %v3660
    %v3688 = vmul.f32 1.0, %v3687
    %v3689 = vrcp.pop %v3661
    %v3690 = vmul.f32 1.0, %v3689
    %v3691 = vrcp.pop %v3662
    %v3692 = vmul.f32 1.0, %v3691
    %v3693 = vrcp.pop %v3663
    %v3694 = vmul.f32 1.0, %v3693
    %v3695 = vrcp.pop %v3664
    %v3696 = vmul.f32 1.0, %v3695
    %v3697 = vld [vmem:[%s8] sm:$0xf]
    %v3698 = vmul.f32 %v3043, %v3666
    %v3699 = vmul.f32 %v3044, %v3668
    %v3700 = vmul.f32 %v3045, %v3670
    %v3701 = vmul.f32 %v3046, %v3672
    %v3702 = vmul.f32 %v3047, %v3674
    %v3703 = vmul.f32 %v3048, %v3676
    %v3704 = vmul.f32 %v3049, %v3678
    %v3705 = vmul.f32 %v3050, %v3680
    %v3706 = vmul.f32 %v3051, %v3682
    %v3707 = vmul.f32 %v3052, %v3684
    %v3708 = vmul.f32 %v3053, %v3686
    %v3709 = vmul.f32 %v3054, %v3688
    %v3710 = vmul.f32 %v3055, %v3690
    %v3711 = vmul.f32 %v3056, %v3692
    %v3712 = vmul.f32 %v3057, %v3694
    %v3713 = vmul.f32 %v3058, %v3696
    %v3714 = vld [vmem:[%s9] sm:$0x3]
    %3716 = vset.pattern.permute.xlu0 0
    %3717 = vperm.xlu0 %3716, %v3714
    %v3718 = vpop.permute.xlu0 %3717
    %v3722 = vunpack.c.l.s4 1983009808
    %v3723 = vunpack.c.0.s8 %v3722
    %v3724 = vlaneseq
    %v3725 = vshrl.u32 %v3724, 7
    %v3726 = vsub.s32 %v3723, %v3725
    %v3727 = vrot.slane %v3697, %v3726
    %v3728 = vcombine.high %v3727, %v3727
    %3731 = vmatprep.subr.mxu0 0.0
    %3732 = vmatpush1.xpose.msra.mxu0 0.0
    %3733 = vmatprep.subr.mxu0 0.0
    %3734 = vmatpush1.xpose.msra.mxu0 0.0
    %3735 = vmatprep.subr.mxu0 0.0
    %3736 = vmatpush1.xpose.msra.mxu0 0.0
    %3737 = vmatprep.subr.mxu0 0.0
    %3738 = vmatpush1.xpose.msra.mxu0 0.0
    %3739 = vmatprep.subr.mxu0 0.0
    %3740 = vmatpush1.xpose.msra.mxu0 0.0
    %3741 = vmatprep.subr.mxu0 0.0
    %3742 = vmatpush1.xpose.msra.mxu0 0.0
    %3743 = vmatprep.subr.mxu0 0.0
    %3744 = vmatpush1.xpose.msra.mxu0 0.0
    %3745 = vmatprep.subr.mxu0 0.0
    %3746 = vmatpush1.xpose.msra.mxu0 0.0
    %3747 = vmatprep.subr.mxu0 %v3713
    %3748 = vmatpush1.xpose.msra.mxu0 %v3712
    %3749 = vmatprep.subr.mxu0 %v3711
    %3750 = vmatpush1.xpose.msra.mxu0 %v3710
    %3751 = vmatprep.subr.mxu0 %v3709
    %3752 = vmatpush1.xpose.msra.mxu0 %v3708
    %3753 = vmatprep.subr.mxu0 %v3707
    %3754 = vmatpush1.xpose.msra.mxu0 %v3706
    %3755 = vmatprep.subr.mxu0 %v3705
    %3756 = vmatpush1.xpose.msra.mxu0 %v3704
    %3757 = vmatprep.subr.mxu0 %v3703
    %3758 = vmatpush1.xpose.msra.mxu0 %v3702
    %3759 = vmatprep.subr.mxu0 %v3701
    %3760 = vmatpush1.xpose.msra.mxu0 %v3700
    %3761 = vmatprep.subr.mxu0 %v3699
    %3762 = vmatpush1.xpose.msra.mxu0 %v3698
    %3763 = vmatprep.subr.mxu0 0.0
    %3764 = vmatpush2.xpose.msra.mxu0 0.0
    %3765 = vmatprep.subr.mxu0 0.0
    %3766 = vmatpush2.xpose.msra.mxu0 0.0
    %3767 = vmatprep.subr.mxu0 0.0
    %3768 = vmatpush2.xpose.msra.mxu0 0.0
    %3769 = vmatprep.subr.mxu0 0.0
    %3770 = vmatpush2.xpose.msra.mxu0 0.0
    %3771 = vmatprep.subr.mxu0 0.0
    %3772 = vmatpush2.xpose.msra.mxu0 0.0
    %3773 = vmatprep.subr.mxu0 0.0
    %3774 = vmatpush2.xpose.msra.mxu0 0.0
    %3775 = vmatprep.subr.mxu0 0.0
    %3776 = vmatpush2.xpose.msra.mxu0 0.0
    %3777 = vmatprep.subr.mxu0 0.0
    %3778 = vmatpush2.xpose.msra.mxu0 0.0
    %3779 = vmatprep.subr.mxu0 0.0
    %3780 = vmatpush2.xpose.msra.mxu0 0.0
    %3781 = vmatprep.subr.mxu0 0.0
    %3782 = vmatpush2.xpose.msra.mxu0 0.0
    %3783 = vmatprep.subr.mxu0 0.0
    %3784 = vmatpush2.xpose.msra.mxu0 0.0
    %3785 = vmatprep.subr.mxu0 0.0
    %3786 = vmatpush2.xpose.msra.mxu0 0.0
    %3787 = vmatprep.subr.mxu0 0.0
    %3788 = vmatpush2.xpose.msra.mxu0 0.0
    %3789 = vmatprep.subr.mxu0 0.0
    %3790 = vmatpush2.xpose.msra.mxu0 0.0
    %3791 = vmatprep.subr.mxu0 0.0
    %3792 = vmatpush2.xpose.msra.mxu0 0.0
    %3793 = vmatprep.subr.mxu0 0.0
    %3794 = vmatpush2.xpose.msra.mxu0 0.0
    %3795 = vmatprep.mubr.f32.mxu0 %v3728
    %3796 = vmatmul.mubr.f32.gmra.mxu0 %v3727
    %v3797 = vpop.f32.mrf.mxu0
    %v3798 = vadd.f32 %v3718, %v3797
    %v3799 = vpop.f32.mrf.mxu0
    %3800 = vdwg.mxu0
    %vm3801 = vcmask 517120
    %3802 = vst.msk [vmem:[#allocation15] sm:$0x3] %vm3801, %v3798
    %v3803 = vlaneseq
    %v3804 = vand.u32 %v3803, 127
    %v3805 = vadd.s32 %v2419, %v3804
    %vm3806 = vcmp.lt.s32.totalorder %v3805, %v2428
    %v3807 = vsel %vm3806, %v3798, -1e+30
    %v3808 = vld [vmem:[%s11] sm:$0x3]
    %v3809 = vsel %vm3801, %v3807, -inf
    %3810 = vmax.xlane.f32.xlu0 %v3809
    %v3811 = vpop.xlane.xlu0 %3810
    %v3812 = vmax.f32 %v3808, %v3811
    %v3813 = vsub.f32 %v3808, %v3812
    %v3814 = vmul.f32 %v3813, 1.442695
    %v3815 = vpow.pop %v3814
    %3817 = vset.pattern.permute.xlu0 0
    %3818 = vperm.xlu0 %3817, %v3812
    %v3819 = vpop.permute.xlu0 %3818
    %v3821 = vsub.f32 %v3807, %v3819
    %v3822 = vmul.f32 %v3821, 1.442695
    %v3823 = vpow.pop %v3822
    %v3824 = vld [vmem:[%s12] sm:$0x3]
    %v3825 = vmul.f32 %v3815, %v3824
    %v3826 = vsel %vm3801, %v3823, 0.0
    %3827 = vadd.xlane.f32.xlu0 %v3826
    %v3828 = vpop.xlane.xlu0 %3827
    %v3829 = vadd.f32 %v3825, %v3828
    %vm3830 = vcmask 1024
    %3831 = vst.msk [vmem:[%s12] sm:$0x3] %vm3830, %v3829
    %v3832 = vld [vmem:[%s13] sm:$0xff]
    %3834 = vset.pattern.permute.xlu0 0
    %3835 = vperm.xlu0 %3834, %v3815
    %v3836 = vpop.permute.xlu0 %3835
    %v3839 = vcombine.high %v3832, %v3832
    %v3841 = vunpack.c.l.s4 1983009808
    %v3842 = vunpack.c.0.s8 %v3841
    %v3843 = vlaneseq
    %v3844 = vshrl.u32 %v3843, 7
    %v3845 = vsub.s32 %v3842, %v3844
    %v3846 = vrot.slane %v3832, %v3845
    %v3848 = vunpack.c.l.s4 1983009808
    %v3849 = vunpack.c.0.s8 %v3848
    %v3850 = vlaneseq
    %v3851 = vshrl.u32 %v3850, 7
    %v3852 = vsub.s32 %v3849, %v3851
    %v3853 = vrot.slane %v3839, %v3852
    %v3854 = vcombine.high %v3846, %v3846
    %v3855 = vcombine.high %v3853, %v3853
    %v3860 = vmul.f32 %v3836, %v3846
    %v3861 = vmul.f32 %v3836, %v3854
    %v3862 = vmul.f32 %v3836, %v3853
    %v3863 = vmul.f32 %v3836, %v3855
    %vm3864 = vcmask 523264
    %v3866 = vsel %vm3864, %v3823, 0
    %3868 = vmatprep.subr.mxu0 0.0
    %3869 = vmatpush1.msra.mxu0 0.0
    %3870 = vmatprep.subr.mxu0 0.0
    %3871 = vmatpush1.msra.mxu0 0.0
    %3872 = vmatprep.subr.mxu0 0.0
    %3873 = vmatpush1.msra.mxu0 0.0
    %3874 = vmatprep.subr.mxu0 0.0
    %3875 = vmatpush1.msra.mxu0 0.0
    %3876 = vmatprep.subr.mxu0 0.0
    %3877 = vmatpush1.msra.mxu0 0.0
    %3878 = vmatprep.subr.mxu0 0.0
    %3879 = vmatpush1.msra.mxu0 0.0
    %3880 = vmatprep.subr.mxu0 0.0
    %3881 = vmatpush1.msra.mxu0 0.0
    %3882 = vmatprep.subr.mxu0 0.0
    %3883 = vmatpush1.msra.mxu0 0.0
    %3884 = vmatprep.subr.mxu0 %v2482
    %3885 = vmatpush1.msra.mxu0 %v2481
    %3886 = vmatprep.subr.mxu0 %v2478
    %3887 = vmatpush1.msra.mxu0 %v2477
    %3888 = vmatprep.subr.mxu0 %v2474
    %3889 = vmatpush1.msra.mxu0 %v2473
    %3890 = vmatprep.subr.mxu0 %v2470
    %3891 = vmatpush1.msra.mxu0 %v2469
    %3892 = vmatprep.subr.mxu0 %v2466
    %3893 = vmatpush1.msra.mxu0 %v2465
    %3894 = vmatprep.subr.mxu0 %v2462
    %3895 = vmatpush1.msra.mxu0 %v2461
    %3896 = vmatprep.subr.mxu0 %v2458
    %3897 = vmatpush1.msra.mxu0 %v2457
    %3898 = vmatprep.subr.mxu0 %v2454
    %3899 = vmatpush1.msra.mxu0 %v2453
    %3900 = vmatprep.subr.mxu0 0.0
    %3901 = vmatpush2.msra.mxu0 0.0
    %3902 = vmatprep.subr.mxu0 0.0
    %3903 = vmatpush2.msra.mxu0 0.0
    %3904 = vmatprep.subr.mxu0 0.0
    %3905 = vmatpush2.msra.mxu0 0.0
    %3906 = vmatprep.subr.mxu0 0.0
    %3907 = vmatpush2.msra.mxu0 0.0
    %3908 = vmatprep.subr.mxu0 0.0
    %3909 = vmatpush2.msra.mxu0 0.0
    %3910 = vmatprep.subr.mxu0 0.0
    %3911 = vmatpush2.msra.mxu0 0.0
    %3912 = vmatprep.subr.mxu0 0.0
    %3913 = vmatpush2.msra.mxu0 0.0
    %3914 = vmatprep.subr.mxu0 0.0
    %3915 = vmatpush2.msra.mxu0 0.0
    %3916 = vmatprep.subr.mxu0 0.0
    %3917 = vmatpush2.msra.mxu0 0.0
    %3918 = vmatprep.subr.mxu0 0.0
    %3919 = vmatpush2.msra.mxu0 0.0
    %3920 = vmatprep.subr.mxu0 0.0
    %3921 = vmatpush2.msra.mxu0 0.0
    %3922 = vmatprep.subr.mxu0 0.0
    %3923 = vmatpush2.msra.mxu0 0.0
    %3924 = vmatprep.subr.mxu0 0.0
    %3925 = vmatpush2.msra.mxu0 0.0
    %3926 = vmatprep.subr.mxu0 0.0
    %3927 = vmatpush2.msra.mxu0 0.0
    %3928 = vmatprep.subr.mxu0 0.0
    %3929 = vmatpush2.msra.mxu0 0.0
    %3930 = vmatprep.subr.mxu0 0.0
    %3931 = vmatpush2.msra.mxu0 0.0
    %3932 = vmatprep.mubr.f32.mxu0 0.0
    %3933 = vmatmul.mubr.f32.gmra.mxu0 %v3866
    %v3934 = vpop.f32.mrf.mxu0
    %v3935 = vadd.f32 0.0, %v3934
    %v3936 = vpop.f32.mrf.mxu0
    %v3937 = vadd.f32 0.0, %v3936
    %3938 = vdwg.mxu0
    %3939 = vmatprep.subr.mxu0 0.0
    %3940 = vmatpush1.msra.mxu0 0.0
    %3941 = vmatprep.subr.mxu0 0.0
    %3942 = vmatpush1.msra.mxu0 0.0
    %3943 = vmatprep.subr.mxu0 0.0
    %3944 = vmatpush1.msra.mxu0 0.0
    %3945 = vmatprep.subr.mxu0 0.0
    %3946 = vmatpush1.msra.mxu0 0.0
    %3947 = vmatprep.subr.mxu0 0.0
    %3948 = vmatpush1.msra.mxu0 0.0
    %3949 = vmatprep.subr.mxu0 0.0
    %3950 = vmatpush1.msra.mxu0 0.0
    %3951 = vmatprep.subr.mxu0 0.0
    %3952 = vmatpush1.msra.mxu0 0.0
    %3953 = vmatprep.subr.mxu0 0.0
    %3954 = vmatpush1.msra.mxu0 0.0
    %3955 = vmatprep.subr.mxu0 %v2484
    %3956 = vmatpush1.msra.mxu0 %v2483
    %3957 = vmatprep.subr.mxu0 %v2480
    %3958 = vmatpush1.msra.mxu0 %v2479
    %3959 = vmatprep.subr.mxu0 %v2476
    %3960 = vmatpush1.msra.mxu0 %v2475
    %3961 = vmatprep.subr.mxu0 %v2472
    %3962 = vmatpush1.msra.mxu0 %v2471
    %3963 = vmatprep.subr.mxu0 %v2468
    %3964 = vmatpush1.msra.mxu0 %v2467
    %3965 = vmatprep.subr.mxu0 %v2464
    %3966 = vmatpush1.msra.mxu0 %v2463
    %3967 = vmatprep.subr.mxu0 %v2460
    %3968 = vmatpush1.msra.mxu0 %v2459
    %3969 = vmatprep.subr.mxu0 %v2456
    %3970 = vmatpush1.msra.mxu0 %v2455
    %3971 = vmatprep.subr.mxu0 0.0
    %3972 = vmatpush2.msra.mxu0 0.0
    %3973 = vmatprep.subr.mxu0 0.0
    %3974 = vmatpush2.msra.mxu0 0.0
    %3975 = vmatprep.subr.mxu0 0.0
    %3976 = vmatpush2.msra.mxu0 0.0
    %3977 = vmatprep.subr.mxu0 0.0
    %3978 = vmatpush2.msra.mxu0 0.0
    %3979 = vmatprep.subr.mxu0 0.0
    %3980 = vmatpush2.msra.mxu0 0.0
    %3981 = vmatprep.subr.mxu0 0.0
    %3982 = vmatpush2.msra.mxu0 0.0
    %3983 = vmatprep.subr.mxu0 0.0
    %3984 = vmatpush2.msra.mxu0 0.0
    %3985 = vmatprep.subr.mxu0 0.0
    %3986 = vmatpush2.msra.mxu0 0.0
    %3987 = vmatprep.subr.mxu0 0.0
    %3988 = vmatpush2.msra.mxu0 0.0
    %3989 = vmatprep.subr.mxu0 0.0
    %3990 = vmatpush2.msra.mxu0 0.0
    %3991 = vmatprep.subr.mxu0 0.0
    %3992 = vmatpush2.msra.mxu0 0.0
    %3993 = vmatprep.subr.mxu0 0.0
    %3994 = vmatpush2.msra.mxu0 0.0
    %3995 = vmatprep.subr.mxu0 0.0
    %3996 = vmatpush2.msra.mxu0 0.0
    %3997 = vmatprep.subr.mxu0 0.0
    %3998 = vmatpush2.msra.mxu0 0.0
    %3999 = vmatprep.subr.mxu0 0.0
    %4000 = vmatpush2.msra.mxu0 0.0
    %4001 = vmatprep.subr.mxu0 0.0
    %4002 = vmatpush2.msra.mxu0 0.0
    %4003 = vmatprep.mubr.f32.mxu0 0.0
    %4004 = vmatmul.mubr.f32.gmra.mxu0 %v3866
    %v4005 = vpop.f32.mrf.mxu0
    %v4006 = vadd.f32 0.0, %v4005
    %v4007 = vpop.f32.mrf.mxu0
    %v4008 = vadd.f32 0.0, %v4007
    %4009 = vdwg.mxu0
    %v4010 = vadd.f32 %v3860, %v3935
    %v4011 = vadd.f32 %v3861, %v3937
    %v4012 = vadd.f32 %v3862, %v4006
    %v4013 = vadd.f32 %v3863, %v4008
    %v4018 = vcombine.low %v4010, %v4011
    %v4019 = vcombine.low %v4012, %v4013
    %v4021 = vunpack.c.l.s4 1983009808
    %v4022 = vunpack.c.0.s8 %v4021
    %v4023 = vlaneseq
    %v4024 = vshrl.u32 %v4023, 7
    %v4025 = vsub.s32 %v4022, %v4024
    %v4026 = vrot.slane %v4018, %v4025
    %v4028 = vunpack.c.l.s4 1983009808
    %v4029 = vunpack.c.0.s8 %v4028
    %v4030 = vlaneseq
    %v4031 = vshrl.u32 %v4030, 7
    %v4032 = vsub.s32 %v4029, %v4031
    %v4033 = vrot.slane %v4019, %v4032
    %v4034 = vcombine.low %v4026, %v4033
    %4036 = vst [vmem:[%s13] sm:$0xff] %v4034
    %4037 = vst.msk [vmem:[%s11] sm:$0x3] %vm3830, %v3812
    // Predicated region
    $region66: #{clam_mb_forward.1} parent=1 // pred_check
      _
    $region67: #{clam_mb_forward.1} parent=1 // pred_check_branch
      %4039 = sbr.rel (0) target = $region69
    $region68: #{clam_mb_forward.1} parent=1 // pred_region
      %s4040 = sadd.s32 0, 0
      %s4042 = ssub.s32 32, 32
      %4043 = vsyncadd [#allocation6], %s4042
      %s4044 = smul.addr %s4040, 32
      %s4045 = scalar_lea.hbm %s10, %s4044
      %s4047 = sshll.u32 [#allocation15], 4
      %s4048 = int_to_ptr.vmem [resolvable:$true] %s4047
      %4050 = dma.vmem_to_hbm [thread:$0]  %s4048, 32, %s4045, [#allocation6]
    $region69: #{clam_mb_forward.1} parent=1 // pred_fallthru
      _
    // Predicated region
    $region70: #{clam_mb_forward.1} parent=1 // pred_check
      _
    $region71: #{clam_mb_forward.1} parent=1 // pred_check_branch
      %4052 = sbr.rel (0) target = $region73
    $region72: #{clam_mb_forward.1} parent=1 // pred_region
      _
    $region73: #{clam_mb_forward.1} parent=1 // pred_fallthru
      _
    // Predicated region
    $region74: #{clam_mb_forward.1} parent=1 // pred_check
      _
    $region75: #{clam_mb_forward.1} parent=1 // pred_check_branch
      %4054 = sbr.rel (0) target = $region77
    $region76: #{clam_mb_forward.1} parent=1 // pred_region
      _
    $region77: #{clam_mb_forward.1} parent=1 // pred_fallthru
      _
    // Predicated region
    $region78: #{clam_mb_forward.1} parent=1 // pred_check
      _
    $region79: #{clam_mb_forward.1} parent=1 // pred_check_branch
      %4056 = sbr.rel (0) target = $region81
    $region80: #{clam_mb_forward.1} parent=1 // pred_region
      _
    $region81: #{clam_mb_forward.1} parent=1 // pred_fallthru
      _
    // Predicated region
    $region82: #{clam_mb_forward.1} parent=1 // pred_check
      _
    $region83: #{clam_mb_forward.1} parent=1 // pred_check_branch
      %4058 = sbr.rel (0) target = $region85
    $region84: #{clam_mb_forward.1} parent=1 // pred_region
      %4059 = dma.done [#allocation6], 32
    $region85: #{clam_mb_forward.1} parent=1 // pred_fallthru
      _
    // Predicated region
    $region86: #{clam_mb_forward.1} parent=1 // pred_check
      _
    $region87: #{clam_mb_forward.1} parent=1 // pred_check_branch
      %4061 = sbr.rel (0) target = $region89
    $region88: #{clam_mb_forward.1} parent=1 // pred_region
      _
    $region89: #{clam_mb_forward.1} parent=1 // pred_fallthru
      _
    // Predicated region
    $region90: #{clam_mb_forward.1} parent=1 // pred_check
      _
    $region91: #{clam_mb_forward.1} parent=1 // pred_check_branch
      %4063 = sbr.rel (0) target = $region93
    $region92: #{clam_mb_forward.1} parent=1 // pred_region
      _
    $region93: #{clam_mb_forward.1} parent=1 // pred_fallthru
      _
    // Predicated region
    $region94: #{clam_mb_forward.1} parent=1 // pred_check
      _
    $region95: #{clam_mb_forward.1} parent=1 // pred_check_branch
      %4065 = sbr.rel (0) target = $region97
    $region96: #{clam_mb_forward.1} parent=1 // pred_region
      _
    $region97: #{clam_mb_forward.1} parent=1 // pred_fallthru
      _
    %4066 = vsyncpa [#allocation5], 1
    %4067 = vsyncpa [#allocation8], 1
    %4068 = vsyncpa [#allocation11], 1
    %4069 = vsyncpa [#allocation14], 1
    %4070 = vsyncpa [#allocation6], 1

</llo_original>
